<compile_context>
chip_gen: v6e
topology: v6e:2x2x1
jax: 0.10.0
libtpu: 0.0.40
codegen_flags: <defaults>
</compile_context>

<pallas_src>
import functools

import jax
import jax.numpy as jnp
from jax.experimental import pallas as pl
from jax.experimental.pallas import tpu as pltpu


# ---------------------------------------------------------------------------
# Kernel 1: one GCN hop, tiled over (row tiles, k tiles).
#   e_out   = A @ e_in                       (bf16 MXU inputs, f32 accumulate)
#   acc_out = acc_in + e_out                 (running sum of layer outputs)
# ---------------------------------------------------------------------------
def _gcn_hop_kernel(adj_ref, e_ref, acc_in_ref, e_out_ref, acc_out_ref, psum_ref):
    k = pl.program_id(1)

    @pl.when(k == 0)
    def _():
        psum_ref[...] = jnp.zeros_like(psum_ref)

    # bf16 x bf16 -> f32 accumulate on the MXU (adj already bf16 in HBM).
    psum_ref[...] += jnp.dot(
        adj_ref[...],
        e_ref[...].astype(jnp.bfloat16),
        preferred_element_type=jnp.float32,
    )

    @pl.when(k == pl.num_programs(1) - 1)
    def _():
        e_new = psum_ref[...]
        e_out_ref[...] = e_new
        acc_out_ref[...] = acc_in_ref[...] + e_new


def _gcn_hop(adj_bf16, e, acc, *, tm, tk):
    N, D = e.shape
    grid = (N // tm, N // tk)
    return pl.pallas_call(
        _gcn_hop_kernel,
        grid_spec=pltpu.PrefetchScalarGridSpec(
            num_scalar_prefetch=0,
            grid=grid,
            in_specs=[
                pl.BlockSpec((tm, tk), lambda i, k: (i, k)),  # adj tile (bf16)
                pl.BlockSpec((tk, D), lambda i, k: (k, 0)),   # e rows for this k
                pl.BlockSpec((tm, D), lambda i, k: (i, 0)),   # running layer sum in
            ],
            out_specs=[
                pl.BlockSpec((tm, D), lambda i, k: (i, 0)),   # e_out (next hop input)
                pl.BlockSpec((tm, D), lambda i, k: (i, 0)),   # acc_out
            ],
            scratch_shapes=[pltpu.VMEM((tm, D), jnp.float32)],
        ),
        out_shape=(
            jax.ShapeDtypeStruct((N, D), jnp.float32),
            jax.ShapeDtypeStruct((N, D), jnp.float32),
        ),
        compiler_params=pltpu.CompilerParams(
            dimension_semantics=("parallel", "arbitrary")
        ),
    )(adj_bf16, e, acc)


# ---------------------------------------------------------------------------
# Kernel 2: epilogue, row-parallel.
#   mean   = acc / gcn_layer
#   std    = exp(mean @ W + b)
#   view_k = mean + (std * scale) * noise_k
# Written as one lane-dense packed (tm, 4*D) slab: [mean | std | view1 | view2].
# ---------------------------------------------------------------------------
def _epilogue_kernel(acc_ref, w_ref, b_ref, n1_ref, n2_ref, packed_ref,
                     *, inv_layers, scale):
    D = acc_ref.shape[-1]
    mean = acc_ref[...] * inv_layers
    logstd = jnp.dot(
        mean.astype(jnp.bfloat16),
        w_ref[...].astype(jnp.bfloat16),
        preferred_element_type=jnp.float32,
    ) + b_ref[...]
    std = jnp.exp(logstd)
    std_scaled = std * scale               # computed once, reused for both views
    v1 = mean + std_scaled * n1_ref[...]
    v2 = mean + std_scaled * n2_ref[...]
    # Single (tm, 4*D) output block -> one dense output DMA stream per tile.
    packed_ref[:, 0:D] = mean
    packed_ref[:, D:2 * D] = std
    packed_ref[:, 2 * D:3 * D] = v1
    packed_ref[:, 3 * D:4 * D] = v2


def _epilogue(acc, w, b2d, n1, n2, *, gcn_layer, scale, tm):
    N, D = acc.shape
    kernel = functools.partial(
        _epilogue_kernel, inv_layers=1.0 / float(gcn_layer), scale=float(scale)
    )
    return pl.pallas_call(
        kernel,
        grid_spec=pltpu.PrefetchScalarGridSpec(
            num_scalar_prefetch=0,
            grid=(N // tm,),
            in_specs=[
                pl.BlockSpec((tm, D), lambda i: (i, 0)),   # layer sum
                pl.BlockSpec((D, D), lambda i: (0, 0)),    # eps_weight
                pl.BlockSpec((1, D), lambda i: (0, 0)),    # eps_bias
                pl.BlockSpec((tm, D), lambda i: (i, 0)),   # noise view 1
                pl.BlockSpec((tm, D), lambda i: (i, 0)),   # noise view 2
            ],
            out_specs=pl.BlockSpec((tm, 4 * D), lambda i: (i, 0)),
        ),
        out_shape=jax.ShapeDtypeStruct((N, 4 * D), jnp.float32),
        compiler_params=pltpu.CompilerParams(dimension_semantics=("parallel",)),
    )(acc, w, b2d, n1, n2)


def _pick_tile(n):
    for t in (256, 128):
        if n >= t and n % t == 0:
            return t
    return n


def vgcl_forward(adj, emb0, eps_weight, eps_bias, noise1, noise2,
                 *, gcn_layer, scale=0.01):
    """Returns (mean, std, embedding_view1, embedding_view2), each (N, D) f32."""
    assert gcn_layer >= 1, "gcn_layer must be >= 1 (torch averages e_1..e_L)"
    N, D = emb0.shape
    tm = _pick_tile(N)
    tk = tm

    adj_bf16 = adj.astype(jnp.bfloat16)          # dominant operand -> bf16 in HBM
    e = emb0.astype(jnp.float32)
    acc = jnp.zeros((N, D), jnp.float32)

    # Hops are inherently serial (e_l depends on the full e_{l-1}).
    for _ in range(gcn_layer):
        e, acc = _gcn_hop(adj_bf16, e, acc, tm=tm, tk=tk)

    packed = _epilogue(
        acc,
        eps_weight.astype(jnp.float32),
        eps_bias.reshape(1, D).astype(jnp.float32),
        noise1.astype(jnp.float32),
        noise2.astype(jnp.float32),
        gcn_layer=gcn_layer, scale=scale, tm=tm,
    )
    mean = packed[:, 0:D]
    std = packed[:, D:2 * D]
    v1 = packed[:, 2 * D:3 * D]
    v2 = packed[:, 3 * D:4 * D]
    return mean, std, v1, v2


def _reference_forward(adj, emb0, eps_weight, eps_bias, noise1, noise2,
                       *, gcn_layer, scale=0.01):
    """Pure-JAX reference mirroring the kernel's bf16-MXU / f32-accumulate math."""
    adj_bf = adj.astype(jnp.bfloat16)
    e = emb0.astype(jnp.float32)
    acc = jnp.zeros_like(e)
    for _ in range(gcn_layer):
        e = jnp.dot(adj_bf, e.astype(jnp.bfloat16),
                    preferred_element_type=jnp.float32)
        acc = acc + e
    mean = acc / float(gcn_layer)
    logstd = jnp.dot(mean.astype(jnp.bfloat16), eps_weight.astype(jnp.bfloat16),
                     preferred_element_type=jnp.float32) + eps_bias[None, :]
    std = jnp.exp(logstd)
    v1 = mean + std * noise1 * scale
    v2 = mean + std * noise2 * scale
    return mean, std, v1, v2


if __name__ == "__main__":
    # Small but tiling-exercising problem: 512 nodes -> 2x2 grid of 256-tiles.
    num_user, num_item = 192, 320
    N = num_user + num_item            # 512 nodes
    latent_dim = 32
    gcn_layer = 2

    key = jax.random.PRNGKey(0)
    k_u, k_i, k_w, k_adj, k_n1, k_n2 = jax.random.split(key, 6)

    # init_type == 'norm': N(0, 0.01) embeddings.
    user_emb = 0.01 * jax.random.normal(k_u, (num_user, latent_dim), jnp.float32)
    item_emb = 0.01 * jax.random.normal(k_i, (num_item, latent_dim), jnp.float32)
    emb0 = jnp.concatenate([user_emb, item_emb], axis=0)            # (N, D)

    # eps_weight ~ randn(D, D); eps_bias = zeros(D).
    eps_weight = jax.random.normal(k_w, (latent_dim, latent_dim), jnp.float32)
    eps_bias = jnp.zeros((latent_dim,), jnp.float32)

    # Deterministic bipartite interaction graph -> D^-1/2 A D^-1/2.
    R = (jax.random.uniform(k_adj, (num_user, num_item)) < 0.05).astype(jnp.float32)
    A = jnp.zeros((N, N), jnp.float32)
    A = A.at[:num_user, num_user:].set(R)
    A = A.at[num_user:, :num_user].set(R.T)
    deg = jnp.maximum(A.sum(axis=1), 1.0)
    d_inv_sqrt = 1.0 / jnp.sqrt(deg)
    adj = A * d_inv_sqrt[:, None] * d_inv_sqrt[None, :]

    # Reparameterization noise for the two views (torch.randn equivalent).
    noise1 = jax.random.normal(k_n1, (N, latent_dim), jnp.float32)
    noise2 = jax.random.normal(k_n2, (N, latent_dim), jnp.float32)

    fwd = jax.jit(functools.partial(vgcl_forward, gcn_layer=gcn_layer))
    outs = jax.block_until_ready(fwd(adj, emb0, eps_weight, eps_bias, noise1, noise2))

    refs = _reference_forward(adj, emb0, eps_weight, eps_bias, noise1, noise2,
                              gcn_layer=gcn_layer)
    for name, o, r in zip(("mean", "std", "view1", "view2"), outs, refs):
        assert o.shape == (N, latent_dim) and o.dtype == jnp.float32, name
        assert jnp.allclose(o, r, atol=2e-4, rtol=2e-3), name

    print("KERNEL_OK")
</pallas_src>

<mosaic_0001>
module attributes {stable_mosaic.version = 11 : i64} {
  func.func @_gcn_hop_kernel(%arg0: i32, %arg1: i32, %arg2: memref<256x256xbf16, #tpu.memory_space<vmem>>, %arg3: memref<256x32xf32, #tpu.memory_space<vmem>>, %arg4: memref<256x32xf32, #tpu.memory_space<vmem>>, %arg5: memref<256x32xf32, #tpu.memory_space<vmem>>, %arg6: memref<256x32xf32, #tpu.memory_space<vmem>>, %arg7: memref<256x32xf32, #tpu.memory_space<vmem>>) attributes {dimension_semantics = [#tpu.dimension_semantics<parallel>, #tpu.dimension_semantics<arbitrary>], iteration_bounds = array<i64: 2, 2>, scalar_prefetch = 0 : i64, scratch_operands = 1 : i64, tpu.core_type = #tpu.core_type<tc>, window_params = [{transform_indices = @transform_0, window_bounds = array<i64: 256, 256>}, {transform_indices = @transform_1, window_bounds = array<i64: 256, 32>}, {transform_indices = @transform_2, window_bounds = array<i64: 256, 32>}, {transform_indices = @transform_3, window_bounds = array<i64: 256, 32>}, {transform_indices = @transform_4, window_bounds = array<i64: 256, 32>}]} {
    %c0_i32 = arith.constant 0 : i32
    %0 = arith.cmpi eq, %arg1, %c0_i32 : i32
    %1 = arith.extui %0 : i1 to i32
    %c0_i32_0 = arith.constant 0 : i32
    %2 = arith.cmpi ne, %1, %c0_i32_0 : i32
    scf.if %2 {
      %cst_9 = arith.constant 0.000000e+00 : f32
      %13 = vector.broadcast %cst_9 : f32 to vector<256x32xf32>
      %c0_10 = arith.constant 0 : index
      %c0_11 = arith.constant 0 : index
      %14 = vector.load %arg7[%c0_10, %c0_11] : memref<256x32xf32, #tpu.memory_space<vmem>>, vector<256x32xf32>
      tpu.vector_store %arg7[%c0_10, %c0_11], %13 {strides = array<i32>} : memref<256x32xf32, #tpu.memory_space<vmem>>, vector<256x32xf32>,
    } else {
    }
    %c0 = arith.constant 0 : index
    %c0_1 = arith.constant 0 : index
    %3 = vector.load %arg7[%c0, %c0_1] : memref<256x32xf32, #tpu.memory_space<vmem>>, vector<256x32xf32>
    %c0_2 = arith.constant 0 : index
    %c0_3 = arith.constant 0 : index
    %4 = vector.load %arg2[%c0_2, %c0_3] : memref<256x256xbf16, #tpu.memory_space<vmem>>, vector<256x256xbf16>
    %c0_4 = arith.constant 0 : index
    %c0_5 = arith.constant 0 : index
    %5 = vector.load %arg3[%c0_4, %c0_5] : memref<256x32xf32, #tpu.memory_space<vmem>>, vector<256x32xf32>
    %6 = arith.truncf %5 : vector<256x32xf32> to vector<256x32xbf16>
    %cst = arith.constant dense<0.000000e+00> : vector<256x32xf32>
    %7 = tpu.matmul %4, %6, %cst {dimension_numbers = #tpu.dot_dimension_numbers<[1], [0], [0], [1], [0, 0, 1, 1], [], []>} : vector<256x256xbf16>, vector<256x32xbf16>, vector<256x32xf32> -> vector<256x32xf32>
    %8 = arith.addf %3, %7 : vector<256x32xf32>
    %c0_6 = arith.constant 0 : index
    %c0_7 = arith.constant 0 : index
    %9 = vector.load %arg7[%c0_6, %c0_7] : memref<256x32xf32, #tpu.memory_space<vmem>>, vector<256x32xf32>
    tpu.vector_store %arg7[%c0_6, %c0_7], %8 {strides = array<i32>} : memref<256x32xf32, #tpu.memory_space<vmem>>, vector<256x32xf32>,
    %c1_i32 = arith.constant 1 : i32
    %10 = arith.cmpi eq, %arg1, %c1_i32 : i32
    %11 = arith.extui %10 : i1 to i32
    %c0_i32_8 = arith.constant 0 : i32
    %12 = arith.cmpi ne, %11, %c0_i32_8 : i32
    scf.if %12 {
      %c0_9 = arith.constant 0 : index
      %c0_10 = arith.constant 0 : index
      %13 = vector.load %arg7[%c0_9, %c0_10] : memref<256x32xf32, #tpu.memory_space<vmem>>, vector<256x32xf32>
      %c0_11 = arith.constant 0 : index
      %c0_12 = arith.constant 0 : index
      %14 = vector.load %arg5[%c0_11, %c0_12] : memref<256x32xf32, #tpu.memory_space<vmem>>, vector<256x32xf32>
      tpu.vector_store %arg5[%c0_11, %c0_12], %13 {strides = array<i32>} : memref<256x32xf32, #tpu.memory_space<vmem>>, vector<256x32xf32>,
      %c0_13 = arith.constant 0 : index
      %c0_14 = arith.constant 0 : index
      %15 = vector.load %arg4[%c0_13, %c0_14] : memref<256x32xf32, #tpu.memory_space<vmem>>, vector<256x32xf32>
      %16 = arith.addf %15, %13 : vector<256x32xf32>
      %c0_15 = arith.constant 0 : index
      %c0_16 = arith.constant 0 : index
      %17 = vector.load %arg6[%c0_15, %c0_16] : memref<256x32xf32, #tpu.memory_space<vmem>>, vector<256x32xf32>
      tpu.vector_store %arg6[%c0_15, %c0_16], %16 {strides = array<i32>} : memref<256x32xf32, #tpu.memory_space<vmem>>, vector<256x32xf32>,
    } else {
    }
    return
  }
  func.func @transform_0(%arg0: i32, %arg1: i32) -> (i32, i32) {
    %c0_i32 = arith.constant 0 : i32
    return %arg0, %arg1 : i32, i32
  }
  func.func @transform_1(%arg0: i32, %arg1: i32) -> (i32, i32) {
    %c0_i32 = arith.constant 0 : i32
    %c0_i32_0 = arith.constant 0 : i32
    return %arg1, %c0_i32 : i32, i32
  }
  func.func @transform_2(%arg0: i32, %arg1: i32) -> (i32, i32) {
    %c0_i32 = arith.constant 0 : i32
    %c0_i32_0 = arith.constant 0 : i32
    return %arg0, %c0_i32 : i32, i32
  }
  func.func @transform_3(%arg0: i32, %arg1: i32) -> (i32, i32) {
    %c0_i32 = arith.constant 0 : i32
    %c0_i32_0 = arith.constant 0 : i32
    return %arg0, %c0_i32 : i32, i32
  }
  func.func @transform_4(%arg0: i32, %arg1: i32) -> (i32, i32) {
    %c0_i32 = arith.constant 0 : i32
    %c0_i32_0 = arith.constant 0 : i32
    return %arg0, %c0_i32 : i32, i32
  }
}

module attributes {stable_mosaic.version = 11 : i64} {
  func.func @_epilogue_kernel(%arg0: i32, %arg1: memref<256x32xf32, #tpu.memory_space<vmem>>, %arg2: memref<32x32xf32, #tpu.memory_space<vmem>>, %arg3: memref<1x32xf32, #tpu.memory_space<vmem>>, %arg4: memref<256x32xf32, #tpu.memory_space<vmem>>, %arg5: memref<256x32xf32, #tpu.memory_space<vmem>>, %arg6: memref<256x128xf32, #tpu.memory_space<vmem>>) attributes {dimension_semantics = [#tpu.dimension_semantics<parallel>], iteration_bounds = array<i64: 2>, scalar_prefetch = 0 : i64, scratch_operands = 0 : i64, tpu.core_type = #tpu.core_type<tc>, window_params = [{transform_indices = @transform_0, window_bounds = array<i64: 256, 32>}, {pipeline_mode = #tpu.pipeline_mode<synchronous>, transform_indices = @transform_1, window_bounds = array<i64: 32, 32>}, {pipeline_mode = #tpu.pipeline_mode<synchronous>, transform_indices = @transform_2, window_bounds = array<i64: 1, 32>}, {transform_indices = @transform_3, window_bounds = array<i64: 256, 32>}, {transform_indices = @transform_4, window_bounds = array<i64: 256, 32>}, {transform_indices = @transform_5, window_bounds = array<i64: 256, 128>}]} {
    %c0 = arith.constant 0 : index
    %c0_0 = arith.constant 0 : index
    %0 = vector.load %arg1[%c0, %c0_0] : memref<256x32xf32, #tpu.memory_space<vmem>>, vector<256x32xf32>
    %cst = arith.constant 5.000000e-01 : f32
    %1 = vector.broadcast %cst : f32 to vector<256x32xf32>
    %2 = arith.mulf %0, %1 : vector<256x32xf32>
    %3 = arith.truncf %2 : vector<256x32xf32> to vector<256x32xbf16>
    %c0_1 = arith.constant 0 : index
    %c0_2 = arith.constant 0 : index
    %4 = vector.load %arg2[%c0_1, %c0_2] : memref<32x32xf32, #tpu.memory_space<vmem>>, vector<32x32xf32>
    %5 = arith.truncf %4 : vector<32x32xf32> to vector<32x32xbf16>
    %cst_3 = arith.constant dense<0.000000e+00> : vector<256x32xf32>
    %6 = tpu.matmul %3, %5, %cst_3 {dimension_numbers = #tpu.dot_dimension_numbers<[1], [0], [0], [1], [0, 0, 1, 1], [], []>} : vector<256x32xbf16>, vector<32x32xbf16>, vector<256x32xf32> -> vector<256x32xf32>
    %c0_4 = arith.constant 0 : index
    %c0_5 = arith.constant 0 : index
    %7 = vector.load %arg3[%c0_4, %c0_5] : memref<1x32xf32, #tpu.memory_space<vmem>>, vector<1x32xf32>
    %8 = vector.broadcast %7 : vector<1x32xf32> to vector<256x32xf32>
    %9 = arith.addf %6, %8 : vector<256x32xf32>
    %10 = math.exp %9 : vector<256x32xf32>
    %cst_6 = arith.constant 0.00999999977 : f32
    %11 = vector.broadcast %cst_6 : f32 to vector<256x32xf32>
    %12 = arith.mulf %10, %11 : vector<256x32xf32>
    %c0_7 = arith.constant 0 : index
    %c0_8 = arith.constant 0 : index
    %13 = vector.load %arg4[%c0_7, %c0_8] : memref<256x32xf32, #tpu.memory_space<vmem>>, vector<256x32xf32>
    %14 = arith.mulf %12, %13 : vector<256x32xf32>
    %15 = arith.addf %2, %14 : vector<256x32xf32>
    %c0_9 = arith.constant 0 : index
    %c0_10 = arith.constant 0 : index
    %16 = vector.load %arg5[%c0_9, %c0_10] : memref<256x32xf32, #tpu.memory_space<vmem>>, vector<256x32xf32>
    %17 = arith.mulf %12, %16 : vector<256x32xf32>
    %18 = arith.addf %2, %17 : vector<256x32xf32>
    %c0_11 = arith.constant 0 : index
    %c0_12 = arith.constant 0 : index
    %19 = vector.load %arg6[%c0_11, %c0_12] : memref<256x128xf32, #tpu.memory_space<vmem>>, vector<256x32xf32>
    tpu.vector_store %arg6[%c0_11, %c0_12], %2 {strides = array<i32>} : memref<256x128xf32, #tpu.memory_space<vmem>>, vector<256x32xf32>,
    %c0_13 = arith.constant 0 : index
    %c32 = arith.constant 32 : index
    %20 = vector.load %arg6[%c0_13, %c32] : memref<256x128xf32, #tpu.memory_space<vmem>>, vector<256x32xf32>
    tpu.vector_store %arg6[%c0_13, %c32], %10 {strides = array<i32>} : memref<256x128xf32, #tpu.memory_space<vmem>>, vector<256x32xf32>,
    %c0_14 = arith.constant 0 : index
    %c64 = arith.constant 64 : index
    %21 = vector.load %arg6[%c0_14, %c64] : memref<256x128xf32, #tpu.memory_space<vmem>>, vector<256x32xf32>
    tpu.vector_store %arg6[%c0_14, %c64], %15 {strides = array<i32>} : memref<256x128xf32, #tpu.memory_space<vmem>>, vector<256x32xf32>,
    %c0_15 = arith.constant 0 : index
    %c96 = arith.constant 96 : index
    %22 = vector.load %arg6[%c0_15, %c96] : memref<256x128xf32, #tpu.memory_space<vmem>>, vector<256x32xf32>
    tpu.vector_store %arg6[%c0_15, %c96], %18 {strides = array<i32>} : memref<256x128xf32, #tpu.memory_space<vmem>>, vector<256x32xf32>,
    return
  }
  func.func @transform_0(%arg0: i32) -> (i32, i32) {
    %c0_i32 = arith.constant 0 : i32
    %c0_i32_0 = arith.constant 0 : i32
    return %arg0, %c0_i32 : i32, i32
  }
  func.func @transform_1(%arg0: i32) -> (i32, i32) {
    %c0_i32 = arith.constant 0 : i32
    %c0_i32_0 = arith.constant 0 : i32
    %c0_i32_1 = arith.constant 0 : i32
    return %c0_i32, %c0_i32_0 : i32, i32
  }
  func.func @transform_2(%arg0: i32) -> (i32, i32) {
    %c0_i32 = arith.constant 0 : i32
    %c0_i32_0 = arith.constant 0 : i32
    %c0_i32_1 = arith.constant 0 : i32
    return %c0_i32, %c0_i32_0 : i32, i32
  }
  func.func @transform_3(%arg0: i32) -> (i32, i32) {
    %c0_i32 = arith.constant 0 : i32
    %c0_i32_0 = arith.constant 0 : i32
    return %arg0, %c0_i32 : i32, i32
  }
  func.func @transform_4(%arg0: i32) -> (i32, i32) {
    %c0_i32 = arith.constant 0 : i32
    %c0_i32_0 = arith.constant 0 : i32
    return %arg0, %c0_i32 : i32, i32
  }
  func.func @transform_5(%arg0: i32) -> (i32, i32) {
    %c0_i32 = arith.constant 0 : i32
    %c0_i32_0 = arith.constant 0 : i32
    return %arg0, %c0_i32 : i32, i32
  }
}

module attributes {stable_mosaic.version = 11 : i64} {
  func.func @_gcn_hop_kernel(%arg0: i32, %arg1: i32, %arg2: memref<256x256xbf16, #tpu.memory_space<vmem>>, %arg3: memref<256x32xf32, #tpu.memory_space<vmem>>, %arg4: memref<256x32xf32, #tpu.memory_space<vmem>>, %arg5: memref<256x32xf32, #tpu.memory_space<vmem>>, %arg6: memref<256x32xf32, #tpu.memory_space<vmem>>, %arg7: memref<256x32xf32, #tpu.memory_space<vmem>>) attributes {dimension_semantics = [#tpu.dimension_semantics<parallel>, #tpu.dimension_semantics<arbitrary>], iteration_bounds = array<i64: 2, 2>, scalar_prefetch = 0 : i64, scratch_operands = 1 : i64, tpu.core_type = #tpu.core_type<tc>, window_params = [{transform_indices = @transform_0, window_bounds = array<i64: 256, 256>}, {transform_indices = @transform_1, window_bounds = array<i64: 256, 32>}, {transform_indices = @transform_2, window_bounds = array<i64: 256, 32>}, {transform_indices = @transform_3, window_bounds = array<i64: 256, 32>}, {transform_indices = @transform_4, window_bounds = array<i64: 256, 32>}]} {
    %c0_i32 = arith.constant 0 : i32
    %0 = arith.cmpi eq, %arg1, %c0_i32 : i32
    %1 = arith.extui %0 : i1 to i32
    %c0_i32_0 = arith.constant 0 : i32
    %2 = arith.cmpi ne, %1, %c0_i32_0 : i32
    scf.if %2 {
      %cst_9 = arith.constant 0.000000e+00 : f32
      %13 = vector.broadcast %cst_9 : f32 to vector<256x32xf32>
      %c0_10 = arith.constant 0 : index
      %c0_11 = arith.constant 0 : index
      %14 = vector.load %arg7[%c0_10, %c0_11] : memref<256x32xf32, #tpu.memory_space<vmem>>, vector<256x32xf32>
      tpu.vector_store %arg7[%c0_10, %c0_11], %13 {strides = array<i32>} : memref<256x32xf32, #tpu.memory_space<vmem>>, vector<256x32xf32>,
    } else {
    }
    %c0 = arith.constant 0 : index
    %c0_1 = arith.constant 0 : index
    %3 = vector.load %arg7[%c0, %c0_1] : memref<256x32xf32, #tpu.memory_space<vmem>>, vector<256x32xf32>
    %c0_2 = arith.constant 0 : index
    %c0_3 = arith.constant 0 : index
    %4 = vector.load %arg2[%c0_2, %c0_3] : memref<256x256xbf16, #tpu.memory_space<vmem>>, vector<256x256xbf16>
    %c0_4 = arith.constant 0 : index
    %c0_5 = arith.constant 0 : index
    %5 = vector.load %arg3[%c0_4, %c0_5] : memref<256x32xf32, #tpu.memory_space<vmem>>, vector<256x32xf32>
    %6 = arith.truncf %5 : vector<256x32xf32> to vector<256x32xbf16>
    %cst = arith.constant dense<0.000000e+00> : vector<256x32xf32>
    %7 = tpu.matmul %4, %6, %cst {dimension_numbers = #tpu.dot_dimension_numbers<[1], [0], [0], [1], [0, 0, 1, 1], [], []>} : vector<256x256xbf16>, vector<256x32xbf16>, vector<256x32xf32> -> vector<256x32xf32>
    %8 = arith.addf %3, %7 : vector<256x32xf32>
    %c0_6 = arith.constant 0 : index
    %c0_7 = arith.constant 0 : index
    %9 = vector.load %arg7[%c0_6, %c0_7] : memref<256x32xf32, #tpu.memory_space<vmem>>, vector<256x32xf32>
    tpu.vector_store %arg7[%c0_6, %c0_7], %8 {strides = array<i32>} : memref<256x32xf32, #tpu.memory_space<vmem>>, vector<256x32xf32>,
    %c1_i32 = arith.constant 1 : i32
    %10 = arith.cmpi eq, %arg1, %c1_i32 : i32
    %11 = arith.extui %10 : i1 to i32
    %c0_i32_8 = arith.constant 0 : i32
    %12 = arith.cmpi ne, %11, %c0_i32_8 : i32
    scf.if %12 {
      %c0_9 = arith.constant 0 : index
      %c0_10 = arith.constant 0 : index
      %13 = vector.load %arg7[%c0_9, %c0_10] : memref<256x32xf32, #tpu.memory_space<vmem>>, vector<256x32xf32>
      %c0_11 = arith.constant 0 : index
      %c0_12 = arith.constant 0 : index
      %14 = vector.load %arg5[%c0_11, %c0_12] : memref<256x32xf32, #tpu.memory_space<vmem>>, vector<256x32xf32>
      tpu.vector_store %arg5[%c0_11, %c0_12], %13 {strides = array<i32>} : memref<256x32xf32, #tpu.memory_space<vmem>>, vector<256x32xf32>,
      %c0_13 = arith.constant 0 : index
      %c0_14 = arith.constant 0 : index
      %15 = vector.load %arg4[%c0_13, %c0_14] : memref<256x32xf32, #tpu.memory_space<vmem>>, vector<256x32xf32>
      %16 = arith.addf %15, %13 : vector<256x32xf32>
      %c0_15 = arith.constant 0 : index
      %c0_16 = arith.constant 0 : index
      %17 = vector.load %arg6[%c0_15, %c0_16] : memref<256x32xf32, #tpu.memory_space<vmem>>, vector<256x32xf32>
      tpu.vector_store %arg6[%c0_15, %c0_16], %16 {strides = array<i32>} : memref<256x32xf32, #tpu.memory_space<vmem>>, vector<256x32xf32>,
    } else {
    }
    return
  }
  func.func @transform_0(%arg0: i32, %arg1: i32) -> (i32, i32) {
    %c0_i32 = arith.constant 0 : i32
    return %arg0, %arg1 : i32, i32
  }
  func.func @transform_1(%arg0: i32, %arg1: i32) -> (i32, i32) {
    %c0_i32 = arith.constant 0 : i32
    %c0_i32_0 = arith.constant 0 : i32
    return %arg1, %c0_i32 : i32, i32
  }
  func.func @transform_2(%arg0: i32, %arg1: i32) -> (i32, i32) {
    %c0_i32 = arith.constant 0 : i32
    %c0_i32_0 = arith.constant 0 : i32
    return %arg0, %c0_i32 : i32, i32
  }
  func.func @transform_3(%arg0: i32, %arg1: i32) -> (i32, i32) {
    %c0_i32 = arith.constant 0 : i32
    %c0_i32_0 = arith.constant 0 : i32
    return %arg0, %c0_i32 : i32, i32
  }
  func.func @transform_4(%arg0: i32, %arg1: i32) -> (i32, i32) {
    %c0_i32 = arith.constant 0 : i32
    %c0_i32_0 = arith.constant 0 : i32
    return %arg0, %c0_i32 : i32, i32
  }
}

</mosaic_0001>

<llo_original>
// kernel: vgcl_forward.4
$region0: #{vgcl_forward.4}
  #allocation0 [shape = 'u32[]', space=smem, size = 0x4, offset = 0x4, fixed_abs, tag = 'smem constant byte address 0x4 - core index']
  #allocation1 [shape = 'u32[144,128]{1,0:T(1,128)}', space=vmem, size = 0x12000, scoped, tag = 'internal scratch']
  #allocation2 [shape = 'f32[256,32]{1,0:T(8,128)}', space=vmem, size = 0x20000, scoped, tag = 'scratch operand']
  %s0 = inlined_call_operand.vmem [shape: bf16[512,512], index: 0, kind: input, shape index: {}]
  %s1 = inlined_call_operand.vmem [shape: f32[512,32], index: 1, kind: input, shape index: {}]
  %s2 = inlined_call_operand.vmem [shape: f32[512,32], index: 2, kind: input, shape index: {}]
  %s3 = inlined_call_operand.hbm [shape: f32[512,32], index: 3, kind: output, shape index: {0}]
  %s4 = inlined_call_operand.vmem [shape: f32[512,32], index: 4, kind: output, shape index: {1}]
  %5 = xla_tuple %s3, %s4
  %s6 = sld [smem:[#allocation0]]
  $region99: #{vgcl_forward.4} parent=0
    _
  %s8 = ssub.s32 1, %s6
  %s9 = scalar_select 0, %s8, %s6
  $region1: #{vgcl_forward.4} parent=0
    #allocation3 [shape = 'u8[262144]{0}', space=vmem, size = 0x40000, scoped, tag = 'input window, operand 0']
    #allocation4 [shape = 'u8[262144]{0}', space=vmem, size = 0x40000, scoped, tag = 'output window, operand 0']
    #allocation5 [shape = 's32[2]{0}', space=sflag, size = 0x8, scoped, tag = 'scoped memory for vgcl_forward.4']
    %10 = vsyncpa [#allocation5], 0
    %s11 = scalar_lea.sflag [#allocation5], 1
    %12 = vsyncpa %s11, 0
    loop: start=0, step=1, limit=6
    $region2: #{vgcl_forward.4} parent=1 // loop_pre_header
      _
    $region3: #{vgcl_forward.4} parent=1 // loop_header
      %s14 = sphi 0, %s18
      %p15 = scmp.ge.s32.totalorder %s14, 6
      %s21 = sphi 0, %s33
      %s22 = sphi 0, %s29
      %s23 = sphi 0, %s21
      %s24 = sphi 0, %s22
      %s25 = sphi 0, %s23
      %s26 = sphi 0, %s24
      %s38 = sphi 0, %s40
      %s41 = sphi 0, %s38
      %s42 = sphi 0, %s41
      %s58 = sphi 0, %s42
      %s64 = sphi 0, %s66
      %s67 = sphi 0, %s64
      %s68 = sphi 0, %s67
      %s84 = sphi 0, %s68
      %s90 = sphi 0, %s92
      %s93 = sphi 0, %s90
      %s94 = sphi 0, %s93
      %s110 = sphi 0, %s94
      %s116 = sphi 0, %s118
      %s119 = sphi 0, %s116
      %s120 = sphi 0, %s119
      %s136 = sphi 0, %s120
      %s142 = sphi 0, %s144
      %s145 = sphi 0, %s142
      %s146 = sphi 0, %s145
      %s162 = sphi 0, %s146
    $region4: #{vgcl_forward.4} parent=1 // loop_header_branch
      %17 = sbr.rel (%p15) target = $region8
    $region5: #{vgcl_forward.4} parent=1 // loop_body
      %s19 = ssub.s32 %s14, 1
      %s20 = ssub.s32 %s14, 2
      %s27 = sadd.s32 1, %s22
      %p28 = scmp.ge.s32.totalorder %s27, 2
      %s29 = scalar_select %p28, 0, %s27
      %s30 = sadd.s32 1, %s21
      %s31 = scalar_select %p28, %s30, %s21
      %p32 = scmp.ge.s32.totalorder %s31, 2
      %s33 = scalar_select %p32, 0, %s31
      %s34 = ssub.s32 %s21, %s33
      %s35 = ssub.s32 %s22, %s29
      %s36 = sor.u32 %s34, %s35
      %p37 = scmp.eq.s32.totalorder %s36, 0
      %s39 = sadd.s32 %s38, 1
      %s40 = scalar_select %p37, %s38, %s39
      %p43 = pneg %p37
      %p44 = scmp.eq.s32.totalorder %s14, 3
      %p45 = por %p43, %p44
      %p46 = scmp.ne.s32.totalorder %s38, %s41
      %p47 = scmp.eq.s32.totalorder %s14, 0
      %p48 = por %p46, %p47
      %p49 = scmp.ne.s32.totalorder %s38, %s41
      %p50 = scmp.eq.s32.totalorder %s19, 3
      %p51 = por %p49, %p50
      %p52 = scmp.ne.s32.totalorder %s41, %s42
      %p53 = scmp.eq.s32.totalorder %s19, 0
      %p54 = por %p52, %p53
      %p55 = scmp.ne.s32.totalorder %s41, %s42
      %p56 = scmp.eq.s32.totalorder %s20, 3
      %p57 = por %p55, %p56
      %p59 = scmp.ne.s32.totalorder %s42, %s58
      %p60 = scmp.eq.s32.totalorder %s20, 0
      %p61 = por %p59, %p60
      %s62 = ssub.s32 %s22, %s29
      %p63 = scmp.eq.s32.totalorder %s62, 0
      %s65 = sadd.s32 %s64, 1
      %s66 = scalar_select %p63, %s64, %s65
      %p69 = pneg %p63
      %p70 = scmp.eq.s32.totalorder %s14, 3
      %p71 = por %p69, %p70
      %p72 = scmp.ne.s32.totalorder %s64, %s67
      %p73 = scmp.eq.s32.totalorder %s14, 0
      %p74 = por %p72, %p73
      %p75 = scmp.ne.s32.totalorder %s64, %s67
      %p76 = scmp.eq.s32.totalorder %s19, 3
      %p77 = por %p75, %p76
      %p78 = scmp.ne.s32.totalorder %s67, %s68
      %p79 = scmp.eq.s32.totalorder %s19, 0
      %p80 = por %p78, %p79
      %p81 = scmp.ne.s32.totalorder %s67, %s68
      %p82 = scmp.eq.s32.totalorder %s20, 3
      %p83 = por %p81, %p82
      %p85 = scmp.ne.s32.totalorder %s68, %s84
      %p86 = scmp.eq.s32.totalorder %s20, 0
      %p87 = por %p85, %p86
      %s88 = ssub.s32 %s21, %s33
      %p89 = scmp.eq.s32.totalorder %s88, 0
      %s91 = sadd.s32 %s90, 1
      %s92 = scalar_select %p89, %s90, %s91
      %p95 = pneg %p89
      %p96 = scmp.eq.s32.totalorder %s14, 3
      %p97 = por %p95, %p96
      %p98 = scmp.ne.s32.totalorder %s90, %s93
      %p99 = scmp.eq.s32.totalorder %s14, 0
      %p100 = por %p98, %p99
      %p101 = scmp.ne.s32.totalorder %s90, %s93
      %p102 = scmp.eq.s32.totalorder %s19, 3
      %p103 = por %p101, %p102
      %p104 = scmp.ne.s32.totalorder %s93, %s94
      %p105 = scmp.eq.s32.totalorder %s19, 0
      %p106 = por %p104, %p105
      %p107 = scmp.ne.s32.totalorder %s93, %s94
      %p108 = scmp.eq.s32.totalorder %s20, 3
      %p109 = por %p107, %p108
      %p111 = scmp.ne.s32.totalorder %s94, %s110
      %p112 = scmp.eq.s32.totalorder %s20, 0
      %p113 = por %p111, %p112
      %s114 = ssub.s32 %s21, %s33
      %p115 = scmp.eq.s32.totalorder %s114, 0
      %s117 = sadd.s32 %s116, 1
      %s118 = scalar_select %p115, %s116, %s117
      %p121 = pneg %p115
      %p122 = scmp.eq.s32.totalorder %s14, 3
      %p123 = por %p121, %p122
      %p124 = scmp.ne.s32.totalorder %s116, %s119
      %p125 = scmp.eq.s32.totalorder %s14, 0
      %p126 = por %p124, %p125
      %p127 = scmp.ne.s32.totalorder %s116, %s119
      %p128 = scmp.eq.s32.totalorder %s19, 3
      %p129 = por %p127, %p128
      %p130 = scmp.ne.s32.totalorder %s119, %s120
      %p131 = scmp.eq.s32.totalorder %s19, 0
      %p132 = por %p130, %p131
      %p133 = scmp.ne.s32.totalorder %s119, %s120
      %p134 = scmp.eq.s32.totalorder %s20, 3
      %p135 = por %p133, %p134
      %p137 = scmp.ne.s32.totalorder %s120, %s136
      %p138 = scmp.eq.s32.totalorder %s20, 0
      %p139 = por %p137, %p138
      %s140 = ssub.s32 %s21, %s33
      %p141 = scmp.eq.s32.totalorder %s140, 0
      %s143 = sadd.s32 %s142, 1
      %s144 = scalar_select %p141, %s142, %s143
      %p147 = pneg %p141
      %p148 = scmp.eq.s32.totalorder %s14, 3
      %p149 = por %p147, %p148
      %p150 = scmp.ne.s32.totalorder %s142, %s145
      %p151 = scmp.eq.s32.totalorder %s14, 0
      %p152 = por %p150, %p151
      %p153 = scmp.ne.s32.totalorder %s142, %s145
      %p154 = scmp.eq.s32.totalorder %s19, 3
      %p155 = por %p153, %p154
      %p156 = scmp.ne.s32.totalorder %s145, %s146
      %p157 = scmp.eq.s32.totalorder %s19, 0
      %p158 = por %p156, %p157
      %p159 = scmp.ne.s32.totalorder %s145, %s146
      %p160 = scmp.eq.s32.totalorder %s20, 3
      %p161 = por %p159, %p160
      %p163 = scmp.ne.s32.totalorder %s146, %s162
      %p164 = scmp.eq.s32.totalorder %s20, 0
      %p165 = por %p163, %p164
      %p166 = scmp.le.s32.totalorder 1, %s14
      %p167 = scmp.lt.s32.totalorder %s14, 5
      %p168 = pnand %p166, %p167
      %p169 = pneg %p168
      // Predicated region
      $region9: #{vgcl_forward.4} parent=5 // pred_check
        _
      $region10: #{vgcl_forward.4} parent=5 // pred_check_branch
        %171 = sbr.rel (%p168) target = $region12
      $region11: #{vgcl_forward.4} parent=5 // pred_region
        %s172 = ssub.s32 %s14, 1
      $region12: #{vgcl_forward.4} parent=5 // pred_fallthru
        _
      %p173 = scmp.lt.s32.totalorder %s14, 4
      // Predicated region
      $region13: #{vgcl_forward.4} parent=5 // pred_check
        %p174 = pneg %p173
      $region14: #{vgcl_forward.4} parent=5 // pred_check_branch
        %176 = sbr.rel (%p174) target = $region16
      $region15: #{vgcl_forward.4} parent=5 // pred_region
        // Predicated region
        $region17: #{vgcl_forward.4} parent=15 // pred_check
          %p177 = pneg %p48
        $region18: #{vgcl_forward.4} parent=15 // pred_check_branch
          %179 = sbr.rel (%p177) target = $region20
        $region19: #{vgcl_forward.4} parent=15 // pred_region
          %s180 = sand.u32 %s38, 1
          %s181 = sand.u32 %s38, 1
          %s182 = smul.addr %s181, 256
          %s183 = scalar_lea.vmem [#allocation3], %s182
          %s184 = smul.u32 32, %s21
          %s185 = smul.u32 2, %s22
          %s186 = smul.addr %s184, 4
          %s187 = sadd.s32 %s185, %s186
          %s188 = smul.addr %s187, 4
          %s189 = scalar_lea.vmem %s0, %s188
          // Predicated region
          $region21: #{vgcl_forward.4} parent=19 // pred_check
            _
          $region22: #{vgcl_forward.4} parent=19 // pred_check_branch
            %191 = sbr.rel (0) target = $region24
          $region23: #{vgcl_forward.4} parent=19 // pred_region
            // Predicated region
            $region25: #{vgcl_forward.4} parent=23 // pred_check
              _
            $region26: #{vgcl_forward.4} parent=23 // pred_check_branch
              %193 = sbr.rel (0) target = $region28
            $region27: #{vgcl_forward.4} parent=23 // pred_region
              // Predicated region
              $region40: #{vgcl_forward.4} parent=27 // pred_check
                _
              $region41: #{vgcl_forward.4} parent=27 // pred_check_branch
                %271 = sbr.rel (0) target = $region43
              $region42: #{vgcl_forward.4} parent=27 // pred_region
                loop: start=0, step=1, limit=1
                $region44: #{vgcl_forward.4} parent=42 // loop_pre_header
                  _
                $region45: #{vgcl_forward.4} parent=42 // loop_header
                  %s273 = sphi 0, %s277
                  %p274 = scmp.ge.s32.totalorder %s273, 1
                  %s278 = sphi %s189, %s189
                  %s279 = sphi %s183, %s183
                $region46: #{vgcl_forward.4} parent=42 // loop_header_branch
                  %276 = sbr.rel (%p274) target = $region50
                $region47: #{vgcl_forward.4} parent=42 // loop_body
                  %v280 = vld [vmem:[%s278] sm:$0xff]
                  %281 = vst [vmem:[%s279] sm:$0xff] %v280
                  %v282 = vld [vmem:[%s278 + $0x10] sm:$0xff]
                  %283 = vst [vmem:[%s279 + $0x8] sm:$0xff] %v282
                  %v284 = vld [vmem:[%s278 + $0x20] sm:$0xff]
                  %285 = vst [vmem:[%s279 + $0x10] sm:$0xff] %v284
                  %v286 = vld [vmem:[%s278 + $0x30] sm:$0xff]
                  %287 = vst [vmem:[%s279 + $0x18] sm:$0xff] %v286
                  %v288 = vld [vmem:[%s278 + $0x40] sm:$0xff]
                  %289 = vst [vmem:[%s279 + $0x20] sm:$0xff] %v288
                  %v290 = vld [vmem:[%s278 + $0x50] sm:$0xff]
                  %291 = vst [vmem:[%s279 + $0x28] sm:$0xff] %v290
                  %v292 = vld [vmem:[%s278 + $0x60] sm:$0xff]
                  %293 = vst [vmem:[%s279 + $0x30] sm:$0xff] %v292
                  %v294 = vld [vmem:[%s278 + $0x70] sm:$0xff]
                  %295 = vst [vmem:[%s279 + $0x38] sm:$0xff] %v294
                  %v296 = vld [vmem:[%s278 + $0x80] sm:$0xff]
                  %297 = vst [vmem:[%s279 + $0x40] sm:$0xff] %v296
                  %v298 = vld [vmem:[%s278 + $0x90] sm:$0xff]
                  %299 = vst [vmem:[%s279 + $0x48] sm:$0xff] %v298
                  %v300 = vld [vmem:[%s278 + $0xa0] sm:$0xff]
                  %301 = vst [vmem:[%s279 + $0x50] sm:$0xff] %v300
                  %v302 = vld [vmem:[%s278 + $0xb0] sm:$0xff]
                  %303 = vst [vmem:[%s279 + $0x58] sm:$0xff] %v302
                  %v304 = vld [vmem:[%s278 + $0xc0] sm:$0xff]
                  %305 = vst [vmem:[%s279 + $0x60] sm:$0xff] %v304
                  %v306 = vld [vmem:[%s278 + $0xd0] sm:$0xff]
                  %307 = vst [vmem:[%s279 + $0x68] sm:$0xff] %v306
                  %v308 = vld [vmem:[%s278 + $0xe0] sm:$0xff]
                  %309 = vst [vmem:[%s279 + $0x70] sm:$0xff] %v308
                  %v310 = vld [vmem:[%s278 + $0xf0] sm:$0xff]
                  %311 = vst [vmem:[%s279 + $0x78] sm:$0xff] %v310
                  %v312 = vld [vmem:[%s278 + $0x100] sm:$0xff]
                  %313 = vst [vmem:[%s279 + $0x80] sm:$0xff] %v312
                  %v314 = vld [vmem:[%s278 + $0x110] sm:$0xff]
                  %315 = vst [vmem:[%s279 + $0x88] sm:$0xff] %v314
                  %v316 = vld [vmem:[%s278 + $0x120] sm:$0xff]
                  %317 = vst [vmem:[%s279 + $0x90] sm:$0xff] %v316
                  %v318 = vld [vmem:[%s278 + $0x130] sm:$0xff]
                  %319 = vst [vmem:[%s279 + $0x98] sm:$0xff] %v318
                  %v320 = vld [vmem:[%s278 + $0x140] sm:$0xff]
                  %321 = vst [vmem:[%s279 + $0xa0] sm:$0xff] %v320
                  %v322 = vld [vmem:[%s278 + $0x150] sm:$0xff]
                  %323 = vst [vmem:[%s279 + $0xa8] sm:$0xff] %v322
                  %v324 = vld [vmem:[%s278 + $0x160] sm:$0xff]
                  %325 = vst [vmem:[%s279 + $0xb0] sm:$0xff] %v324
                  %v326 = vld [vmem:[%s278 + $0x170] sm:$0xff]
                  %327 = vst [vmem:[%s279 + $0xb8] sm:$0xff] %v326
                  %v328 = vld [vmem:[%s278 + $0x180] sm:$0xff]
                  %329 = vst [vmem:[%s279 + $0xc0] sm:$0xff] %v328
                  %v330 = vld [vmem:[%s278 + $0x190] sm:$0xff]
                  %331 = vst [vmem:[%s279 + $0xc8] sm:$0xff] %v330
                  %v332 = vld [vmem:[%s278 + $0x1a0] sm:$0xff]
                  %333 = vst [vmem:[%s279 + $0xd0] sm:$0xff] %v332
                  %v334 = vld [vmem:[%s278 + $0x1b0] sm:$0xff]
                  %335 = vst [vmem:[%s279 + $0xd8] sm:$0xff] %v334
                  %v336 = vld [vmem:[%s278 + $0x1c0] sm:$0xff]
                  %337 = vst [vmem:[%s279 + $0xe0] sm:$0xff] %v336
                  %v338 = vld [vmem:[%s278 + $0x1d0] sm:$0xff]
                  %339 = vst [vmem:[%s279 + $0xe8] sm:$0xff] %v338
                  %v340 = vld [vmem:[%s278 + $0x1e0] sm:$0xff]
                  %341 = vst [vmem:[%s279 + $0xf0] sm:$0xff] %v340
                  %v342 = vld [vmem:[%s278 + $0x1f0] sm:$0xff]
                  %343 = vst [vmem:[%s279 + $0xf8] sm:$0xff] %v342
                $region48: #{vgcl_forward.4} parent=42 // loop_footer
                  %s277 = sadd.s32 1, %s273
                $region49: #{vgcl_forward.4} parent=42 // loop_footer_branch
                  %272 = sbr.rel target = $region45
                $region50: #{vgcl_forward.4} parent=42 // loop_exit
                  _
              $region43: #{vgcl_forward.4} parent=27 // pred_fallthru
                _
              // Predicated region
              $region51: #{vgcl_forward.4} parent=27 // pred_check
                _
              $region52: #{vgcl_forward.4} parent=27 // pred_check_branch
                %345 = sbr.rel target = $region54
              $region53: #{vgcl_forward.4} parent=27 // pred_region
                _
              $region54: #{vgcl_forward.4} parent=27 // pred_fallthru
                _
            $region28: #{vgcl_forward.4} parent=23 // pred_fallthru
              _
            // Predicated region
            $region29: #{vgcl_forward.4} parent=23 // pred_check
              _
            $region30: #{vgcl_forward.4} parent=23 // pred_check_branch
              %195 = sbr.rel target = $region32
            $region31: #{vgcl_forward.4} parent=23 // pred_region
              %s197 = ssub.s32 256, 1
              loop: start=0, step=1, limit=1
              $region33: #{vgcl_forward.4} parent=31 // loop_pre_header
                _
              $region34: #{vgcl_forward.4} parent=31 // loop_header
                %s199 = sphi 0, %s203
                %p200 = scmp.ge.s32.totalorder %s199, 1
                %s204 = sphi %s189, %s189
                %s205 = sphi %s183, %s183
              $region35: #{vgcl_forward.4} parent=31 // loop_header_branch
                %202 = sbr.rel (%p200) target = $region39
              $region36: #{vgcl_forward.4} parent=31 // loop_body
                %v206 = vld [vmem:[%s204] sm:%s197]
                %207 = vst [vmem:[%s205] sm:%s197] %v206
                %v208 = vld [vmem:[%s204 + $0x10] sm:%s197]
                %209 = vst [vmem:[%s205 + $0x8] sm:%s197] %v208
                %v210 = vld [vmem:[%s204 + $0x20] sm:%s197]
                %211 = vst [vmem:[%s205 + $0x10] sm:%s197] %v210
                %v212 = vld [vmem:[%s204 + $0x30] sm:%s197]
                %213 = vst [vmem:[%s205 + $0x18] sm:%s197] %v212
                %v214 = vld [vmem:[%s204 + $0x40] sm:%s197]
                %215 = vst [vmem:[%s205 + $0x20] sm:%s197] %v214
                %v216 = vld [vmem:[%s204 + $0x50] sm:%s197]
                %217 = vst [vmem:[%s205 + $0x28] sm:%s197] %v216
                %v218 = vld [vmem:[%s204 + $0x60] sm:%s197]
                %219 = vst [vmem:[%s205 + $0x30] sm:%s197] %v218
                %v220 = vld [vmem:[%s204 + $0x70] sm:%s197]
                %221 = vst [vmem:[%s205 + $0x38] sm:%s197] %v220
                %v222 = vld [vmem:[%s204 + $0x80] sm:%s197]
                %223 = vst [vmem:[%s205 + $0x40] sm:%s197] %v222
                %v224 = vld [vmem:[%s204 + $0x90] sm:%s197]
                %225 = vst [vmem:[%s205 + $0x48] sm:%s197] %v224
                %v226 = vld [vmem:[%s204 + $0xa0] sm:%s197]
                %227 = vst [vmem:[%s205 + $0x50] sm:%s197] %v226
                %v228 = vld [vmem:[%s204 + $0xb0] sm:%s197]
                %229 = vst [vmem:[%s205 + $0x58] sm:%s197] %v228
                %v230 = vld [vmem:[%s204 + $0xc0] sm:%s197]
                %231 = vst [vmem:[%s205 + $0x60] sm:%s197] %v230
                %v232 = vld [vmem:[%s204 + $0xd0] sm:%s197]
                %233 = vst [vmem:[%s205 + $0x68] sm:%s197] %v232
                %v234 = vld [vmem:[%s204 + $0xe0] sm:%s197]
                %235 = vst [vmem:[%s205 + $0x70] sm:%s197] %v234
                %v236 = vld [vmem:[%s204 + $0xf0] sm:%s197]
                %237 = vst [vmem:[%s205 + $0x78] sm:%s197] %v236
                %v238 = vld [vmem:[%s204 + $0x100] sm:%s197]
                %239 = vst [vmem:[%s205 + $0x80] sm:%s197] %v238
                %v240 = vld [vmem:[%s204 + $0x110] sm:%s197]
                %241 = vst [vmem:[%s205 + $0x88] sm:%s197] %v240
                %v242 = vld [vmem:[%s204 + $0x120] sm:%s197]
                %243 = vst [vmem:[%s205 + $0x90] sm:%s197] %v242
                %v244 = vld [vmem:[%s204 + $0x130] sm:%s197]
                %245 = vst [vmem:[%s205 + $0x98] sm:%s197] %v244
                %v246 = vld [vmem:[%s204 + $0x140] sm:%s197]
                %247 = vst [vmem:[%s205 + $0xa0] sm:%s197] %v246
                %v248 = vld [vmem:[%s204 + $0x150] sm:%s197]
                %249 = vst [vmem:[%s205 + $0xa8] sm:%s197] %v248
                %v250 = vld [vmem:[%s204 + $0x160] sm:%s197]
                %251 = vst [vmem:[%s205 + $0xb0] sm:%s197] %v250
                %v252 = vld [vmem:[%s204 + $0x170] sm:%s197]
                %253 = vst [vmem:[%s205 + $0xb8] sm:%s197] %v252
                %v254 = vld [vmem:[%s204 + $0x180] sm:%s197]
                %255 = vst [vmem:[%s205 + $0xc0] sm:%s197] %v254
                %v256 = vld [vmem:[%s204 + $0x190] sm:%s197]
                %257 = vst [vmem:[%s205 + $0xc8] sm:%s197] %v256
                %v258 = vld [vmem:[%s204 + $0x1a0] sm:%s197]
                %259 = vst [vmem:[%s205 + $0xd0] sm:%s197] %v258
                %v260 = vld [vmem:[%s204 + $0x1b0] sm:%s197]
                %261 = vst [vmem:[%s205 + $0xd8] sm:%s197] %v260
                %v262 = vld [vmem:[%s204 + $0x1c0] sm:%s197]
                %263 = vst [vmem:[%s205 + $0xe0] sm:%s197] %v262
                %v264 = vld [vmem:[%s204 + $0x1d0] sm:%s197]
                %265 = vst [vmem:[%s205 + $0xe8] sm:%s197] %v264
                %v266 = vld [vmem:[%s204 + $0x1e0] sm:%s197]
                %267 = vst [vmem:[%s205 + $0xf0] sm:%s197] %v266
                %v268 = vld [vmem:[%s204 + $0x1f0] sm:%s197]
                %269 = vst [vmem:[%s205 + $0xf8] sm:%s197] %v268
              $region37: #{vgcl_forward.4} parent=31 // loop_footer
                %s203 = sadd.s32 1, %s199
              $region38: #{vgcl_forward.4} parent=31 // loop_footer_branch
                %198 = sbr.rel target = $region34
              $region39: #{vgcl_forward.4} parent=31 // loop_exit
                _
            $region32: #{vgcl_forward.4} parent=23 // pred_fallthru
              _
          $region24: #{vgcl_forward.4} parent=19 // pred_fallthru
            _
          %346 = vnop
        $region20: #{vgcl_forward.4} parent=15 // pred_fallthru
          _
        // Predicated region
        $region55: #{vgcl_forward.4} parent=15 // pred_check
          %p347 = pneg %p74
        $region56: #{vgcl_forward.4} parent=15 // pred_check_branch
          %349 = sbr.rel (%p347) target = $region58
        $region57: #{vgcl_forward.4} parent=15 // pred_region
          %s350 = smul.u32 32, %s22
          %p351 = scmp.lt.s32.totalorder %s350, 63
          %s352 = scalar_select %p351, %s350, 63
          %s353 = smul.addr %s352, 8
          %s354 = scalar_lea.vmem %s1, %s353
          %s355 = smul.u32 32, %s22
        $region58: #{vgcl_forward.4} parent=15 // pred_fallthru
          _
        // Predicated region
        $region59: #{vgcl_forward.4} parent=15 // pred_check
          %p356 = pneg %p100
        $region60: #{vgcl_forward.4} parent=15 // pred_check_branch
          %358 = sbr.rel (%p356) target = $region62
        $region61: #{vgcl_forward.4} parent=15 // pred_region
          %s359 = smul.u32 32, %s21
          %p360 = scmp.lt.s32.totalorder %s359, 63
          %s361 = scalar_select %p360, %s359, 63
          %s362 = smul.addr %s361, 8
          %s363 = scalar_lea.vmem %s2, %s362
          %s364 = smul.u32 32, %s21
        $region62: #{vgcl_forward.4} parent=15 // pred_fallthru
          _
      $region16: #{vgcl_forward.4} parent=5 // pred_fallthru
        _
      %p365 = scmp.le.s32.totalorder 1, %s14
      %p366 = scmp.lt.s32.totalorder %s14, 5
      %p367 = pnand %p365, %p366
      %p368 = pneg %p367
      // Predicated region
      $region63: #{vgcl_forward.4} parent=5 // pred_check
        _
      $region64: #{vgcl_forward.4} parent=5 // pred_check_branch
        %370 = sbr.rel (%p367) target = $region66
      $region65: #{vgcl_forward.4} parent=5 // pred_region
        %s371 = ssub.s32 %s14, 1
        %s372 = sand.u32 %s41, 1
        %s373 = sand.u32 %s41, 1
        %s374 = smul.addr %s373, 256
        %s375 = scalar_lea.vmem [#allocation3], %s374
        // Predicated region
        $region67: #{vgcl_forward.4} parent=65 // pred_check
          %p376 = pneg %p54
        $region68: #{vgcl_forward.4} parent=65 // pred_check_branch
          %378 = sbr.rel (%p376) target = $region70
        $region69: #{vgcl_forward.4} parent=65 // pred_region
          _
        $region70: #{vgcl_forward.4} parent=65 // pred_fallthru
          _
        %s379 = sand.u32 %s41, 1
        %s380 = sand.u32 %s41, 1
        %s381 = smul.addr %s380, 256
        %s382 = scalar_lea.vmem [#allocation3], %s381
        %p383 = pneg %p54
        %p384 = pneg %p51
        %s385 = smul.u32 32, %s24
        %p386 = scmp.lt.s32.totalorder %s385, 63
        %s387 = scalar_select %p386, %s385, 63
        %s388 = smul.addr %s387, 8
        %s389 = scalar_lea.vmem %s1, %s388
        %p390 = pneg %p80
        %p391 = pneg %p77
        %s392 = smul.u32 32, %s23
        %p393 = scmp.lt.s32.totalorder %s392, 63
        %s394 = scalar_select %p393, %s392, 63
        %s395 = smul.addr %s394, 8
        %s396 = scalar_lea.vmem %s2, %s395
        %p397 = pneg %p106
        %p398 = pneg %p103
        %p399 = pneg %p132
        %p400 = pneg %p129
        %s401 = sand.u32 %s119, 1
        %s402 = scalar_lea.sflag [#allocation5], %s401
        %s403 = sand.u32 %s119, 1
        %s404 = smul.addr %s403, 256
        %s405 = scalar_lea.vmem [#allocation4], %s404
        %p406 = pneg %p158
        %p407 = pneg %p155
        %s408 = smul.u32 32, %s23
        %p409 = scmp.lt.s32.totalorder %s408, 63
        %s410 = scalar_select %p409, %s408, 63
        %s411 = smul.addr %s410, 8
        %s412 = scalar_lea.vmem %s4, %s411
        %s413 = smul.u32 32, %s23
        %s414 = smul.u32 2, %s24
        %s415 = smul.u32 32, %s24
        %p416 = scmp.lt.s32.totalorder %s415, 63
        %s417 = scalar_select %p416, %s415, 63
        %s418 = smul.addr %s417, 8
        %s419 = scalar_lea.vmem %s1, %s418
        %s420 = smul.u32 32, %s24
        %s421 = smul.u32 32, %s23
        %p422 = scmp.lt.s32.totalorder %s421, 63
        %s423 = scalar_select %p422, %s421, 63
        %s424 = smul.addr %s423, 8
        %s425 = scalar_lea.vmem %s2, %s424
        %s426 = smul.u32 32, %s23
        %s427 = smul.u32 32, %s23
        %s428 = smul.u32 32, %s23
        %p429 = scmp.lt.s32.totalorder %s428, 63
        %s430 = scalar_select %p429, %s428, 63
        %s431 = smul.addr %s430, 8
        %s432 = scalar_lea.vmem %s4, %s431
        %s433 = smul.u32 32, %s23
        %p435 = scmp.eq.s32.totalorder %s24, 0
        // Predicated region
        $region71: #{vgcl_forward.4} parent=65 // pred_check
          %p436 = pneg %p435
        $region72: #{vgcl_forward.4} parent=65 // pred_check_branch
          %438 = sbr.rel (%p436) target = $region74
        $region73: #{vgcl_forward.4} parent=65 // pred_region
          %vm439 = vcmask 261120
          %440 = vst.msk [vmem:[#allocation2] sm:$0xff] %vm439, 0.0
          %441 = vst.msk [vmem:[#allocation2 + $0x8] sm:$0xff] %vm439, 0.0
          %442 = vst.msk [vmem:[#allocation2 + $0x10] sm:$0xff] %vm439, 0.0
          %443 = vst.msk [vmem:[#allocation2 + $0x18] sm:$0xff] %vm439, 0.0
          %444 = vst.msk [vmem:[#allocation2 + $0x20] sm:$0xff] %vm439, 0.0
          %445 = vst.msk [vmem:[#allocation2 + $0x28] sm:$0xff] %vm439, 0.0
          %446 = vst.msk [vmem:[#allocation2 + $0x30] sm:$0xff] %vm439, 0.0
          %447 = vst.msk [vmem:[#allocation2 + $0x38] sm:$0xff] %vm439, 0.0
          %448 = vst.msk [vmem:[#allocation2 + $0x40] sm:$0xff] %vm439, 0.0
          %449 = vst.msk [vmem:[#allocation2 + $0x48] sm:$0xff] %vm439, 0.0
          %450 = vst.msk [vmem:[#allocation2 + $0x50] sm:$0xff] %vm439, 0.0
          %451 = vst.msk [vmem:[#allocation2 + $0x58] sm:$0xff] %vm439, 0.0
          %452 = vst.msk [vmem:[#allocation2 + $0x60] sm:$0xff] %vm439, 0.0
          %453 = vst.msk [vmem:[#allocation2 + $0x68] sm:$0xff] %vm439, 0.0
          %454 = vst.msk [vmem:[#allocation2 + $0x70] sm:$0xff] %vm439, 0.0
          %455 = vst.msk [vmem:[#allocation2 + $0x78] sm:$0xff] %vm439, 0.0
          %456 = vst.msk [vmem:[#allocation2 + $0x80] sm:$0xff] %vm439, 0.0
          %457 = vst.msk [vmem:[#allocation2 + $0x88] sm:$0xff] %vm439, 0.0
          %458 = vst.msk [vmem:[#allocation2 + $0x90] sm:$0xff] %vm439, 0.0
          %459 = vst.msk [vmem:[#allocation2 + $0x98] sm:$0xff] %vm439, 0.0
          %460 = vst.msk [vmem:[#allocation2 + $0xa0] sm:$0xff] %vm439, 0.0
          %461 = vst.msk [vmem:[#allocation2 + $0xa8] sm:$0xff] %vm439, 0.0
          %462 = vst.msk [vmem:[#allocation2 + $0xb0] sm:$0xff] %vm439, 0.0
          %463 = vst.msk [vmem:[#allocation2 + $0xb8] sm:$0xff] %vm439, 0.0
          %464 = vst.msk [vmem:[#allocation2 + $0xc0] sm:$0xff] %vm439, 0.0
          %465 = vst.msk [vmem:[#allocation2 + $0xc8] sm:$0xff] %vm439, 0.0
          %466 = vst.msk [vmem:[#allocation2 + $0xd0] sm:$0xff] %vm439, 0.0
          %467 = vst.msk [vmem:[#allocation2 + $0xd8] sm:$0xff] %vm439, 0.0
          %468 = vst.msk [vmem:[#allocation2 + $0xe0] sm:$0xff] %vm439, 0.0
          %469 = vst.msk [vmem:[#allocation2 + $0xe8] sm:$0xff] %vm439, 0.0
          %470 = vst.msk [vmem:[#allocation2 + $0xf0] sm:$0xff] %vm439, 0.0
          %471 = vst.msk [vmem:[#allocation2 + $0xf8] sm:$0xff] %vm439, 0.0
        $region74: #{vgcl_forward.4} parent=65 // pred_fallthru
          _
        %v472 = vld [vmem:[#allocation2] sm:$0xff]
        %v473 = vld [vmem:[#allocation2 + $0x8] sm:$0xff]
        %v474 = vld [vmem:[#allocation2 + $0x10] sm:$0xff]
        %v475 = vld [vmem:[#allocation2 + $0x18] sm:$0xff]
        %v476 = vld [vmem:[#allocation2 + $0x20] sm:$0xff]
        %v477 = vld [vmem:[#allocation2 + $0x28] sm:$0xff]
        %v478 = vld [vmem:[#allocation2 + $0x30] sm:$0xff]
        %v479 = vld [vmem:[#allocation2 + $0x38] sm:$0xff]
        %v480 = vld [vmem:[#allocation2 + $0x40] sm:$0xff]
        %v481 = vld [vmem:[#allocation2 + $0x48] sm:$0xff]
        %v482 = vld [vmem:[#allocation2 + $0x50] sm:$0xff]
        %v483 = vld [vmem:[#allocation2 + $0x58] sm:$0xff]
        %v484 = vld [vmem:[#allocation2 + $0x60] sm:$0xff]
        %v485 = vld [vmem:[#allocation2 + $0x68] sm:$0xff]
        %v486 = vld [vmem:[#allocation2 + $0x70] sm:$0xff]
        %v487 = vld [vmem:[#allocation2 + $0x78] sm:$0xff]
        %v488 = vld [vmem:[#allocation2 + $0x80] sm:$0xff]
        %v489 = vld [vmem:[#allocation2 + $0x88] sm:$0xff]
        %v490 = vld [vmem:[#allocation2 + $0x90] sm:$0xff]
        %v491 = vld [vmem:[#allocation2 + $0x98] sm:$0xff]
        %v492 = vld [vmem:[#allocation2 + $0xa0] sm:$0xff]
        %v493 = vld [vmem:[#allocation2 + $0xa8] sm:$0xff]
        %v494 = vld [vmem:[#allocation2 + $0xb0] sm:$0xff]
        %v495 = vld [vmem:[#allocation2 + $0xb8] sm:$0xff]
        %v496 = vld [vmem:[#allocation2 + $0xc0] sm:$0xff]
        %v497 = vld [vmem:[#allocation2 + $0xc8] sm:$0xff]
        %v498 = vld [vmem:[#allocation2 + $0xd0] sm:$0xff]
        %v499 = vld [vmem:[#allocation2 + $0xd8] sm:$0xff]
        %v500 = vld [vmem:[#allocation2 + $0xe0] sm:$0xff]
        %v501 = vld [vmem:[#allocation2 + $0xe8] sm:$0xff]
        %v502 = vld [vmem:[#allocation2 + $0xf0] sm:$0xff]
        %v503 = vld [vmem:[#allocation2 + $0xf8] sm:$0xff]
        %v504 = vld [vmem:[%s375] sm:$0xff]
        %v505 = vld [vmem:[%s375 + $0x8] sm:$0xff]
        %v506 = vld [vmem:[%s375 + $0x10] sm:$0xff]
        %v507 = vld [vmem:[%s375 + $0x18] sm:$0xff]
        %v508 = vld [vmem:[%s375 + $0x20] sm:$0xff]
        %v509 = vld [vmem:[%s375 + $0x28] sm:$0xff]
        %v510 = vld [vmem:[%s375 + $0x30] sm:$0xff]
        %v511 = vld [vmem:[%s375 + $0x38] sm:$0xff]
        %v512 = vld [vmem:[%s375 + $0x40] sm:$0xff]
        %v513 = vld [vmem:[%s375 + $0x48] sm:$0xff]
        %v514 = vld [vmem:[%s375 + $0x50] sm:$0xff]
        %v515 = vld [vmem:[%s375 + $0x58] sm:$0xff]
        %v516 = vld [vmem:[%s375 + $0x60] sm:$0xff]
        %v517 = vld [vmem:[%s375 + $0x68] sm:$0xff]
        %v518 = vld [vmem:[%s375 + $0x70] sm:$0xff]
        %v519 = vld [vmem:[%s375 + $0x78] sm:$0xff]
        %v520 = vld [vmem:[%s375 + $0x80] sm:$0xff]
        %v521 = vld [vmem:[%s375 + $0x88] sm:$0xff]
        %v522 = vld [vmem:[%s375 + $0x90] sm:$0xff]
        %v523 = vld [vmem:[%s375 + $0x98] sm:$0xff]
        %v524 = vld [vmem:[%s375 + $0xa0] sm:$0xff]
        %v525 = vld [vmem:[%s375 + $0xa8] sm:$0xff]
        %v526 = vld [vmem:[%s375 + $0xb0] sm:$0xff]
        %v527 = vld [vmem:[%s375 + $0xb8] sm:$0xff]
        %v528 = vld [vmem:[%s375 + $0xc0] sm:$0xff]
        %v529 = vld [vmem:[%s375 + $0xc8] sm:$0xff]
        %v530 = vld [vmem:[%s375 + $0xd0] sm:$0xff]
        %v531 = vld [vmem:[%s375 + $0xd8] sm:$0xff]
        %v532 = vld [vmem:[%s375 + $0xe0] sm:$0xff]
        %v533 = vld [vmem:[%s375 + $0xe8] sm:$0xff]
        %v534 = vld [vmem:[%s375 + $0xf0] sm:$0xff]
        %v535 = vld [vmem:[%s375 + $0xf8] sm:$0xff]
        %v536 = vld [vmem:[%s419] sm:$0xff]
        %v537 = vld [vmem:[%s419 + $0x8] sm:$0xff]
        %v538 = vld [vmem:[%s419 + $0x10] sm:$0xff]
        %v539 = vld [vmem:[%s419 + $0x18] sm:$0xff]
        %v540 = vld [vmem:[%s419 + $0x20] sm:$0xff]
        %v541 = vld [vmem:[%s419 + $0x28] sm:$0xff]
        %v542 = vld [vmem:[%s419 + $0x30] sm:$0xff]
        %v543 = vld [vmem:[%s419 + $0x38] sm:$0xff]
        %v544 = vld [vmem:[%s419 + $0x40] sm:$0xff]
        %v545 = vld [vmem:[%s419 + $0x48] sm:$0xff]
        %v546 = vld [vmem:[%s419 + $0x50] sm:$0xff]
        %v547 = vld [vmem:[%s419 + $0x58] sm:$0xff]
        %v548 = vld [vmem:[%s419 + $0x60] sm:$0xff]
        %v549 = vld [vmem:[%s419 + $0x68] sm:$0xff]
        %v550 = vld [vmem:[%s419 + $0x70] sm:$0xff]
        %v551 = vld [vmem:[%s419 + $0x78] sm:$0xff]
        %v552 = vld [vmem:[%s419 + $0x80] sm:$0xff]
        %v553 = vld [vmem:[%s419 + $0x88] sm:$0xff]
        %v554 = vld [vmem:[%s419 + $0x90] sm:$0xff]
        %v555 = vld [vmem:[%s419 + $0x98] sm:$0xff]
        %v556 = vld [vmem:[%s419 + $0xa0] sm:$0xff]
        %v557 = vld [vmem:[%s419 + $0xa8] sm:$0xff]
        %v558 = vld [vmem:[%s419 + $0xb0] sm:$0xff]
        %v559 = vld [vmem:[%s419 + $0xb8] sm:$0xff]
        %v560 = vld [vmem:[%s419 + $0xc0] sm:$0xff]
        %v561 = vld [vmem:[%s419 + $0xc8] sm:$0xff]
        %v562 = vld [vmem:[%s419 + $0xd0] sm:$0xff]
        %v563 = vld [vmem:[%s419 + $0xd8] sm:$0xff]
        %v564 = vld [vmem:[%s419 + $0xe0] sm:$0xff]
        %v565 = vld [vmem:[%s419 + $0xe8] sm:$0xff]
        %v566 = vld [vmem:[%s419 + $0xf0] sm:$0xff]
        %v567 = vld [vmem:[%s419 + $0xf8] sm:$0xff]
        %v568 = vpack.c.bf16 %v537, %v536
        %v569 = vpack.c.bf16 %v539, %v538
        %v570 = vpack.c.bf16 %v541, %v540
        %v571 = vpack.c.bf16 %v543, %v542
        %v572 = vpack.c.bf16 %v545, %v544
        %v573 = vpack.c.bf16 %v547, %v546
        %v574 = vpack.c.bf16 %v549, %v548
        %v575 = vpack.c.bf16 %v551, %v550
        %v576 = vpack.c.bf16 %v553, %v552
        %v577 = vpack.c.bf16 %v555, %v554
        %v578 = vpack.c.bf16 %v557, %v556
        %v579 = vpack.c.bf16 %v559, %v558
        %v580 = vpack.c.bf16 %v561, %v560
        %v581 = vpack.c.bf16 %v563, %v562
        %v582 = vpack.c.bf16 %v565, %v564
        %v583 = vpack.c.bf16 %v567, %v566
        %v616 = vunpack.c.l.b16 %v504
        %v617 = vunpack.c.h.b16 %v504
        %v618 = vunpack.c.l.b16 %v505
        %v619 = vunpack.c.h.b16 %v505
        %v620 = vunpack.c.l.b16 %v506
        %v621 = vunpack.c.h.b16 %v506
        %v622 = vunpack.c.l.b16 %v507
        %v623 = vunpack.c.h.b16 %v507
        %v624 = vunpack.c.l.b16 %v508
        %v625 = vunpack.c.h.b16 %v508
        %v626 = vunpack.c.l.b16 %v509
        %v627 = vunpack.c.h.b16 %v509
        %v628 = vunpack.c.l.b16 %v510
        %v629 = vunpack.c.h.b16 %v510
        %v630 = vunpack.c.l.b16 %v511
        %v631 = vunpack.c.h.b16 %v511
        %v632 = vunpack.c.l.b16 %v512
        %v633 = vunpack.c.h.b16 %v512
        %v634 = vunpack.c.l.b16 %v513
        %v635 = vunpack.c.h.b16 %v513
        %v636 = vunpack.c.l.b16 %v514
        %v637 = vunpack.c.h.b16 %v514
        %v638 = vunpack.c.l.b16 %v515
        %v639 = vunpack.c.h.b16 %v515
        %v640 = vunpack.c.l.b16 %v516
        %v641 = vunpack.c.h.b16 %v516
        %v642 = vunpack.c.l.b16 %v517
        %v643 = vunpack.c.h.b16 %v517
        %v644 = vunpack.c.l.b16 %v518
        %v645 = vunpack.c.h.b16 %v518
        %v646 = vunpack.c.l.b16 %v519
        %v647 = vunpack.c.h.b16 %v519
        %v648 = vunpack.c.l.b16 %v520
        %v649 = vunpack.c.h.b16 %v520
        %v650 = vunpack.c.l.b16 %v521
        %v651 = vunpack.c.h.b16 %v521
        %v652 = vunpack.c.l.b16 %v522
        %v653 = vunpack.c.h.b16 %v522
        %v654 = vunpack.c.l.b16 %v523
        %v655 = vunpack.c.h.b16 %v523
        %v656 = vunpack.c.l.b16 %v524
        %v657 = vunpack.c.h.b16 %v524
        %v658 = vunpack.c.l.b16 %v525
        %v659 = vunpack.c.h.b16 %v525
        %v660 = vunpack.c.l.b16 %v526
        %v661 = vunpack.c.h.b16 %v526
        %v662 = vunpack.c.l.b16 %v527
        %v663 = vunpack.c.h.b16 %v527
        %v664 = vunpack.c.l.b16 %v528
        %v665 = vunpack.c.h.b16 %v528
        %v666 = vunpack.c.l.b16 %v529
        %v667 = vunpack.c.h.b16 %v529
        %v668 = vunpack.c.l.b16 %v530
        %v669 = vunpack.c.h.b16 %v530
        %v670 = vunpack.c.l.b16 %v531
        %v671 = vunpack.c.h.b16 %v531
        %v672 = vunpack.c.l.b16 %v532
        %v673 = vunpack.c.h.b16 %v532
        %v674 = vunpack.c.l.b16 %v533
        %v675 = vunpack.c.h.b16 %v533
        %v676 = vunpack.c.l.b16 %v534
        %v677 = vunpack.c.h.b16 %v534
        %v678 = vunpack.c.l.b16 %v535
        %v679 = vunpack.c.h.b16 %v535
        %v680 = vpack.c.b16 %v618, %v616
        %v681 = vpack.c.b16 %v619, %v617
        %v682 = vpack.c.b16 %v622, %v620
        %v683 = vpack.c.b16 %v623, %v621
        %v684 = vpack.c.b16 %v626, %v624
        %v685 = vpack.c.b16 %v627, %v625
        %v686 = vpack.c.b16 %v630, %v628
        %v687 = vpack.c.b16 %v631, %v629
        %v688 = vpack.c.b16 %v634, %v632
        %v689 = vpack.c.b16 %v635, %v633
        %v690 = vpack.c.b16 %v638, %v636
        %v691 = vpack.c.b16 %v639, %v637
        %v692 = vpack.c.b16 %v642, %v640
        %v693 = vpack.c.b16 %v643, %v641
        %v694 = vpack.c.b16 %v646, %v644
        %v695 = vpack.c.b16 %v647, %v645
        %v696 = vpack.c.b16 %v650, %v648
        %v697 = vpack.c.b16 %v651, %v649
        %v698 = vpack.c.b16 %v654, %v652
        %v699 = vpack.c.b16 %v655, %v653
        %v700 = vpack.c.b16 %v658, %v656
        %v701 = vpack.c.b16 %v659, %v657
        %v702 = vpack.c.b16 %v662, %v660
        %v703 = vpack.c.b16 %v663, %v661
        %v704 = vpack.c.b16 %v666, %v664
        %v705 = vpack.c.b16 %v667, %v665
        %v706 = vpack.c.b16 %v670, %v668
        %v707 = vpack.c.b16 %v671, %v669
        %v708 = vpack.c.b16 %v674, %v672
        %v709 = vpack.c.b16 %v675, %v673
        %v710 = vpack.c.b16 %v678, %v676
        %v711 = vpack.c.b16 %v679, %v677
        %744 = vmatprep.subr.bf16.mxu0 0
        %745 = vmatpush1.bf16.msra.mxu0 %v575
        %746 = vmatprep.subr.bf16.mxu0 0
        %747 = vmatpush1.bf16.msra.mxu0 %v574
        %748 = vmatprep.subr.bf16.mxu0 0
        %749 = vmatpush1.bf16.msra.mxu0 %v573
        %750 = vmatprep.subr.bf16.mxu0 0
        %751 = vmatpush1.bf16.msra.mxu0 %v572
        %752 = vmatprep.subr.bf16.mxu0 0
        %753 = vmatpush1.bf16.msra.mxu0 %v571
        %754 = vmatprep.subr.bf16.mxu0 0
        %755 = vmatpush1.bf16.msra.mxu0 %v570
        %756 = vmatprep.subr.bf16.mxu0 0
        %757 = vmatpush1.bf16.msra.mxu0 %v569
        %758 = vmatprep.subr.bf16.mxu0 0
        %759 = vmatpush1.bf16.msra.mxu0 %v568
        %760 = vmatprep.subr.bf16.mxu0 0
        %761 = vmatpush2.bf16.msra.mxu0 %v583
        %762 = vmatprep.subr.bf16.mxu0 0
        %763 = vmatpush2.bf16.msra.mxu0 %v582
        %764 = vmatprep.subr.bf16.mxu0 0
        %765 = vmatpush2.bf16.msra.mxu0 %v581
        %766 = vmatprep.subr.bf16.mxu0 0
        %767 = vmatpush2.bf16.msra.mxu0 %v580
        %768 = vmatprep.subr.bf16.mxu0 0
        %769 = vmatpush2.bf16.msra.mxu0 %v579
        %770 = vmatprep.subr.bf16.mxu0 0
        %771 = vmatpush2.bf16.msra.mxu0 %v578
        %772 = vmatprep.subr.bf16.mxu0 0
        %773 = vmatpush2.bf16.msra.mxu0 %v577
        %774 = vmatprep.subr.bf16.mxu0 0
        %775 = vmatpush2.bf16.msra.mxu0 %v576
        %776 = vmatprep.mubr.bf16.mxu0 %v681
        %777 = vmatmul.mubr.bf16.gmra.mxu0 %v680
        %v778 = vpop.f32.mrf.mxu0
        %v779 = vadd.f32 0.0, %v778
        %v780 = vpop.f32.mrf.mxu0
        %v781 = vpop.f32.mrf.mxu0
        %v782 = vadd.f32 0.0, %v781
        %v783 = vpop.f32.mrf.mxu0
        %784 = vmatprep.mubr.bf16.mxu0 %v683
        %785 = vmatmul.mubr.bf16.gmra.mxu0 %v682
        %v786 = vpop.f32.mrf.mxu0
        %v787 = vadd.f32 0.0, %v786
        %v788 = vpop.f32.mrf.mxu0
        %v789 = vpop.f32.mrf.mxu0
        %v790 = vadd.f32 0.0, %v789
        %v791 = vpop.f32.mrf.mxu0
        %792 = vmatprep.mubr.bf16.mxu0 %v685
        %793 = vmatmul.mubr.bf16.gmra.mxu0 %v684
        %v794 = vpop.f32.mrf.mxu0
        %v795 = vadd.f32 0.0, %v794
        %v796 = vpop.f32.mrf.mxu0
        %v797 = vpop.f32.mrf.mxu0
        %v798 = vadd.f32 0.0, %v797
        %v799 = vpop.f32.mrf.mxu0
        %800 = vmatprep.mubr.bf16.mxu0 %v687
        %801 = vmatmul.mubr.bf16.gmra.mxu0 %v686
        %v802 = vpop.f32.mrf.mxu0
        %v803 = vadd.f32 0.0, %v802
        %v804 = vpop.f32.mrf.mxu0
        %v805 = vpop.f32.mrf.mxu0
        %v806 = vadd.f32 0.0, %v805
        %v807 = vpop.f32.mrf.mxu0
        %808 = vmatprep.mubr.bf16.mxu0 %v689
        %809 = vmatmul.mubr.bf16.gmra.mxu0 %v688
        %v810 = vpop.f32.mrf.mxu0
        %v811 = vadd.f32 0.0, %v810
        %v812 = vpop.f32.mrf.mxu0
        %v813 = vpop.f32.mrf.mxu0
        %v814 = vadd.f32 0.0, %v813
        %v815 = vpop.f32.mrf.mxu0
        %816 = vmatprep.mubr.bf16.mxu0 %v691
        %817 = vmatmul.mubr.bf16.gmra.mxu0 %v690
        %v818 = vpop.f32.mrf.mxu0
        %v819 = vadd.f32 0.0, %v818
        %v820 = vpop.f32.mrf.mxu0
        %v821 = vpop.f32.mrf.mxu0
        %v822 = vadd.f32 0.0, %v821
        %v823 = vpop.f32.mrf.mxu0
        %824 = vmatprep.mubr.bf16.mxu0 %v693
        %825 = vmatmul.mubr.bf16.gmra.mxu0 %v692
        %v826 = vpop.f32.mrf.mxu0
        %v827 = vadd.f32 0.0, %v826
        %v828 = vpop.f32.mrf.mxu0
        %v829 = vpop.f32.mrf.mxu0
        %v830 = vadd.f32 0.0, %v829
        %v831 = vpop.f32.mrf.mxu0
        %832 = vmatprep.mubr.bf16.mxu0 %v695
        %833 = vmatmul.mubr.bf16.gmra.mxu0 %v694
        %v834 = vpop.f32.mrf.mxu0
        %v835 = vadd.f32 0.0, %v834
        %v836 = vpop.f32.mrf.mxu0
        %v837 = vpop.f32.mrf.mxu0
        %v838 = vadd.f32 0.0, %v837
        %v839 = vpop.f32.mrf.mxu0
        %840 = vmatprep.mubr.bf16.mxu0 %v697
        %841 = vmatmul.mubr.bf16.gmra.mxu0 %v696
        %v842 = vpop.f32.mrf.mxu0
        %v843 = vadd.f32 0.0, %v842
        %v844 = vpop.f32.mrf.mxu0
        %v845 = vpop.f32.mrf.mxu0
        %v846 = vadd.f32 0.0, %v845
        %v847 = vpop.f32.mrf.mxu0
        %848 = vmatprep.mubr.bf16.mxu0 %v699
        %849 = vmatmul.mubr.bf16.gmra.mxu0 %v698
        %v850 = vpop.f32.mrf.mxu0
        %v851 = vadd.f32 0.0, %v850
        %v852 = vpop.f32.mrf.mxu0
        %v853 = vpop.f32.mrf.mxu0
        %v854 = vadd.f32 0.0, %v853
        %v855 = vpop.f32.mrf.mxu0
        %856 = vmatprep.mubr.bf16.mxu0 %v701
        %857 = vmatmul.mubr.bf16.gmra.mxu0 %v700
        %v858 = vpop.f32.mrf.mxu0
        %v859 = vadd.f32 0.0, %v858
        %v860 = vpop.f32.mrf.mxu0
        %v861 = vpop.f32.mrf.mxu0
        %v862 = vadd.f32 0.0, %v861
        %v863 = vpop.f32.mrf.mxu0
        %864 = vmatprep.mubr.bf16.mxu0 %v703
        %865 = vmatmul.mubr.bf16.gmra.mxu0 %v702
        %v866 = vpop.f32.mrf.mxu0
        %v867 = vadd.f32 0.0, %v866
        %v868 = vpop.f32.mrf.mxu0
        %v869 = vpop.f32.mrf.mxu0
        %v870 = vadd.f32 0.0, %v869
        %v871 = vpop.f32.mrf.mxu0
        %872 = vmatprep.mubr.bf16.mxu0 %v705
        %873 = vmatmul.mubr.bf16.gmra.mxu0 %v704
        %v874 = vpop.f32.mrf.mxu0
        %v875 = vadd.f32 0.0, %v874
        %v876 = vpop.f32.mrf.mxu0
        %v877 = vpop.f32.mrf.mxu0
        %v878 = vadd.f32 0.0, %v877
        %v879 = vpop.f32.mrf.mxu0
        %880 = vmatprep.mubr.bf16.mxu0 %v707
        %881 = vmatmul.mubr.bf16.gmra.mxu0 %v706
        %v882 = vpop.f32.mrf.mxu0
        %v883 = vadd.f32 0.0, %v882
        %v884 = vpop.f32.mrf.mxu0
        %v885 = vpop.f32.mrf.mxu0
        %v886 = vadd.f32 0.0, %v885
        %v887 = vpop.f32.mrf.mxu0
        %888 = vmatprep.mubr.bf16.mxu0 %v709
        %889 = vmatmul.mubr.bf16.gmra.mxu0 %v708
        %v890 = vpop.f32.mrf.mxu0
        %v891 = vadd.f32 0.0, %v890
        %v892 = vpop.f32.mrf.mxu0
        %v893 = vpop.f32.mrf.mxu0
        %v894 = vadd.f32 0.0, %v893
        %v895 = vpop.f32.mrf.mxu0
        %896 = vmatprep.mubr.bf16.mxu0 %v711
        %897 = vmatmul.mubr.bf16.gmra.mxu0 %v710
        %v898 = vpop.f32.mrf.mxu0
        %v899 = vadd.f32 0.0, %v898
        %v900 = vpop.f32.mrf.mxu0
        %v901 = vpop.f32.mrf.mxu0
        %v902 = vadd.f32 0.0, %v901
        %v903 = vpop.f32.mrf.mxu0
        %904 = vdwg.mxu0
        %v905 = vadd.f32 %v472, %v779
        %v906 = vadd.f32 %v473, %v782
        %v907 = vadd.f32 %v474, %v787
        %v908 = vadd.f32 %v475, %v790
        %v909 = vadd.f32 %v476, %v795
        %v910 = vadd.f32 %v477, %v798
        %v911 = vadd.f32 %v478, %v803
        %v912 = vadd.f32 %v479, %v806
        %v913 = vadd.f32 %v480, %v811
        %v914 = vadd.f32 %v481, %v814
        %v915 = vadd.f32 %v482, %v819
        %v916 = vadd.f32 %v483, %v822
        %v917 = vadd.f32 %v484, %v827
        %v918 = vadd.f32 %v485, %v830
        %v919 = vadd.f32 %v486, %v835
        %v920 = vadd.f32 %v487, %v838
        %v921 = vadd.f32 %v488, %v843
        %v922 = vadd.f32 %v489, %v846
        %v923 = vadd.f32 %v490, %v851
        %v924 = vadd.f32 %v491, %v854
        %v925 = vadd.f32 %v492, %v859
        %v926 = vadd.f32 %v493, %v862
        %v927 = vadd.f32 %v494, %v867
        %v928 = vadd.f32 %v495, %v870
        %v929 = vadd.f32 %v496, %v875
        %v930 = vadd.f32 %v497, %v878
        %v931 = vadd.f32 %v498, %v883
        %v932 = vadd.f32 %v499, %v886
        %v933 = vadd.f32 %v500, %v891
        %v934 = vadd.f32 %v501, %v894
        %v935 = vadd.f32 %v502, %v899
        %v936 = vadd.f32 %v503, %v902
        %vm937 = vcmask 261120
        %938 = vst.msk [vmem:[#allocation2] sm:$0xff] %vm937, %v905
        %939 = vst.msk [vmem:[#allocation2 + $0x8] sm:$0xff] %vm937, %v906
        %940 = vst.msk [vmem:[#allocation2 + $0x10] sm:$0xff] %vm937, %v907
        %941 = vst.msk [vmem:[#allocation2 + $0x18] sm:$0xff] %vm937, %v908
        %942 = vst.msk [vmem:[#allocation2 + $0x20] sm:$0xff] %vm937, %v909
        %943 = vst.msk [vmem:[#allocation2 + $0x28] sm:$0xff] %vm937, %v910
        %944 = vst.msk [vmem:[#allocation2 + $0x30] sm:$0xff] %vm937, %v911
        %945 = vst.msk [vmem:[#allocation2 + $0x38] sm:$0xff] %vm937, %v912
        %946 = vst.msk [vmem:[#allocation2 + $0x40] sm:$0xff] %vm937, %v913
        %947 = vst.msk [vmem:[#allocation2 + $0x48] sm:$0xff] %vm937, %v914
        %948 = vst.msk [vmem:[#allocation2 + $0x50] sm:$0xff] %vm937, %v915
        %949 = vst.msk [vmem:[#allocation2 + $0x58] sm:$0xff] %vm937, %v916
        %950 = vst.msk [vmem:[#allocation2 + $0x60] sm:$0xff] %vm937, %v917
        %951 = vst.msk [vmem:[#allocation2 + $0x68] sm:$0xff] %vm937, %v918
        %952 = vst.msk [vmem:[#allocation2 + $0x70] sm:$0xff] %vm937, %v919
        %953 = vst.msk [vmem:[#allocation2 + $0x78] sm:$0xff] %vm937, %v920
        %954 = vst.msk [vmem:[#allocation2 + $0x80] sm:$0xff] %vm937, %v921
        %955 = vst.msk [vmem:[#allocation2 + $0x88] sm:$0xff] %vm937, %v922
        %956 = vst.msk [vmem:[#allocation2 + $0x90] sm:$0xff] %vm937, %v923
        %957 = vst.msk [vmem:[#allocation2 + $0x98] sm:$0xff] %vm937, %v924
        %958 = vst.msk [vmem:[#allocation2 + $0xa0] sm:$0xff] %vm937, %v925
        %959 = vst.msk [vmem:[#allocation2 + $0xa8] sm:$0xff] %vm937, %v926
        %960 = vst.msk [vmem:[#allocation2 + $0xb0] sm:$0xff] %vm937, %v927
        %961 = vst.msk [vmem:[#allocation2 + $0xb8] sm:$0xff] %vm937, %v928
        %962 = vst.msk [vmem:[#allocation2 + $0xc0] sm:$0xff] %vm937, %v929
        %963 = vst.msk [vmem:[#allocation2 + $0xc8] sm:$0xff] %vm937, %v930
        %964 = vst.msk [vmem:[#allocation2 + $0xd0] sm:$0xff] %vm937, %v931
        %965 = vst.msk [vmem:[#allocation2 + $0xd8] sm:$0xff] %vm937, %v932
        %966 = vst.msk [vmem:[#allocation2 + $0xe0] sm:$0xff] %vm937, %v933
        %967 = vst.msk [vmem:[#allocation2 + $0xe8] sm:$0xff] %vm937, %v934
        %968 = vst.msk [vmem:[#allocation2 + $0xf0] sm:$0xff] %vm937, %v935
        %969 = vst.msk [vmem:[#allocation2 + $0xf8] sm:$0xff] %vm937, %v936
        %p970 = scmp.eq.s32.totalorder %s24, 1
        // Predicated region
        $region75: #{vgcl_forward.4} parent=65 // pred_check
          %p971 = pneg %p970
        $region76: #{vgcl_forward.4} parent=65 // pred_check_branch
          %973 = sbr.rel (%p971) target = $region78
        $region77: #{vgcl_forward.4} parent=65 // pred_region
          %v974 = vld [vmem:[#allocation2] sm:$0xff]
          %v975 = vld [vmem:[#allocation2 + $0x8] sm:$0xff]
          %v976 = vld [vmem:[#allocation2 + $0x10] sm:$0xff]
          %v977 = vld [vmem:[#allocation2 + $0x18] sm:$0xff]
          %v978 = vld [vmem:[#allocation2 + $0x20] sm:$0xff]
          %v979 = vld [vmem:[#allocation2 + $0x28] sm:$0xff]
          %v980 = vld [vmem:[#allocation2 + $0x30] sm:$0xff]
          %v981 = vld [vmem:[#allocation2 + $0x38] sm:$0xff]
          %v982 = vld [vmem:[#allocation2 + $0x40] sm:$0xff]
          %v983 = vld [vmem:[#allocation2 + $0x48] sm:$0xff]
          %v984 = vld [vmem:[#allocation2 + $0x50] sm:$0xff]
          %v985 = vld [vmem:[#allocation2 + $0x58] sm:$0xff]
          %v986 = vld [vmem:[#allocation2 + $0x60] sm:$0xff]
          %v987 = vld [vmem:[#allocation2 + $0x68] sm:$0xff]
          %v988 = vld [vmem:[#allocation2 + $0x70] sm:$0xff]
          %v989 = vld [vmem:[#allocation2 + $0x78] sm:$0xff]
          %v990 = vld [vmem:[#allocation2 + $0x80] sm:$0xff]
          %v991 = vld [vmem:[#allocation2 + $0x88] sm:$0xff]
          %v992 = vld [vmem:[#allocation2 + $0x90] sm:$0xff]
          %v993 = vld [vmem:[#allocation2 + $0x98] sm:$0xff]
          %v994 = vld [vmem:[#allocation2 + $0xa0] sm:$0xff]
          %v995 = vld [vmem:[#allocation2 + $0xa8] sm:$0xff]
          %v996 = vld [vmem:[#allocation2 + $0xb0] sm:$0xff]
          %v997 = vld [vmem:[#allocation2 + $0xb8] sm:$0xff]
          %v998 = vld [vmem:[#allocation2 + $0xc0] sm:$0xff]
          %v999 = vld [vmem:[#allocation2 + $0xc8] sm:$0xff]
          %v1000 = vld [vmem:[#allocation2 + $0xd0] sm:$0xff]
          %v1001 = vld [vmem:[#allocation2 + $0xd8] sm:$0xff]
          %v1002 = vld [vmem:[#allocation2 + $0xe0] sm:$0xff]
          %v1003 = vld [vmem:[#allocation2 + $0xe8] sm:$0xff]
          %v1004 = vld [vmem:[#allocation2 + $0xf0] sm:$0xff]
          %v1005 = vld [vmem:[#allocation2 + $0xf8] sm:$0xff]
          %1006 = vst.msk [vmem:[%s405] sm:$0xff] %vm937, %v974
          %1007 = vst.msk [vmem:[%s405 + $0x8] sm:$0xff] %vm937, %v975
          %1008 = vst.msk [vmem:[%s405 + $0x10] sm:$0xff] %vm937, %v976
          %1009 = vst.msk [vmem:[%s405 + $0x18] sm:$0xff] %vm937, %v977
          %1010 = vst.msk [vmem:[%s405 + $0x20] sm:$0xff] %vm937, %v978
          %1011 = vst.msk [vmem:[%s405 + $0x28] sm:$0xff] %vm937, %v979
          %1012 = vst.msk [vmem:[%s405 + $0x30] sm:$0xff] %vm937, %v980
          %1013 = vst.msk [vmem:[%s405 + $0x38] sm:$0xff] %vm937, %v981
          %1014 = vst.msk [vmem:[%s405 + $0x40] sm:$0xff] %vm937, %v982
          %1015 = vst.msk [vmem:[%s405 + $0x48] sm:$0xff] %vm937, %v983
          %1016 = vst.msk [vmem:[%s405 + $0x50] sm:$0xff] %vm937, %v984
          %1017 = vst.msk [vmem:[%s405 + $0x58] sm:$0xff] %vm937, %v985
          %1018 = vst.msk [vmem:[%s405 + $0x60] sm:$0xff] %vm937, %v986
          %1019 = vst.msk [vmem:[%s405 + $0x68] sm:$0xff] %vm937, %v987
          %1020 = vst.msk [vmem:[%s405 + $0x70] sm:$0xff] %vm937, %v988
          %1021 = vst.msk [vmem:[%s405 + $0x78] sm:$0xff] %vm937, %v989
          %1022 = vst.msk [vmem:[%s405 + $0x80] sm:$0xff] %vm937, %v990
          %1023 = vst.msk [vmem:[%s405 + $0x88] sm:$0xff] %vm937, %v991
          %1024 = vst.msk [vmem:[%s405 + $0x90] sm:$0xff] %vm937, %v992
          %1025 = vst.msk [vmem:[%s405 + $0x98] sm:$0xff] %vm937, %v993
          %1026 = vst.msk [vmem:[%s405 + $0xa0] sm:$0xff] %vm937, %v994
          %1027 = vst.msk [vmem:[%s405 + $0xa8] sm:$0xff] %vm937, %v995
          %1028 = vst.msk [vmem:[%s405 + $0xb0] sm:$0xff] %vm937, %v996
          %1029 = vst.msk [vmem:[%s405 + $0xb8] sm:$0xff] %vm937, %v997
          %1030 = vst.msk [vmem:[%s405 + $0xc0] sm:$0xff] %vm937, %v998
          %1031 = vst.msk [vmem:[%s405 + $0xc8] sm:$0xff] %vm937, %v999
          %1032 = vst.msk [vmem:[%s405 + $0xd0] sm:$0xff] %vm937, %v1000
          %1033 = vst.msk [vmem:[%s405 + $0xd8] sm:$0xff] %vm937, %v1001
          %1034 = vst.msk [vmem:[%s405 + $0xe0] sm:$0xff] %vm937, %v1002
          %1035 = vst.msk [vmem:[%s405 + $0xe8] sm:$0xff] %vm937, %v1003
          %1036 = vst.msk [vmem:[%s405 + $0xf0] sm:$0xff] %vm937, %v1004
          %1037 = vst.msk [vmem:[%s405 + $0xf8] sm:$0xff] %vm937, %v1005
          %v1038 = vld [vmem:[%s425] sm:$0xff]
          %v1039 = vld [vmem:[%s425 + $0x8] sm:$0xff]
          %v1040 = vld [vmem:[%s425 + $0x10] sm:$0xff]
          %v1041 = vld [vmem:[%s425 + $0x18] sm:$0xff]
          %v1042 = vld [vmem:[%s425 + $0x20] sm:$0xff]
          %v1043 = vld [vmem:[%s425 + $0x28] sm:$0xff]
          %v1044 = vld [vmem:[%s425 + $0x30] sm:$0xff]
          %v1045 = vld [vmem:[%s425 + $0x38] sm:$0xff]
          %v1046 = vld [vmem:[%s425 + $0x40] sm:$0xff]
          %v1047 = vld [vmem:[%s425 + $0x48] sm:$0xff]
          %v1048 = vld [vmem:[%s425 + $0x50] sm:$0xff]
          %v1049 = vld [vmem:[%s425 + $0x58] sm:$0xff]
          %v1050 = vld [vmem:[%s425 + $0x60] sm:$0xff]
          %v1051 = vld [vmem:[%s425 + $0x68] sm:$0xff]
          %v1052 = vld [vmem:[%s425 + $0x70] sm:$0xff]
          %v1053 = vld [vmem:[%s425 + $0x78] sm:$0xff]
          %v1054 = vld [vmem:[%s425 + $0x80] sm:$0xff]
          %v1055 = vld [vmem:[%s425 + $0x88] sm:$0xff]
          %v1056 = vld [vmem:[%s425 + $0x90] sm:$0xff]
          %v1057 = vld [vmem:[%s425 + $0x98] sm:$0xff]
          %v1058 = vld [vmem:[%s425 + $0xa0] sm:$0xff]
          %v1059 = vld [vmem:[%s425 + $0xa8] sm:$0xff]
          %v1060 = vld [vmem:[%s425 + $0xb0] sm:$0xff]
          %v1061 = vld [vmem:[%s425 + $0xb8] sm:$0xff]
          %v1062 = vld [vmem:[%s425 + $0xc0] sm:$0xff]
          %v1063 = vld [vmem:[%s425 + $0xc8] sm:$0xff]
          %v1064 = vld [vmem:[%s425 + $0xd0] sm:$0xff]
          %v1065 = vld [vmem:[%s425 + $0xd8] sm:$0xff]
          %v1066 = vld [vmem:[%s425 + $0xe0] sm:$0xff]
          %v1067 = vld [vmem:[%s425 + $0xe8] sm:$0xff]
          %v1068 = vld [vmem:[%s425 + $0xf0] sm:$0xff]
          %v1069 = vld [vmem:[%s425 + $0xf8] sm:$0xff]
          %v1070 = vadd.f32 %v1038, %v974
          %v1071 = vadd.f32 %v1039, %v975
          %v1072 = vadd.f32 %v1040, %v976
          %v1073 = vadd.f32 %v1041, %v977
          %v1074 = vadd.f32 %v1042, %v978
          %v1075 = vadd.f32 %v1043, %v979
          %v1076 = vadd.f32 %v1044, %v980
          %v1077 = vadd.f32 %v1045, %v981
          %v1078 = vadd.f32 %v1046, %v982
          %v1079 = vadd.f32 %v1047, %v983
          %v1080 = vadd.f32 %v1048, %v984
          %v1081 = vadd.f32 %v1049, %v985
          %v1082 = vadd.f32 %v1050, %v986
          %v1083 = vadd.f32 %v1051, %v987
          %v1084 = vadd.f32 %v1052, %v988
          %v1085 = vadd.f32 %v1053, %v989
          %v1086 = vadd.f32 %v1054, %v990
          %v1087 = vadd.f32 %v1055, %v991
          %v1088 = vadd.f32 %v1056, %v992
          %v1089 = vadd.f32 %v1057, %v993
          %v1090 = vadd.f32 %v1058, %v994
          %v1091 = vadd.f32 %v1059, %v995
          %v1092 = vadd.f32 %v1060, %v996
          %v1093 = vadd.f32 %v1061, %v997
          %v1094 = vadd.f32 %v1062, %v998
          %v1095 = vadd.f32 %v1063, %v999
          %v1096 = vadd.f32 %v1064, %v1000
          %v1097 = vadd.f32 %v1065, %v1001
          %v1098 = vadd.f32 %v1066, %v1002
          %v1099 = vadd.f32 %v1067, %v1003
          %v1100 = vadd.f32 %v1068, %v1004
          %v1101 = vadd.f32 %v1069, %v1005
          %1102 = vst.msk [vmem:[%s432] sm:$0xff] %vm937, %v1070
          %1103 = vst.msk [vmem:[%s432 + $0x8] sm:$0xff] %vm937, %v1071
          %1104 = vst.msk [vmem:[%s432 + $0x10] sm:$0xff] %vm937, %v1072
          %1105 = vst.msk [vmem:[%s432 + $0x18] sm:$0xff] %vm937, %v1073
          %1106 = vst.msk [vmem:[%s432 + $0x20] sm:$0xff] %vm937, %v1074
          %1107 = vst.msk [vmem:[%s432 + $0x28] sm:$0xff] %vm937, %v1075
          %1108 = vst.msk [vmem:[%s432 + $0x30] sm:$0xff] %vm937, %v1076
          %1109 = vst.msk [vmem:[%s432 + $0x38] sm:$0xff] %vm937, %v1077
          %1110 = vst.msk [vmem:[%s432 + $0x40] sm:$0xff] %vm937, %v1078
          %1111 = vst.msk [vmem:[%s432 + $0x48] sm:$0xff] %vm937, %v1079
          %1112 = vst.msk [vmem:[%s432 + $0x50] sm:$0xff] %vm937, %v1080
          %1113 = vst.msk [vmem:[%s432 + $0x58] sm:$0xff] %vm937, %v1081
          %1114 = vst.msk [vmem:[%s432 + $0x60] sm:$0xff] %vm937, %v1082
          %1115 = vst.msk [vmem:[%s432 + $0x68] sm:$0xff] %vm937, %v1083
          %1116 = vst.msk [vmem:[%s432 + $0x70] sm:$0xff] %vm937, %v1084
          %1117 = vst.msk [vmem:[%s432 + $0x78] sm:$0xff] %vm937, %v1085
          %1118 = vst.msk [vmem:[%s432 + $0x80] sm:$0xff] %vm937, %v1086
          %1119 = vst.msk [vmem:[%s432 + $0x88] sm:$0xff] %vm937, %v1087
          %1120 = vst.msk [vmem:[%s432 + $0x90] sm:$0xff] %vm937, %v1088
          %1121 = vst.msk [vmem:[%s432 + $0x98] sm:$0xff] %vm937, %v1089
          %1122 = vst.msk [vmem:[%s432 + $0xa0] sm:$0xff] %vm937, %v1090
          %1123 = vst.msk [vmem:[%s432 + $0xa8] sm:$0xff] %vm937, %v1091
          %1124 = vst.msk [vmem:[%s432 + $0xb0] sm:$0xff] %vm937, %v1092
          %1125 = vst.msk [vmem:[%s432 + $0xb8] sm:$0xff] %vm937, %v1093
          %1126 = vst.msk [vmem:[%s432 + $0xc0] sm:$0xff] %vm937, %v1094
          %1127 = vst.msk [vmem:[%s432 + $0xc8] sm:$0xff] %vm937, %v1095
          %1128 = vst.msk [vmem:[%s432 + $0xd0] sm:$0xff] %vm937, %v1096
          %1129 = vst.msk [vmem:[%s432 + $0xd8] sm:$0xff] %vm937, %v1097
          %1130 = vst.msk [vmem:[%s432 + $0xe0] sm:$0xff] %vm937, %v1098
          %1131 = vst.msk [vmem:[%s432 + $0xe8] sm:$0xff] %vm937, %v1099
          %1132 = vst.msk [vmem:[%s432 + $0xf0] sm:$0xff] %vm937, %v1100
          %1133 = vst.msk [vmem:[%s432 + $0xf8] sm:$0xff] %vm937, %v1101
        $region78: #{vgcl_forward.4} parent=65 // pred_fallthru
          _
        %s1134 = sand.u32 %s119, 1
        %s1135 = scalar_lea.sflag [#allocation5], %s1134
        %s1136 = sand.u32 %s119, 1
        %s1137 = smul.addr %s1136, 256
        %s1138 = scalar_lea.vmem [#allocation4], %s1137
        %s1139 = smul.u32 32, %s23
        %p1140 = scmp.lt.s32.totalorder %s1139, 63
        %s1141 = scalar_select %p1140, %s1139, 63
        %s1142 = smul.addr %s1141, 8
        %s1143 = scalar_lea.vmem %s4, %s1142
        // Predicated region
        $region79: #{vgcl_forward.4} parent=65 // pred_check
          %p1144 = pneg %p129
        $region80: #{vgcl_forward.4} parent=65 // pred_check_branch
          %1146 = sbr.rel (%p1144) target = $region82
        $region81: #{vgcl_forward.4} parent=65 // pred_region
          %s1147 = smul.u32 32, %s23
          %s1149 = ssub.s32 4096, 4096
          %1150 = vsyncadd %s1135, %s1149
          %s1151 = smul.addr %s1147, 128
          %s1152 = scalar_lea.hbm %s3, %s1151
          %s1153 = sshll.u32 %s1138, 4
          %s1154 = int_to_ptr.vmem [resolvable:$true] %s1153
          %1159 = dma.vmem_to_hbm [thread:$0]  %s1154, 4096, %s1152, %s1135, 128, 128, 8
        $region82: #{vgcl_forward.4} parent=65 // pred_fallthru
          _
        // Predicated region
        $region83: #{vgcl_forward.4} parent=65 // pred_check
          %p1160 = pneg %p155
        $region84: #{vgcl_forward.4} parent=65 // pred_check_branch
          %1162 = sbr.rel (%p1160) target = $region86
        $region85: #{vgcl_forward.4} parent=65 // pred_region
          %s1163 = smul.u32 32, %s23
        $region86: #{vgcl_forward.4} parent=65 // pred_fallthru
          _
      $region66: #{vgcl_forward.4} parent=5 // pred_fallthru
        _
      %p1164 = scmp.le.s32.totalorder 2, %s14
      // Predicated region
      $region87: #{vgcl_forward.4} parent=5 // pred_check
        %p1165 = pneg %p1164
      $region88: #{vgcl_forward.4} parent=5 // pred_check_branch
        %1167 = sbr.rel (%p1165) target = $region90
      $region89: #{vgcl_forward.4} parent=5 // pred_region
        %s1168 = ssub.s32 %s14, 2
        // Predicated region
        $region91: #{vgcl_forward.4} parent=89 // pred_check
          %p1169 = pneg %p135
        $region92: #{vgcl_forward.4} parent=89 // pred_check_branch
          %1171 = sbr.rel (%p1169) target = $region94
        $region93: #{vgcl_forward.4} parent=89 // pred_region
          %s1172 = sand.u32 %s120, 1
          %s1173 = scalar_lea.sflag [#allocation5], %s1172
          %s1174 = sand.u32 %s120, 1
          %s1175 = smul.addr %s1174, 256
          %s1176 = scalar_lea.vmem [#allocation4], %s1175
          %1177 = dma.done %s1173, 4096
        $region94: #{vgcl_forward.4} parent=89 // pred_fallthru
          _
        // Predicated region
        $region95: #{vgcl_forward.4} parent=89 // pred_check
          %p1178 = pneg %p161
        $region96: #{vgcl_forward.4} parent=89 // pred_check_branch
          %1180 = sbr.rel (%p1178) target = $region98
        $region97: #{vgcl_forward.4} parent=89 // pred_region
          %s1181 = smul.u32 32, %s25
          %p1182 = scmp.lt.s32.totalorder %s1181, 63
          %s1183 = scalar_select %p1182, %s1181, 63
          %s1184 = smul.addr %s1183, 8
          %s1185 = scalar_lea.vmem %s4, %s1184
        $region98: #{vgcl_forward.4} parent=89 // pred_fallthru
          _
      $region90: #{vgcl_forward.4} parent=5 // pred_fallthru
        _
    $region6: #{vgcl_forward.4} parent=1 // loop_footer
      %s18 = sadd.s32 1, %s14
    $region7: #{vgcl_forward.4} parent=1 // loop_footer_branch
      %13 = sbr.rel target = $region3
    $region8: #{vgcl_forward.4} parent=1 // loop_exit
      _
    %1186 = vsyncpa [#allocation5], 1
    %s1187 = scalar_lea.sflag [#allocation5], 1
    %1188 = vsyncpa %s1187, 1

// kernel: vgcl_forward.5
$region0: #{vgcl_forward.5}
  #allocation0 [shape = 'u32[]', space=smem, size = 0x4, offset = 0x4, fixed_abs, tag = 'smem constant byte address 0x4 - core index']
  #allocation1 [shape = 'u32[144,128]{1,0:T(1,128)}', space=vmem, size = 0x12000, scoped, tag = 'internal scratch']
  %s0 = inlined_call_operand.vmem [shape: f32[512,32], index: 0, kind: input, shape index: {}]
  %s1 = inlined_call_operand.vmem [shape: f32[32,32], index: 1, kind: input, shape index: {}]
  %s2 = inlined_call_operand.vmem [shape: f32[1,32], index: 2, kind: input, shape index: {}]
  %s3 = inlined_call_operand.vmem [shape: f32[512,32], index: 3, kind: input, shape index: {}]
  %s4 = inlined_call_operand.vmem [shape: f32[512,32], index: 4, kind: input, shape index: {}]
  %s5 = inlined_call_operand.vmem [shape: f32[512,128], index: 5, kind: output, shape index: {}]
  %s6 = sld [smem:[#allocation0]]
  $region53: #{vgcl_forward.5} parent=0
    _
  %s8 = ssub.s32 1, %s6
  %s9 = scalar_select 0, %s8, %s6
  loop: start=0, step=1, limit=4
  $region2: #{vgcl_forward.5} parent=0 // loop_pre_header
    _
  $region3: #{vgcl_forward.5} parent=0 // loop_header
    %s11 = sphi 0, %s15
    %p12 = scmp.ge.s32.totalorder %s11, 4
    %s21 = sphi 0, %s23
    %s24 = sphi 0, %s21
    %s25 = sphi 0, %s24
    %s41 = sphi 0, %s25
    %s45 = sphi 0, %s45
    %s47 = sphi 0, %s45
    %s48 = sphi 0, %s47
    %s62 = sphi 0, %s48
    %s66 = sphi 0, %s66
    %s68 = sphi 0, %s66
    %s69 = sphi 0, %s68
    %s83 = sphi 0, %s69
    %s89 = sphi 0, %s91
    %s92 = sphi 0, %s89
    %s93 = sphi 0, %s92
    %s109 = sphi 0, %s93
    %s115 = sphi 0, %s117
    %s118 = sphi 0, %s115
    %s119 = sphi 0, %s118
    %s135 = sphi 0, %s119
    %s141 = sphi 0, %s143
    %s144 = sphi 0, %s141
    %s145 = sphi 0, %s144
    %s161 = sphi 0, %s145
  $region4: #{vgcl_forward.5} parent=0 // loop_header_branch
    %14 = sbr.rel (%p12) target = $region8
  $region5: #{vgcl_forward.5} parent=0 // loop_body
    %s16 = ssub.s32 %s11, 1
    %s17 = ssub.s32 %s11, 2
    %s18 = sadd.s32 %s11, 1
    %s19 = ssub.s32 %s11, %s18
    %p20 = scmp.eq.s32.totalorder %s19, 0
    %s22 = sadd.s32 %s21, 1
    %s23 = scalar_select %p20, %s21, %s22
    %p26 = pneg %p20
    %p27 = scmp.eq.s32.totalorder %s11, 1
    %p28 = por %p26, %p27
    %p29 = scmp.ne.s32.totalorder %s21, %s24
    %p30 = scmp.eq.s32.totalorder %s11, 0
    %p31 = por %p29, %p30
    %p32 = scmp.ne.s32.totalorder %s21, %s24
    %p33 = scmp.eq.s32.totalorder %s16, 1
    %p34 = por %p32, %p33
    %p35 = scmp.ne.s32.totalorder %s24, %s25
    %p36 = scmp.eq.s32.totalorder %s16, 0
    %p37 = por %p35, %p36
    %p38 = scmp.ne.s32.totalorder %s24, %s25
    %p39 = scmp.eq.s32.totalorder %s17, 1
    %p40 = por %p38, %p39
    %p42 = scmp.ne.s32.totalorder %s25, %s41
    %p43 = scmp.eq.s32.totalorder %s17, 0
    %p44 = por %p42, %p43
    %s46 = sadd.s32 %s45, 1
    %p49 = scmp.eq.s32.totalorder %s11, 1
    %p50 = scmp.ne.s32.totalorder %s45, %s47
    %p51 = scmp.eq.s32.totalorder %s11, 0
    %p52 = por %p50, %p51
    %p53 = scmp.ne.s32.totalorder %s45, %s47
    %p54 = scmp.eq.s32.totalorder %s16, 1
    %p55 = por %p53, %p54
    %p56 = scmp.ne.s32.totalorder %s47, %s48
    %p57 = scmp.eq.s32.totalorder %s16, 0
    %p58 = por %p56, %p57
    %p59 = scmp.ne.s32.totalorder %s47, %s48
    %p60 = scmp.eq.s32.totalorder %s17, 1
    %p61 = por %p59, %p60
    %p63 = scmp.ne.s32.totalorder %s48, %s62
    %p64 = scmp.eq.s32.totalorder %s17, 0
    %p65 = por %p63, %p64
    %s67 = sadd.s32 %s66, 1
    %p70 = scmp.eq.s32.totalorder %s11, 1
    %p71 = scmp.ne.s32.totalorder %s66, %s68
    %p72 = scmp.eq.s32.totalorder %s11, 0
    %p73 = por %p71, %p72
    %p74 = scmp.ne.s32.totalorder %s66, %s68
    %p75 = scmp.eq.s32.totalorder %s16, 1
    %p76 = por %p74, %p75
    %p77 = scmp.ne.s32.totalorder %s68, %s69
    %p78 = scmp.eq.s32.totalorder %s16, 0
    %p79 = por %p77, %p78
    %p80 = scmp.ne.s32.totalorder %s68, %s69
    %p81 = scmp.eq.s32.totalorder %s17, 1
    %p82 = por %p80, %p81
    %p84 = scmp.ne.s32.totalorder %s69, %s83
    %p85 = scmp.eq.s32.totalorder %s17, 0
    %p86 = por %p84, %p85
    %s87 = ssub.s32 %s11, %s18
    %p88 = scmp.eq.s32.totalorder %s87, 0
    %s90 = sadd.s32 %s89, 1
    %s91 = scalar_select %p88, %s89, %s90
    %p94 = pneg %p88
    %p95 = scmp.eq.s32.totalorder %s11, 1
    %p96 = por %p94, %p95
    %p97 = scmp.ne.s32.totalorder %s89, %s92
    %p98 = scmp.eq.s32.totalorder %s11, 0
    %p99 = por %p97, %p98
    %p100 = scmp.ne.s32.totalorder %s89, %s92
    %p101 = scmp.eq.s32.totalorder %s16, 1
    %p102 = por %p100, %p101
    %p103 = scmp.ne.s32.totalorder %s92, %s93
    %p104 = scmp.eq.s32.totalorder %s16, 0
    %p105 = por %p103, %p104
    %p106 = scmp.ne.s32.totalorder %s92, %s93
    %p107 = scmp.eq.s32.totalorder %s17, 1
    %p108 = por %p106, %p107
    %p110 = scmp.ne.s32.totalorder %s93, %s109
    %p111 = scmp.eq.s32.totalorder %s17, 0
    %p112 = por %p110, %p111
    %s113 = ssub.s32 %s11, %s18
    %p114 = scmp.eq.s32.totalorder %s113, 0
    %s116 = sadd.s32 %s115, 1
    %s117 = scalar_select %p114, %s115, %s116
    %p120 = pneg %p114
    %p121 = scmp.eq.s32.totalorder %s11, 1
    %p122 = por %p120, %p121
    %p123 = scmp.ne.s32.totalorder %s115, %s118
    %p124 = scmp.eq.s32.totalorder %s11, 0
    %p125 = por %p123, %p124
    %p126 = scmp.ne.s32.totalorder %s115, %s118
    %p127 = scmp.eq.s32.totalorder %s16, 1
    %p128 = por %p126, %p127
    %p129 = scmp.ne.s32.totalorder %s118, %s119
    %p130 = scmp.eq.s32.totalorder %s16, 0
    %p131 = por %p129, %p130
    %p132 = scmp.ne.s32.totalorder %s118, %s119
    %p133 = scmp.eq.s32.totalorder %s17, 1
    %p134 = por %p132, %p133
    %p136 = scmp.ne.s32.totalorder %s119, %s135
    %p137 = scmp.eq.s32.totalorder %s17, 0
    %p138 = por %p136, %p137
    %s139 = ssub.s32 %s11, %s18
    %p140 = scmp.eq.s32.totalorder %s139, 0
    %s142 = sadd.s32 %s141, 1
    %s143 = scalar_select %p140, %s141, %s142
    %p146 = pneg %p140
    %p147 = scmp.eq.s32.totalorder %s11, 1
    %p148 = por %p146, %p147
    %p149 = scmp.ne.s32.totalorder %s141, %s144
    %p150 = scmp.eq.s32.totalorder %s11, 0
    %p151 = por %p149, %p150
    %p152 = scmp.ne.s32.totalorder %s141, %s144
    %p153 = scmp.eq.s32.totalorder %s16, 1
    %p154 = por %p152, %p153
    %p155 = scmp.ne.s32.totalorder %s144, %s145
    %p156 = scmp.eq.s32.totalorder %s16, 0
    %p157 = por %p155, %p156
    %p158 = scmp.ne.s32.totalorder %s144, %s145
    %p159 = scmp.eq.s32.totalorder %s17, 1
    %p160 = por %p158, %p159
    %p162 = scmp.ne.s32.totalorder %s145, %s161
    %p163 = scmp.eq.s32.totalorder %s17, 0
    %p164 = por %p162, %p163
    %p165 = scmp.le.s32.totalorder 1, %s11
    %p166 = scmp.lt.s32.totalorder %s11, 3
    %p167 = pnand %p165, %p166
    %p168 = pneg %p167
    // Predicated region
    $region9: #{vgcl_forward.5} parent=5 // pred_check
      _
    $region10: #{vgcl_forward.5} parent=5 // pred_check_branch
      %170 = sbr.rel (%p167) target = $region12
    $region11: #{vgcl_forward.5} parent=5 // pred_region
      %s171 = ssub.s32 %s11, 1
      // Predicated region
      $region13: #{vgcl_forward.5} parent=11 // pred_check
        %p172 = pneg %p58
      $region14: #{vgcl_forward.5} parent=11 // pred_check_branch
        %174 = sbr.rel (%p172) target = $region16
      $region15: #{vgcl_forward.5} parent=11 // pred_region
        _
      $region16: #{vgcl_forward.5} parent=11 // pred_fallthru
        _
      // Predicated region
      $region17: #{vgcl_forward.5} parent=11 // pred_check
        %p175 = pneg %p79
      $region18: #{vgcl_forward.5} parent=11 // pred_check_branch
        %177 = sbr.rel (%p175) target = $region20
      $region19: #{vgcl_forward.5} parent=11 // pred_region
        _
      $region20: #{vgcl_forward.5} parent=11 // pred_fallthru
        _
    $region12: #{vgcl_forward.5} parent=5 // pred_fallthru
      _
    %p178 = scmp.lt.s32.totalorder %s11, 2
    // Predicated region
    $region21: #{vgcl_forward.5} parent=5 // pred_check
      %p179 = pneg %p178
    $region22: #{vgcl_forward.5} parent=5 // pred_check_branch
      %181 = sbr.rel (%p179) target = $region24
    $region23: #{vgcl_forward.5} parent=5 // pred_region
      // Predicated region
      $region25: #{vgcl_forward.5} parent=23 // pred_check
        %p182 = pneg %p31
      $region26: #{vgcl_forward.5} parent=23 // pred_check_branch
        %184 = sbr.rel (%p182) target = $region28
      $region27: #{vgcl_forward.5} parent=23 // pred_region
        %s185 = smul.u32 32, %s11
        %p186 = scmp.lt.s32.totalorder %s185, 63
        %s187 = scalar_select %p186, %s185, 63
        %s188 = smul.addr %s187, 8
        %s189 = scalar_lea.vmem %s0, %s188
        %s190 = smul.u32 32, %s11
      $region28: #{vgcl_forward.5} parent=23 // pred_fallthru
        _
      // Predicated region
      $region29: #{vgcl_forward.5} parent=23 // pred_check
        %p191 = pneg %p99
      $region30: #{vgcl_forward.5} parent=23 // pred_check_branch
        %193 = sbr.rel (%p191) target = $region32
      $region31: #{vgcl_forward.5} parent=23 // pred_region
        %s194 = smul.u32 32, %s11
        %p195 = scmp.lt.s32.totalorder %s194, 63
        %s196 = scalar_select %p195, %s194, 63
        %s197 = smul.addr %s196, 8
        %s198 = scalar_lea.vmem %s3, %s197
        %s199 = smul.u32 32, %s11
      $region32: #{vgcl_forward.5} parent=23 // pred_fallthru
        _
      // Predicated region
      $region33: #{vgcl_forward.5} parent=23 // pred_check
        %p200 = pneg %p125
      $region34: #{vgcl_forward.5} parent=23 // pred_check_branch
        %202 = sbr.rel (%p200) target = $region36
      $region35: #{vgcl_forward.5} parent=23 // pred_region
        %s203 = smul.u32 32, %s11
        %p204 = scmp.lt.s32.totalorder %s203, 63
        %s205 = scalar_select %p204, %s203, 63
        %s206 = smul.addr %s205, 8
        %s207 = scalar_lea.vmem %s4, %s206
        %s208 = smul.u32 32, %s11
      $region36: #{vgcl_forward.5} parent=23 // pred_fallthru
        _
    $region24: #{vgcl_forward.5} parent=5 // pred_fallthru
      _
    %p209 = scmp.le.s32.totalorder 1, %s11
    %p210 = scmp.lt.s32.totalorder %s11, 3
    %p211 = pnand %p209, %p210
    %p212 = pneg %p211
    // Predicated region
    $region37: #{vgcl_forward.5} parent=5 // pred_check
      _
    $region38: #{vgcl_forward.5} parent=5 // pred_check_branch
      %214 = sbr.rel (%p211) target = $region40
    $region39: #{vgcl_forward.5} parent=5 // pred_region
      %s215 = ssub.s32 %s11, 1
      %s216 = smul.u32 32, %s16
      %p217 = scmp.lt.s32.totalorder %s216, 63
      %s218 = scalar_select %p217, %s216, 63
      %s219 = smul.addr %s218, 8
      %s220 = scalar_lea.vmem %s0, %s219
      %p221 = pneg %p37
      %p222 = pneg %p34
      %p223 = pneg %p58
      %p224 = pneg %p55
      %p225 = pneg %p79
      %p226 = pneg %p76
      %s227 = smul.u32 32, %s16
      %p228 = scmp.lt.s32.totalorder %s227, 63
      %s229 = scalar_select %p228, %s227, 63
      %s230 = smul.addr %s229, 8
      %s231 = scalar_lea.vmem %s3, %s230
      %p232 = pneg %p105
      %p233 = pneg %p102
      %s234 = smul.u32 32, %s16
      %p235 = scmp.lt.s32.totalorder %s234, 63
      %s236 = scalar_select %p235, %s234, 63
      %s237 = smul.addr %s236, 8
      %s238 = scalar_lea.vmem %s4, %s237
      %p239 = pneg %p131
      %p240 = pneg %p128
      %p241 = pneg %p157
      %p242 = pneg %p154
      %s243 = smul.u32 32, %s16
      %p244 = scmp.lt.s32.totalorder %s243, 63
      %s245 = scalar_select %p244, %s243, 63
      %s246 = smul.addr %s245, 8
      %s247 = scalar_lea.vmem %s5, %s246
      %s248 = smul.u32 32, %s16
      %p249 = scmp.lt.s32.totalorder %s248, 63
      %s250 = scalar_select %p249, %s248, 63
      %s251 = smul.addr %s250, 8
      %s252 = scalar_lea.vmem %s0, %s251
      %s253 = smul.u32 32, %s16
      %s254 = smul.u32 32, %s16
      %p255 = scmp.lt.s32.totalorder %s254, 63
      %s256 = scalar_select %p255, %s254, 63
      %s257 = smul.addr %s256, 8
      %s258 = scalar_lea.vmem %s3, %s257
      %s259 = smul.u32 32, %s16
      %s260 = smul.u32 32, %s16
      %p261 = scmp.lt.s32.totalorder %s260, 63
      %s262 = scalar_select %p261, %s260, 63
      %s263 = smul.addr %s262, 8
      %s264 = scalar_lea.vmem %s4, %s263
      %s265 = smul.u32 32, %s16
      %s266 = smul.u32 32, %s16
      %p267 = scmp.lt.s32.totalorder %s266, 63
      %s268 = scalar_select %p267, %s266, 63
      %s269 = smul.addr %s268, 8
      %s270 = scalar_lea.vmem %s5, %s269
      %s271 = smul.u32 32, %s16
      %v273 = vld [vmem:[%s252] sm:$0xff]
      %v274 = vld [vmem:[%s252 + $0x8] sm:$0xff]
      %v275 = vld [vmem:[%s252 + $0x10] sm:$0xff]
      %v276 = vld [vmem:[%s252 + $0x18] sm:$0xff]
      %v277 = vld [vmem:[%s252 + $0x20] sm:$0xff]
      %v278 = vld [vmem:[%s252 + $0x28] sm:$0xff]
      %v279 = vld [vmem:[%s252 + $0x30] sm:$0xff]
      %v280 = vld [vmem:[%s252 + $0x38] sm:$0xff]
      %v281 = vld [vmem:[%s252 + $0x40] sm:$0xff]
      %v282 = vld [vmem:[%s252 + $0x48] sm:$0xff]
      %v283 = vld [vmem:[%s252 + $0x50] sm:$0xff]
      %v284 = vld [vmem:[%s252 + $0x58] sm:$0xff]
      %v285 = vld [vmem:[%s252 + $0x60] sm:$0xff]
      %v286 = vld [vmem:[%s252 + $0x68] sm:$0xff]
      %v287 = vld [vmem:[%s252 + $0x70] sm:$0xff]
      %v288 = vld [vmem:[%s252 + $0x78] sm:$0xff]
      %v289 = vld [vmem:[%s252 + $0x80] sm:$0xff]
      %v290 = vld [vmem:[%s252 + $0x88] sm:$0xff]
      %v291 = vld [vmem:[%s252 + $0x90] sm:$0xff]
      %v292 = vld [vmem:[%s252 + $0x98] sm:$0xff]
      %v293 = vld [vmem:[%s252 + $0xa0] sm:$0xff]
      %v294 = vld [vmem:[%s252 + $0xa8] sm:$0xff]
      %v295 = vld [vmem:[%s252 + $0xb0] sm:$0xff]
      %v296 = vld [vmem:[%s252 + $0xb8] sm:$0xff]
      %v297 = vld [vmem:[%s252 + $0xc0] sm:$0xff]
      %v298 = vld [vmem:[%s252 + $0xc8] sm:$0xff]
      %v299 = vld [vmem:[%s252 + $0xd0] sm:$0xff]
      %v300 = vld [vmem:[%s252 + $0xd8] sm:$0xff]
      %v301 = vld [vmem:[%s252 + $0xe0] sm:$0xff]
      %v302 = vld [vmem:[%s252 + $0xe8] sm:$0xff]
      %v303 = vld [vmem:[%s252 + $0xf0] sm:$0xff]
      %v304 = vld [vmem:[%s252 + $0xf8] sm:$0xff]
      %v305 = vmul.f32 %v273, 0.5
      %v306 = vmul.f32 %v274, 0.5
      %v307 = vmul.f32 %v275, 0.5
      %v308 = vmul.f32 %v276, 0.5
      %v309 = vmul.f32 %v277, 0.5
      %v310 = vmul.f32 %v278, 0.5
      %v311 = vmul.f32 %v279, 0.5
      %v312 = vmul.f32 %v280, 0.5
      %v313 = vmul.f32 %v281, 0.5
      %v314 = vmul.f32 %v282, 0.5
      %v315 = vmul.f32 %v283, 0.5
      %v316 = vmul.f32 %v284, 0.5
      %v317 = vmul.f32 %v285, 0.5
      %v318 = vmul.f32 %v286, 0.5
      %v319 = vmul.f32 %v287, 0.5
      %v320 = vmul.f32 %v288, 0.5
      %v321 = vmul.f32 %v289, 0.5
      %v322 = vmul.f32 %v290, 0.5
      %v323 = vmul.f32 %v291, 0.5
      %v324 = vmul.f32 %v292, 0.5
      %v325 = vmul.f32 %v293, 0.5
      %v326 = vmul.f32 %v294, 0.5
      %v327 = vmul.f32 %v295, 0.5
      %v328 = vmul.f32 %v296, 0.5
      %v329 = vmul.f32 %v297, 0.5
      %v330 = vmul.f32 %v298, 0.5
      %v331 = vmul.f32 %v299, 0.5
      %v332 = vmul.f32 %v300, 0.5
      %v333 = vmul.f32 %v301, 0.5
      %v334 = vmul.f32 %v302, 0.5
      %v335 = vmul.f32 %v303, 0.5
      %v336 = vmul.f32 %v304, 0.5
      %v337 = vpack.c.bf16 %v306, %v305
      %v338 = vpack.c.bf16 %v308, %v307
      %v339 = vpack.c.bf16 %v310, %v309
      %v340 = vpack.c.bf16 %v312, %v311
      %v341 = vpack.c.bf16 %v314, %v313
      %v342 = vpack.c.bf16 %v316, %v315
      %v343 = vpack.c.bf16 %v318, %v317
      %v344 = vpack.c.bf16 %v320, %v319
      %v345 = vpack.c.bf16 %v322, %v321
      %v346 = vpack.c.bf16 %v324, %v323
      %v347 = vpack.c.bf16 %v326, %v325
      %v348 = vpack.c.bf16 %v328, %v327
      %v349 = vpack.c.bf16 %v330, %v329
      %v350 = vpack.c.bf16 %v332, %v331
      %v351 = vpack.c.bf16 %v334, %v333
      %v352 = vpack.c.bf16 %v336, %v335
      %v353 = vld [vmem:[%s1] sm:$0xff]
      %v354 = vld [vmem:[%s1 + $0x8] sm:$0xff]
      %v355 = vld [vmem:[%s1 + $0x10] sm:$0xff]
      %v356 = vld [vmem:[%s1 + $0x18] sm:$0xff]
      %v357 = vpack.c.bf16 %v354, %v353
      %v358 = vpack.c.bf16 %v356, %v355
      %v359 = vld [vmem:[%s2] sm:$0x1]
      %v361 = vlaneseq
      %v362 = vshrl.u32 %v361, 7
      %v363 = vsub.s32 0, %v362
      %v364 = vrot.slane %v359, %v363
      %vm366 = vcmask 261120
      %v368 = vsel %vm366, %v337, 0
      %v371 = vsel %vm366, %v338, 0
      %v374 = vsel %vm366, %v339, 0
      %v377 = vsel %vm366, %v340, 0
      %v380 = vsel %vm366, %v341, 0
      %v383 = vsel %vm366, %v342, 0
      %v386 = vsel %vm366, %v343, 0
      %v389 = vsel %vm366, %v344, 0
      %v392 = vsel %vm366, %v345, 0
      %v395 = vsel %vm366, %v346, 0
      %v398 = vsel %vm366, %v347, 0
      %v401 = vsel %vm366, %v348, 0
      %v404 = vsel %vm366, %v349, 0
      %v407 = vsel %vm366, %v350, 0
      %v410 = vsel %vm366, %v351, 0
      %v413 = vsel %vm366, %v352, 0
      %415 = vmatprep.subr.bf16.mxu0 0
      %416 = vmatpush1.bf16.msra.mxu0 0
      %417 = vmatprep.subr.bf16.mxu0 0
      %418 = vmatpush1.bf16.msra.mxu0 0
      %419 = vmatprep.subr.bf16.mxu0 0
      %420 = vmatpush1.bf16.msra.mxu0 0
      %421 = vmatprep.subr.bf16.mxu0 0
      %422 = vmatpush1.bf16.msra.mxu0 0
      %423 = vmatprep.subr.bf16.mxu0 0
      %424 = vmatpush1.bf16.msra.mxu0 0
      %425 = vmatprep.subr.bf16.mxu0 0
      %426 = vmatpush1.bf16.msra.mxu0 0
      %427 = vmatprep.subr.bf16.mxu0 0
      %428 = vmatpush1.bf16.msra.mxu0 %v358
      %429 = vmatprep.subr.bf16.mxu0 0
      %430 = vmatpush1.bf16.msra.mxu0 %v357
      %431 = vmatprep.subr.bf16.mxu0 0
      %432 = vmatpush2.bf16.msra.mxu0 0
      %433 = vmatprep.subr.bf16.mxu0 0
      %434 = vmatpush2.bf16.msra.mxu0 0
      %435 = vmatprep.subr.bf16.mxu0 0
      %436 = vmatpush2.bf16.msra.mxu0 0
      %437 = vmatprep.subr.bf16.mxu0 0
      %438 = vmatpush2.bf16.msra.mxu0 0
      %439 = vmatprep.subr.bf16.mxu0 0
      %440 = vmatpush2.bf16.msra.mxu0 0
      %441 = vmatprep.subr.bf16.mxu0 0
      %442 = vmatpush2.bf16.msra.mxu0 0
      %443 = vmatprep.subr.bf16.mxu0 0
      %444 = vmatpush2.bf16.msra.mxu0 0
      %445 = vmatprep.subr.bf16.mxu0 0
      %446 = vmatpush2.bf16.msra.mxu0 0
      %447 = vmatprep.mubr.bf16.mxu0 0
      %448 = vmatmul.mubr.bf16.gmra.mxu0 %v368
      %v449 = vpop.f32.mrf.mxu0
      %v450 = vadd.f32 %v364, %v449
      %v451 = vpop.f32.mrf.mxu0
      %v452 = vpop.f32.mrf.mxu0
      %v453 = vadd.f32 %v364, %v452
      %v454 = vpop.f32.mrf.mxu0
      %455 = vmatprep.mubr.bf16.mxu0 0
      %456 = vmatmul.mubr.bf16.gmra.mxu0 %v371
      %v457 = vpop.f32.mrf.mxu0
      %v458 = vadd.f32 %v364, %v457
      %v459 = vpop.f32.mrf.mxu0
      %v460 = vpop.f32.mrf.mxu0
      %v461 = vadd.f32 %v364, %v460
      %v462 = vpop.f32.mrf.mxu0
      %463 = vmatprep.mubr.bf16.mxu0 0
      %464 = vmatmul.mubr.bf16.gmra.mxu0 %v374
      %v465 = vpop.f32.mrf.mxu0
      %v466 = vadd.f32 %v364, %v465
      %v467 = vpop.f32.mrf.mxu0
      %v468 = vpop.f32.mrf.mxu0
      %v469 = vadd.f32 %v364, %v468
      %v470 = vpop.f32.mrf.mxu0
      %471 = vmatprep.mubr.bf16.mxu0 0
      %472 = vmatmul.mubr.bf16.gmra.mxu0 %v377
      %v473 = vpop.f32.mrf.mxu0
      %v474 = vadd.f32 %v364, %v473
      %v475 = vpop.f32.mrf.mxu0
      %v476 = vpop.f32.mrf.mxu0
      %v477 = vadd.f32 %v364, %v476
      %v478 = vpop.f32.mrf.mxu0
      %479 = vmatprep.mubr.bf16.mxu0 0
      %480 = vmatmul.mubr.bf16.gmra.mxu0 %v380
      %v481 = vpop.f32.mrf.mxu0
      %v482 = vadd.f32 %v364, %v481
      %v483 = vpop.f32.mrf.mxu0
      %v484 = vpop.f32.mrf.mxu0
      %v485 = vadd.f32 %v364, %v484
      %v486 = vpop.f32.mrf.mxu0
      %487 = vmatprep.mubr.bf16.mxu0 0
      %488 = vmatmul.mubr.bf16.gmra.mxu0 %v383
      %v489 = vpop.f32.mrf.mxu0
      %v490 = vadd.f32 %v364, %v489
      %v491 = vpop.f32.mrf.mxu0
      %v492 = vpop.f32.mrf.mxu0
      %v493 = vadd.f32 %v364, %v492
      %v494 = vpop.f32.mrf.mxu0
      %495 = vmatprep.mubr.bf16.mxu0 0
      %496 = vmatmul.mubr.bf16.gmra.mxu0 %v386
      %v497 = vpop.f32.mrf.mxu0
      %v498 = vadd.f32 %v364, %v497
      %v499 = vpop.f32.mrf.mxu0
      %v500 = vpop.f32.mrf.mxu0
      %v501 = vadd.f32 %v364, %v500
      %v502 = vpop.f32.mrf.mxu0
      %503 = vmatprep.mubr.bf16.mxu0 0
      %504 = vmatmul.mubr.bf16.gmra.mxu0 %v389
      %v505 = vpop.f32.mrf.mxu0
      %v506 = vadd.f32 %v364, %v505
      %v507 = vpop.f32.mrf.mxu0
      %v508 = vpop.f32.mrf.mxu0
      %v509 = vadd.f32 %v364, %v508
      %v510 = vpop.f32.mrf.mxu0
      %511 = vmatprep.mubr.bf16.mxu0 0
      %512 = vmatmul.mubr.bf16.gmra.mxu0 %v392
      %v513 = vpop.f32.mrf.mxu0
      %v514 = vadd.f32 %v364, %v513
      %v515 = vpop.f32.mrf.mxu0
      %v516 = vpop.f32.mrf.mxu0
      %v517 = vadd.f32 %v364, %v516
      %v518 = vpop.f32.mrf.mxu0
      %519 = vmatprep.mubr.bf16.mxu0 0
      %520 = vmatmul.mubr.bf16.gmra.mxu0 %v395
      %v521 = vpop.f32.mrf.mxu0
      %v522 = vadd.f32 %v364, %v521
      %v523 = vpop.f32.mrf.mxu0
      %v524 = vpop.f32.mrf.mxu0
      %v525 = vadd.f32 %v364, %v524
      %v526 = vpop.f32.mrf.mxu0
      %527 = vmatprep.mubr.bf16.mxu0 0
      %528 = vmatmul.mubr.bf16.gmra.mxu0 %v398
      %v529 = vpop.f32.mrf.mxu0
      %v530 = vadd.f32 %v364, %v529
      %v531 = vpop.f32.mrf.mxu0
      %v532 = vpop.f32.mrf.mxu0
      %v533 = vadd.f32 %v364, %v532
      %v534 = vpop.f32.mrf.mxu0
      %535 = vmatprep.mubr.bf16.mxu0 0
      %536 = vmatmul.mubr.bf16.gmra.mxu0 %v401
      %v537 = vpop.f32.mrf.mxu0
      %v538 = vadd.f32 %v364, %v537
      %v539 = vpop.f32.mrf.mxu0
      %v540 = vpop.f32.mrf.mxu0
      %v541 = vadd.f32 %v364, %v540
      %v542 = vpop.f32.mrf.mxu0
      %543 = vmatprep.mubr.bf16.mxu0 0
      %544 = vmatmul.mubr.bf16.gmra.mxu0 %v404
      %v545 = vpop.f32.mrf.mxu0
      %v546 = vadd.f32 %v364, %v545
      %v547 = vpop.f32.mrf.mxu0
      %v548 = vpop.f32.mrf.mxu0
      %v549 = vadd.f32 %v364, %v548
      %v550 = vpop.f32.mrf.mxu0
      %551 = vmatprep.mubr.bf16.mxu0 0
      %552 = vmatmul.mubr.bf16.gmra.mxu0 %v407
      %v553 = vpop.f32.mrf.mxu0
      %v554 = vadd.f32 %v364, %v553
      %v555 = vpop.f32.mrf.mxu0
      %v556 = vpop.f32.mrf.mxu0
      %v557 = vadd.f32 %v364, %v556
      %v558 = vpop.f32.mrf.mxu0
      %559 = vmatprep.mubr.bf16.mxu0 0
      %560 = vmatmul.mubr.bf16.gmra.mxu0 %v410
      %v561 = vpop.f32.mrf.mxu0
      %v562 = vadd.f32 %v364, %v561
      %v563 = vpop.f32.mrf.mxu0
      %v564 = vpop.f32.mrf.mxu0
      %v565 = vadd.f32 %v364, %v564
      %v566 = vpop.f32.mrf.mxu0
      %567 = vmatprep.mubr.bf16.mxu0 0
      %568 = vmatmul.mubr.bf16.gmra.mxu0 %v413
      %v569 = vpop.f32.mrf.mxu0
      %v570 = vadd.f32 %v364, %v569
      %v571 = vpop.f32.mrf.mxu0
      %v572 = vpop.f32.mrf.mxu0
      %v573 = vadd.f32 %v364, %v572
      %v574 = vpop.f32.mrf.mxu0
      %575 = vdwg.mxu0
      %v576 = vmul.f32 %v450, 1.442695
      %v577 = vpow.pop %v576
      %v578 = vmul.f32 %v453, 1.442695
      %v579 = vpow.pop %v578
      %v580 = vmul.f32 %v458, 1.442695
      %v581 = vpow.pop %v580
      %v582 = vmul.f32 %v461, 1.442695
      %v583 = vpow.pop %v582
      %v584 = vmul.f32 %v466, 1.442695
      %v585 = vpow.pop %v584
      %v586 = vmul.f32 %v469, 1.442695
      %v587 = vpow.pop %v586
      %v588 = vmul.f32 %v474, 1.442695
      %v589 = vpow.pop %v588
      %v590 = vmul.f32 %v477, 1.442695
      %v591 = vpow.pop %v590
      %v592 = vmul.f32 %v482, 1.442695
      %v593 = vpow.pop %v592
      %v594 = vmul.f32 %v485, 1.442695
      %v595 = vpow.pop %v594
      %v596 = vmul.f32 %v490, 1.442695
      %v597 = vpow.pop %v596
      %v598 = vmul.f32 %v493, 1.442695
      %v599 = vpow.pop %v598
      %v600 = vmul.f32 %v498, 1.442695
      %v601 = vpow.pop %v600
      %v602 = vmul.f32 %v501, 1.442695
      %v603 = vpow.pop %v602
      %v604 = vmul.f32 %v506, 1.442695
      %v605 = vpow.pop %v604
      %v606 = vmul.f32 %v509, 1.442695
      %v607 = vpow.pop %v606
      %v608 = vmul.f32 %v514, 1.442695
      %v609 = vpow.pop %v608
      %v610 = vmul.f32 %v517, 1.442695
      %v611 = vpow.pop %v610
      %v612 = vmul.f32 %v522, 1.442695
      %v613 = vpow.pop %v612
      %v614 = vmul.f32 %v525, 1.442695
      %v615 = vpow.pop %v614
      %v616 = vmul.f32 %v530, 1.442695
      %v617 = vpow.pop %v616
      %v618 = vmul.f32 %v533, 1.442695
      %v619 = vpow.pop %v618
      %v620 = vmul.f32 %v538, 1.442695
      %v621 = vpow.pop %v620
      %v622 = vmul.f32 %v541, 1.442695
      %v623 = vpow.pop %v622
      %v624 = vmul.f32 %v546, 1.442695
      %v625 = vpow.pop %v624
      %v626 = vmul.f32 %v549, 1.442695
      %v627 = vpow.pop %v626
      %v628 = vmul.f32 %v554, 1.442695
      %v629 = vpow.pop %v628
      %v630 = vmul.f32 %v557, 1.442695
      %v631 = vpow.pop %v630
      %v632 = vmul.f32 %v562, 1.442695
      %v633 = vpow.pop %v632
      %v634 = vmul.f32 %v565, 1.442695
      %v635 = vpow.pop %v634
      %v636 = vmul.f32 %v570, 1.442695
      %v637 = vpow.pop %v636
      %v638 = vmul.f32 %v573, 1.442695
      %v639 = vpow.pop %v638
      %v640 = vmul.f32 %v577, 0.01
      %v641 = vmul.f32 %v579, 0.01
      %v642 = vmul.f32 %v581, 0.01
      %v643 = vmul.f32 %v583, 0.01
      %v644 = vmul.f32 %v585, 0.01
      %v645 = vmul.f32 %v587, 0.01
      %v646 = vmul.f32 %v589, 0.01
      %v647 = vmul.f32 %v591, 0.01
      %v648 = vmul.f32 %v593, 0.01
      %v649 = vmul.f32 %v595, 0.01
      %v650 = vmul.f32 %v597, 0.01
      %v651 = vmul.f32 %v599, 0.01
      %v652 = vmul.f32 %v601, 0.01
      %v653 = vmul.f32 %v603, 0.01
      %v654 = vmul.f32 %v605, 0.01
      %v655 = vmul.f32 %v607, 0.01
      %v656 = vmul.f32 %v609, 0.01
      %v657 = vmul.f32 %v611, 0.01
      %v658 = vmul.f32 %v613, 0.01
      %v659 = vmul.f32 %v615, 0.01
      %v660 = vmul.f32 %v617, 0.01
      %v661 = vmul.f32 %v619, 0.01
      %v662 = vmul.f32 %v621, 0.01
      %v663 = vmul.f32 %v623, 0.01
      %v664 = vmul.f32 %v625, 0.01
      %v665 = vmul.f32 %v627, 0.01
      %v666 = vmul.f32 %v629, 0.01
      %v667 = vmul.f32 %v631, 0.01
      %v668 = vmul.f32 %v633, 0.01
      %v669 = vmul.f32 %v635, 0.01
      %v670 = vmul.f32 %v637, 0.01
      %v671 = vmul.f32 %v639, 0.01
      %v672 = vld [vmem:[%s258] sm:$0xff]
      %v673 = vld [vmem:[%s258 + $0x8] sm:$0xff]
      %v674 = vld [vmem:[%s258 + $0x10] sm:$0xff]
      %v675 = vld [vmem:[%s258 + $0x18] sm:$0xff]
      %v676 = vld [vmem:[%s258 + $0x20] sm:$0xff]
      %v677 = vld [vmem:[%s258 + $0x28] sm:$0xff]
      %v678 = vld [vmem:[%s258 + $0x30] sm:$0xff]
      %v679 = vld [vmem:[%s258 + $0x38] sm:$0xff]
      %v680 = vld [vmem:[%s258 + $0x40] sm:$0xff]
      %v681 = vld [vmem:[%s258 + $0x48] sm:$0xff]
      %v682 = vld [vmem:[%s258 + $0x50] sm:$0xff]
      %v683 = vld [vmem:[%s258 + $0x58] sm:$0xff]
      %v684 = vld [vmem:[%s258 + $0x60] sm:$0xff]
      %v685 = vld [vmem:[%s258 + $0x68] sm:$0xff]
      %v686 = vld [vmem:[%s258 + $0x70] sm:$0xff]
      %v687 = vld [vmem:[%s258 + $0x78] sm:$0xff]
      %v688 = vld [vmem:[%s258 + $0x80] sm:$0xff]
      %v689 = vld [vmem:[%s258 + $0x88] sm:$0xff]
      %v690 = vld [vmem:[%s258 + $0x90] sm:$0xff]
      %v691 = vld [vmem:[%s258 + $0x98] sm:$0xff]
      %v692 = vld [vmem:[%s258 + $0xa0] sm:$0xff]
      %v693 = vld [vmem:[%s258 + $0xa8] sm:$0xff]
      %v694 = vld [vmem:[%s258 + $0xb0] sm:$0xff]
      %v695 = vld [vmem:[%s258 + $0xb8] sm:$0xff]
      %v696 = vld [vmem:[%s258 + $0xc0] sm:$0xff]
      %v697 = vld [vmem:[%s258 + $0xc8] sm:$0xff]
      %v698 = vld [vmem:[%s258 + $0xd0] sm:$0xff]
      %v699 = vld [vmem:[%s258 + $0xd8] sm:$0xff]
      %v700 = vld [vmem:[%s258 + $0xe0] sm:$0xff]
      %v701 = vld [vmem:[%s258 + $0xe8] sm:$0xff]
      %v702 = vld [vmem:[%s258 + $0xf0] sm:$0xff]
      %v703 = vld [vmem:[%s258 + $0xf8] sm:$0xff]
      %v704 = vmul.f32 %v640, %v672
      %v705 = vmul.f32 %v641, %v673
      %v706 = vmul.f32 %v642, %v674
      %v707 = vmul.f32 %v643, %v675
      %v708 = vmul.f32 %v644, %v676
      %v709 = vmul.f32 %v645, %v677
      %v710 = vmul.f32 %v646, %v678
      %v711 = vmul.f32 %v647, %v679
      %v712 = vmul.f32 %v648, %v680
      %v713 = vmul.f32 %v649, %v681
      %v714 = vmul.f32 %v650, %v682
      %v715 = vmul.f32 %v651, %v683
      %v716 = vmul.f32 %v652, %v684
      %v717 = vmul.f32 %v653, %v685
      %v718 = vmul.f32 %v654, %v686
      %v719 = vmul.f32 %v655, %v687
      %v720 = vmul.f32 %v656, %v688
      %v721 = vmul.f32 %v657, %v689
      %v722 = vmul.f32 %v658, %v690
      %v723 = vmul.f32 %v659, %v691
      %v724 = vmul.f32 %v660, %v692
      %v725 = vmul.f32 %v661, %v693
      %v726 = vmul.f32 %v662, %v694
      %v727 = vmul.f32 %v663, %v695
      %v728 = vmul.f32 %v664, %v696
      %v729 = vmul.f32 %v665, %v697
      %v730 = vmul.f32 %v666, %v698
      %v731 = vmul.f32 %v667, %v699
      %v732 = vmul.f32 %v668, %v700
      %v733 = vmul.f32 %v669, %v701
      %v734 = vmul.f32 %v670, %v702
      %v735 = vmul.f32 %v671, %v703
      %v736 = vadd.f32 %v305, %v704
      %v737 = vadd.f32 %v306, %v705
      %v738 = vadd.f32 %v307, %v706
      %v739 = vadd.f32 %v308, %v707
      %v740 = vadd.f32 %v309, %v708
      %v741 = vadd.f32 %v310, %v709
      %v742 = vadd.f32 %v311, %v710
      %v743 = vadd.f32 %v312, %v711
      %v744 = vadd.f32 %v313, %v712
      %v745 = vadd.f32 %v314, %v713
      %v746 = vadd.f32 %v315, %v714
      %v747 = vadd.f32 %v316, %v715
      %v748 = vadd.f32 %v317, %v716
      %v749 = vadd.f32 %v318, %v717
      %v750 = vadd.f32 %v319, %v718
      %v751 = vadd.f32 %v320, %v719
      %v752 = vadd.f32 %v321, %v720
      %v753 = vadd.f32 %v322, %v721
      %v754 = vadd.f32 %v323, %v722
      %v755 = vadd.f32 %v324, %v723
      %v756 = vadd.f32 %v325, %v724
      %v757 = vadd.f32 %v326, %v725
      %v758 = vadd.f32 %v327, %v726
      %v759 = vadd.f32 %v328, %v727
      %v760 = vadd.f32 %v329, %v728
      %v761 = vadd.f32 %v330, %v729
      %v762 = vadd.f32 %v331, %v730
      %v763 = vadd.f32 %v332, %v731
      %v764 = vadd.f32 %v333, %v732
      %v765 = vadd.f32 %v334, %v733
      %v766 = vadd.f32 %v335, %v734
      %v767 = vadd.f32 %v336, %v735
      %v768 = vld [vmem:[%s264] sm:$0xff]
      %v769 = vld [vmem:[%s264 + $0x8] sm:$0xff]
      %v770 = vld [vmem:[%s264 + $0x10] sm:$0xff]
      %v771 = vld [vmem:[%s264 + $0x18] sm:$0xff]
      %v772 = vld [vmem:[%s264 + $0x20] sm:$0xff]
      %v773 = vld [vmem:[%s264 + $0x28] sm:$0xff]
      %v774 = vld [vmem:[%s264 + $0x30] sm:$0xff]
      %v775 = vld [vmem:[%s264 + $0x38] sm:$0xff]
      %v776 = vld [vmem:[%s264 + $0x40] sm:$0xff]
      %v777 = vld [vmem:[%s264 + $0x48] sm:$0xff]
      %v778 = vld [vmem:[%s264 + $0x50] sm:$0xff]
      %v779 = vld [vmem:[%s264 + $0x58] sm:$0xff]
      %v780 = vld [vmem:[%s264 + $0x60] sm:$0xff]
      %v781 = vld [vmem:[%s264 + $0x68] sm:$0xff]
      %v782 = vld [vmem:[%s264 + $0x70] sm:$0xff]
      %v783 = vld [vmem:[%s264 + $0x78] sm:$0xff]
      %v784 = vld [vmem:[%s264 + $0x80] sm:$0xff]
      %v785 = vld [vmem:[%s264 + $0x88] sm:$0xff]
      %v786 = vld [vmem:[%s264 + $0x90] sm:$0xff]
      %v787 = vld [vmem:[%s264 + $0x98] sm:$0xff]
      %v788 = vld [vmem:[%s264 + $0xa0] sm:$0xff]
      %v789 = vld [vmem:[%s264 + $0xa8] sm:$0xff]
      %v790 = vld [vmem:[%s264 + $0xb0] sm:$0xff]
      %v791 = vld [vmem:[%s264 + $0xb8] sm:$0xff]
      %v792 = vld [vmem:[%s264 + $0xc0] sm:$0xff]
      %v793 = vld [vmem:[%s264 + $0xc8] sm:$0xff]
      %v794 = vld [vmem:[%s264 + $0xd0] sm:$0xff]
      %v795 = vld [vmem:[%s264 + $0xd8] sm:$0xff]
      %v796 = vld [vmem:[%s264 + $0xe0] sm:$0xff]
      %v797 = vld [vmem:[%s264 + $0xe8] sm:$0xff]
      %v798 = vld [vmem:[%s264 + $0xf0] sm:$0xff]
      %v799 = vld [vmem:[%s264 + $0xf8] sm:$0xff]
      %v800 = vmul.f32 %v640, %v768
      %v801 = vmul.f32 %v641, %v769
      %v802 = vmul.f32 %v642, %v770
      %v803 = vmul.f32 %v643, %v771
      %v804 = vmul.f32 %v644, %v772
      %v805 = vmul.f32 %v645, %v773
      %v806 = vmul.f32 %v646, %v774
      %v807 = vmul.f32 %v647, %v775
      %v808 = vmul.f32 %v648, %v776
      %v809 = vmul.f32 %v649, %v777
      %v810 = vmul.f32 %v650, %v778
      %v811 = vmul.f32 %v651, %v779
      %v812 = vmul.f32 %v652, %v780
      %v813 = vmul.f32 %v653, %v781
      %v814 = vmul.f32 %v654, %v782
      %v815 = vmul.f32 %v655, %v783
      %v816 = vmul.f32 %v656, %v784
      %v817 = vmul.f32 %v657, %v785
      %v818 = vmul.f32 %v658, %v786
      %v819 = vmul.f32 %v659, %v787
      %v820 = vmul.f32 %v660, %v788
      %v821 = vmul.f32 %v661, %v789
      %v822 = vmul.f32 %v662, %v790
      %v823 = vmul.f32 %v663, %v791
      %v824 = vmul.f32 %v664, %v792
      %v825 = vmul.f32 %v665, %v793
      %v826 = vmul.f32 %v666, %v794
      %v827 = vmul.f32 %v667, %v795
      %v828 = vmul.f32 %v668, %v796
      %v829 = vmul.f32 %v669, %v797
      %v830 = vmul.f32 %v670, %v798
      %v831 = vmul.f32 %v671, %v799
      %v832 = vadd.f32 %v305, %v800
      %v833 = vadd.f32 %v306, %v801
      %v834 = vadd.f32 %v307, %v802
      %v835 = vadd.f32 %v308, %v803
      %v836 = vadd.f32 %v309, %v804
      %v837 = vadd.f32 %v310, %v805
      %v838 = vadd.f32 %v311, %v806
      %v839 = vadd.f32 %v312, %v807
      %v840 = vadd.f32 %v313, %v808
      %v841 = vadd.f32 %v314, %v809
      %v842 = vadd.f32 %v315, %v810
      %v843 = vadd.f32 %v316, %v811
      %v844 = vadd.f32 %v317, %v812
      %v845 = vadd.f32 %v318, %v813
      %v846 = vadd.f32 %v319, %v814
      %v847 = vadd.f32 %v320, %v815
      %v848 = vadd.f32 %v321, %v816
      %v849 = vadd.f32 %v322, %v817
      %v850 = vadd.f32 %v323, %v818
      %v851 = vadd.f32 %v324, %v819
      %v852 = vadd.f32 %v325, %v820
      %v853 = vadd.f32 %v326, %v821
      %v854 = vadd.f32 %v327, %v822
      %v855 = vadd.f32 %v328, %v823
      %v856 = vadd.f32 %v329, %v824
      %v857 = vadd.f32 %v330, %v825
      %v858 = vadd.f32 %v331, %v826
      %v859 = vadd.f32 %v332, %v827
      %v860 = vadd.f32 %v333, %v828
      %v861 = vadd.f32 %v334, %v829
      %v862 = vadd.f32 %v335, %v830
      %v863 = vadd.f32 %v336, %v831
      %864 = vst.msk [vmem:[%s270] sm:$0xff] %vm366, %v305
      %865 = vst.msk [vmem:[%s270 + $0x8] sm:$0xff] %vm366, %v306
      %866 = vst.msk [vmem:[%s270 + $0x10] sm:$0xff] %vm366, %v307
      %867 = vst.msk [vmem:[%s270 + $0x18] sm:$0xff] %vm366, %v308
      %868 = vst.msk [vmem:[%s270 + $0x20] sm:$0xff] %vm366, %v309
      %869 = vst.msk [vmem:[%s270 + $0x28] sm:$0xff] %vm366, %v310
      %870 = vst.msk [vmem:[%s270 + $0x30] sm:$0xff] %vm366, %v311
      %871 = vst.msk [vmem:[%s270 + $0x38] sm:$0xff] %vm366, %v312
      %872 = vst.msk [vmem:[%s270 + $0x40] sm:$0xff] %vm366, %v313
      %873 = vst.msk [vmem:[%s270 + $0x48] sm:$0xff] %vm366, %v314
      %874 = vst.msk [vmem:[%s270 + $0x50] sm:$0xff] %vm366, %v315
      %875 = vst.msk [vmem:[%s270 + $0x58] sm:$0xff] %vm366, %v316
      %876 = vst.msk [vmem:[%s270 + $0x60] sm:$0xff] %vm366, %v317
      %877 = vst.msk [vmem:[%s270 + $0x68] sm:$0xff] %vm366, %v318
      %878 = vst.msk [vmem:[%s270 + $0x70] sm:$0xff] %vm366, %v319
      %879 = vst.msk [vmem:[%s270 + $0x78] sm:$0xff] %vm366, %v320
      %880 = vst.msk [vmem:[%s270 + $0x80] sm:$0xff] %vm366, %v321
      %881 = vst.msk [vmem:[%s270 + $0x88] sm:$0xff] %vm366, %v322
      %882 = vst.msk [vmem:[%s270 + $0x90] sm:$0xff] %vm366, %v323
      %883 = vst.msk [vmem:[%s270 + $0x98] sm:$0xff] %vm366, %v324
      %884 = vst.msk [vmem:[%s270 + $0xa0] sm:$0xff] %vm366, %v325
      %885 = vst.msk [vmem:[%s270 + $0xa8] sm:$0xff] %vm366, %v326
      %886 = vst.msk [vmem:[%s270 + $0xb0] sm:$0xff] %vm366, %v327
      %887 = vst.msk [vmem:[%s270 + $0xb8] sm:$0xff] %vm366, %v328
      %888 = vst.msk [vmem:[%s270 + $0xc0] sm:$0xff] %vm366, %v329
      %889 = vst.msk [vmem:[%s270 + $0xc8] sm:$0xff] %vm366, %v330
      %890 = vst.msk [vmem:[%s270 + $0xd0] sm:$0xff] %vm366, %v331
      %891 = vst.msk [vmem:[%s270 + $0xd8] sm:$0xff] %vm366, %v332
      %892 = vst.msk [vmem:[%s270 + $0xe0] sm:$0xff] %vm366, %v333
      %893 = vst.msk [vmem:[%s270 + $0xe8] sm:$0xff] %vm366, %v334
      %894 = vst.msk [vmem:[%s270 + $0xf0] sm:$0xff] %vm366, %v335
      %895 = vst.msk [vmem:[%s270 + $0xf8] sm:$0xff] %vm366, %v336
      %928 = vrot.lane.b32.xlu0 %v577, 32
      %v929 = vpop.permute.xlu0 %928
      %930 = vrot.lane.b32.xlu0 %v579, 32
      %v931 = vpop.permute.xlu0 %930
      %932 = vrot.lane.b32.xlu0 %v581, 32
      %v933 = vpop.permute.xlu0 %932
      %934 = vrot.lane.b32.xlu0 %v583, 32
      %v935 = vpop.permute.xlu0 %934
      %936 = vrot.lane.b32.xlu0 %v585, 32
      %v937 = vpop.permute.xlu0 %936
      %938 = vrot.lane.b32.xlu0 %v587, 32
      %v939 = vpop.permute.xlu0 %938
      %940 = vrot.lane.b32.xlu0 %v589, 32
      %v941 = vpop.permute.xlu0 %940
      %942 = vrot.lane.b32.xlu0 %v591, 32
      %v943 = vpop.permute.xlu0 %942
      %944 = vrot.lane.b32.xlu0 %v593, 32
      %v945 = vpop.permute.xlu0 %944
      %946 = vrot.lane.b32.xlu0 %v595, 32
      %v947 = vpop.permute.xlu0 %946
      %948 = vrot.lane.b32.xlu0 %v597, 32
      %v949 = vpop.permute.xlu0 %948
      %950 = vrot.lane.b32.xlu0 %v599, 32
      %v951 = vpop.permute.xlu0 %950
      %952 = vrot.lane.b32.xlu0 %v601, 32
      %v953 = vpop.permute.xlu0 %952
      %954 = vrot.lane.b32.xlu0 %v603, 32
      %v955 = vpop.permute.xlu0 %954
      %956 = vrot.lane.b32.xlu0 %v605, 32
      %v957 = vpop.permute.xlu0 %956
      %958 = vrot.lane.b32.xlu0 %v607, 32
      %v959 = vpop.permute.xlu0 %958
      %960 = vrot.lane.b32.xlu0 %v609, 32
      %v961 = vpop.permute.xlu0 %960
      %962 = vrot.lane.b32.xlu0 %v611, 32
      %v963 = vpop.permute.xlu0 %962
      %964 = vrot.lane.b32.xlu0 %v613, 32
      %v965 = vpop.permute.xlu0 %964
      %966 = vrot.lane.b32.xlu0 %v615, 32
      %v967 = vpop.permute.xlu0 %966
      %968 = vrot.lane.b32.xlu0 %v617, 32
      %v969 = vpop.permute.xlu0 %968
      %970 = vrot.lane.b32.xlu0 %v619, 32
      %v971 = vpop.permute.xlu0 %970
      %972 = vrot.lane.b32.xlu0 %v621, 32
      %v973 = vpop.permute.xlu0 %972
      %974 = vrot.lane.b32.xlu0 %v623, 32
      %v975 = vpop.permute.xlu0 %974
      %976 = vrot.lane.b32.xlu0 %v625, 32
      %v977 = vpop.permute.xlu0 %976
      %978 = vrot.lane.b32.xlu0 %v627, 32
      %v979 = vpop.permute.xlu0 %978
      %980 = vrot.lane.b32.xlu0 %v629, 32
      %v981 = vpop.permute.xlu0 %980
      %982 = vrot.lane.b32.xlu0 %v631, 32
      %v983 = vpop.permute.xlu0 %982
      %984 = vrot.lane.b32.xlu0 %v633, 32
      %v985 = vpop.permute.xlu0 %984
      %986 = vrot.lane.b32.xlu0 %v635, 32
      %v987 = vpop.permute.xlu0 %986
      %988 = vrot.lane.b32.xlu0 %v637, 32
      %v989 = vpop.permute.xlu0 %988
      %990 = vrot.lane.b32.xlu0 %v639, 32
      %v991 = vpop.permute.xlu0 %990
      %vm1024 = vcmask 523520
      %1025 = vst.msk [vmem:[%s270] sm:$0xff] %vm1024, %v929
      %1026 = vst.msk [vmem:[%s270 + $0x8] sm:$0xff] %vm1024, %v931
      %1027 = vst.msk [vmem:[%s270 + $0x10] sm:$0xff] %vm1024, %v933
      %1028 = vst.msk [vmem:[%s270 + $0x18] sm:$0xff] %vm1024, %v935
      %1029 = vst.msk [vmem:[%s270 + $0x20] sm:$0xff] %vm1024, %v937
      %1030 = vst.msk [vmem:[%s270 + $0x28] sm:$0xff] %vm1024, %v939
      %1031 = vst.msk [vmem:[%s270 + $0x30] sm:$0xff] %vm1024, %v941
      %1032 = vst.msk [vmem:[%s270 + $0x38] sm:$0xff] %vm1024, %v943
      %1033 = vst.msk [vmem:[%s270 + $0x40] sm:$0xff] %vm1024, %v945
      %1034 = vst.msk [vmem:[%s270 + $0x48] sm:$0xff] %vm1024, %v947
      %1035 = vst.msk [vmem:[%s270 + $0x50] sm:$0xff] %vm1024, %v949
      %1036 = vst.msk [vmem:[%s270 + $0x58] sm:$0xff] %vm1024, %v951
      %1037 = vst.msk [vmem:[%s270 + $0x60] sm:$0xff] %vm1024, %v953
      %1038 = vst.msk [vmem:[%s270 + $0x68] sm:$0xff] %vm1024, %v955
      %1039 = vst.msk [vmem:[%s270 + $0x70] sm:$0xff] %vm1024, %v957
      %1040 = vst.msk [vmem:[%s270 + $0x78] sm:$0xff] %vm1024, %v959
      %1041 = vst.msk [vmem:[%s270 + $0x80] sm:$0xff] %vm1024, %v961
      %1042 = vst.msk [vmem:[%s270 + $0x88] sm:$0xff] %vm1024, %v963
      %1043 = vst.msk [vmem:[%s270 + $0x90] sm:$0xff] %vm1024, %v965
      %1044 = vst.msk [vmem:[%s270 + $0x98] sm:$0xff] %vm1024, %v967
      %1045 = vst.msk [vmem:[%s270 + $0xa0] sm:$0xff] %vm1024, %v969
      %1046 = vst.msk [vmem:[%s270 + $0xa8] sm:$0xff] %vm1024, %v971
      %1047 = vst.msk [vmem:[%s270 + $0xb0] sm:$0xff] %vm1024, %v973
      %1048 = vst.msk [vmem:[%s270 + $0xb8] sm:$0xff] %vm1024, %v975
      %1049 = vst.msk [vmem:[%s270 + $0xc0] sm:$0xff] %vm1024, %v977
      %1050 = vst.msk [vmem:[%s270 + $0xc8] sm:$0xff] %vm1024, %v979
      %1051 = vst.msk [vmem:[%s270 + $0xd0] sm:$0xff] %vm1024, %v981
      %1052 = vst.msk [vmem:[%s270 + $0xd8] sm:$0xff] %vm1024, %v983
      %1053 = vst.msk [vmem:[%s270 + $0xe0] sm:$0xff] %vm1024, %v985
      %1054 = vst.msk [vmem:[%s270 + $0xe8] sm:$0xff] %vm1024, %v987
      %1055 = vst.msk [vmem:[%s270 + $0xf0] sm:$0xff] %vm1024, %v989
      %1056 = vst.msk [vmem:[%s270 + $0xf8] sm:$0xff] %vm1024, %v991
      %1089 = vrot.lane.b32.xlu0 %v736, 64
      %v1090 = vpop.permute.xlu0 %1089
      %1091 = vrot.lane.b32.xlu0 %v737, 64
      %v1092 = vpop.permute.xlu0 %1091
      %1093 = vrot.lane.b32.xlu0 %v738, 64
      %v1094 = vpop.permute.xlu0 %1093
      %1095 = vrot.lane.b32.xlu0 %v739, 64
      %v1096 = vpop.permute.xlu0 %1095
      %1097 = vrot.lane.b32.xlu0 %v740, 64
      %v1098 = vpop.permute.xlu0 %1097
      %1099 = vrot.lane.b32.xlu0 %v741, 64
      %v1100 = vpop.permute.xlu0 %1099
      %1101 = vrot.lane.b32.xlu0 %v742, 64
      %v1102 = vpop.permute.xlu0 %1101
      %1103 = vrot.lane.b32.xlu0 %v743, 64
      %v1104 = vpop.permute.xlu0 %1103
      %1105 = vrot.lane.b32.xlu0 %v744, 64
      %v1106 = vpop.permute.xlu0 %1105
      %1107 = vrot.lane.b32.xlu0 %v745, 64
      %v1108 = vpop.permute.xlu0 %1107
      %1109 = vrot.lane.b32.xlu0 %v746, 64
      %v1110 = vpop.permute.xlu0 %1109
      %1111 = vrot.lane.b32.xlu0 %v747, 64
      %v1112 = vpop.permute.xlu0 %1111
      %1113 = vrot.lane.b32.xlu0 %v748, 64
      %v1114 = vpop.permute.xlu0 %1113
      %1115 = vrot.lane.b32.xlu0 %v749, 64
      %v1116 = vpop.permute.xlu0 %1115
      %1117 = vrot.lane.b32.xlu0 %v750, 64
      %v1118 = vpop.permute.xlu0 %1117
      %1119 = vrot.lane.b32.xlu0 %v751, 64
      %v1120 = vpop.permute.xlu0 %1119
      %1121 = vrot.lane.b32.xlu0 %v752, 64
      %v1122 = vpop.permute.xlu0 %1121
      %1123 = vrot.lane.b32.xlu0 %v753, 64
      %v1124 = vpop.permute.xlu0 %1123
      %1125 = vrot.lane.b32.xlu0 %v754, 64
      %v1126 = vpop.permute.xlu0 %1125
      %1127 = vrot.lane.b32.xlu0 %v755, 64
      %v1128 = vpop.permute.xlu0 %1127
      %1129 = vrot.lane.b32.xlu0 %v756, 64
      %v1130 = vpop.permute.xlu0 %1129
      %1131 = vrot.lane.b32.xlu0 %v757, 64
      %v1132 = vpop.permute.xlu0 %1131
      %1133 = vrot.lane.b32.xlu0 %v758, 64
      %v1134 = vpop.permute.xlu0 %1133
      %1135 = vrot.lane.b32.xlu0 %v759, 64
      %v1136 = vpop.permute.xlu0 %1135
      %1137 = vrot.lane.b32.xlu0 %v760, 64
      %v1138 = vpop.permute.xlu0 %1137
      %1139 = vrot.lane.b32.xlu0 %v761, 64
      %v1140 = vpop.permute.xlu0 %1139
      %1141 = vrot.lane.b32.xlu0 %v762, 64
      %v1142 = vpop.permute.xlu0 %1141
      %1143 = vrot.lane.b32.xlu0 %v763, 64
      %v1144 = vpop.permute.xlu0 %1143
      %1145 = vrot.lane.b32.xlu0 %v764, 64
      %v1146 = vpop.permute.xlu0 %1145
      %1147 = vrot.lane.b32.xlu0 %v765, 64
      %v1148 = vpop.permute.xlu0 %1147
      %1149 = vrot.lane.b32.xlu0 %v766, 64
      %v1150 = vpop.permute.xlu0 %1149
      %1151 = vrot.lane.b32.xlu0 %v767, 64
      %v1152 = vpop.permute.xlu0 %1151
      %vm1185 = vcmask 785920
      %1186 = vst.msk [vmem:[%s270] sm:$0xff] %vm1185, %v1090
      %1187 = vst.msk [vmem:[%s270 + $0x8] sm:$0xff] %vm1185, %v1092
      %1188 = vst.msk [vmem:[%s270 + $0x10] sm:$0xff] %vm1185, %v1094
      %1189 = vst.msk [vmem:[%s270 + $0x18] sm:$0xff] %vm1185, %v1096
      %1190 = vst.msk [vmem:[%s270 + $0x20] sm:$0xff] %vm1185, %v1098
      %1191 = vst.msk [vmem:[%s270 + $0x28] sm:$0xff] %vm1185, %v1100
      %1192 = vst.msk [vmem:[%s270 + $0x30] sm:$0xff] %vm1185, %v1102
      %1193 = vst.msk [vmem:[%s270 + $0x38] sm:$0xff] %vm1185, %v1104
      %1194 = vst.msk [vmem:[%s270 + $0x40] sm:$0xff] %vm1185, %v1106
      %1195 = vst.msk [vmem:[%s270 + $0x48] sm:$0xff] %vm1185, %v1108
      %1196 = vst.msk [vmem:[%s270 + $0x50] sm:$0xff] %vm1185, %v1110
      %1197 = vst.msk [vmem:[%s270 + $0x58] sm:$0xff] %vm1185, %v1112
      %1198 = vst.msk [vmem:[%s270 + $0x60] sm:$0xff] %vm1185, %v1114
      %1199 = vst.msk [vmem:[%s270 + $0x68] sm:$0xff] %vm1185, %v1116
      %1200 = vst.msk [vmem:[%s270 + $0x70] sm:$0xff] %vm1185, %v1118
      %1201 = vst.msk [vmem:[%s270 + $0x78] sm:$0xff] %vm1185, %v1120
      %1202 = vst.msk [vmem:[%s270 + $0x80] sm:$0xff] %vm1185, %v1122
      %1203 = vst.msk [vmem:[%s270 + $0x88] sm:$0xff] %vm1185, %v1124
      %1204 = vst.msk [vmem:[%s270 + $0x90] sm:$0xff] %vm1185, %v1126
      %1205 = vst.msk [vmem:[%s270 + $0x98] sm:$0xff] %vm1185, %v1128
      %1206 = vst.msk [vmem:[%s270 + $0xa0] sm:$0xff] %vm1185, %v1130
      %1207 = vst.msk [vmem:[%s270 + $0xa8] sm:$0xff] %vm1185, %v1132
      %1208 = vst.msk [vmem:[%s270 + $0xb0] sm:$0xff] %vm1185, %v1134
      %1209 = vst.msk [vmem:[%s270 + $0xb8] sm:$0xff] %vm1185, %v1136
      %1210 = vst.msk [vmem:[%s270 + $0xc0] sm:$0xff] %vm1185, %v1138
      %1211 = vst.msk [vmem:[%s270 + $0xc8] sm:$0xff] %vm1185, %v1140
      %1212 = vst.msk [vmem:[%s270 + $0xd0] sm:$0xff] %vm1185, %v1142
      %1213 = vst.msk [vmem:[%s270 + $0xd8] sm:$0xff] %vm1185, %v1144
      %1214 = vst.msk [vmem:[%s270 + $0xe0] sm:$0xff] %vm1185, %v1146
      %1215 = vst.msk [vmem:[%s270 + $0xe8] sm:$0xff] %vm1185, %v1148
      %1216 = vst.msk [vmem:[%s270 + $0xf0] sm:$0xff] %vm1185, %v1150
      %1217 = vst.msk [vmem:[%s270 + $0xf8] sm:$0xff] %vm1185, %v1152
      %1250 = vrot.lane.b32.xlu0 %v832, 96
      %v1251 = vpop.permute.xlu0 %1250
      %1252 = vrot.lane.b32.xlu0 %v833, 96
      %v1253 = vpop.permute.xlu0 %1252
      %1254 = vrot.lane.b32.xlu0 %v834, 96
      %v1255 = vpop.permute.xlu0 %1254
      %1256 = vrot.lane.b32.xlu0 %v835, 96
      %v1257 = vpop.permute.xlu0 %1256
      %1258 = vrot.lane.b32.xlu0 %v836, 96
      %v1259 = vpop.permute.xlu0 %1258
      %1260 = vrot.lane.b32.xlu0 %v837, 96
      %v1261 = vpop.permute.xlu0 %1260
      %1262 = vrot.lane.b32.xlu0 %v838, 96
      %v1263 = vpop.permute.xlu0 %1262
      %1264 = vrot.lane.b32.xlu0 %v839, 96
      %v1265 = vpop.permute.xlu0 %1264
      %1266 = vrot.lane.b32.xlu0 %v840, 96
      %v1267 = vpop.permute.xlu0 %1266
      %1268 = vrot.lane.b32.xlu0 %v841, 96
      %v1269 = vpop.permute.xlu0 %1268
      %1270 = vrot.lane.b32.xlu0 %v842, 96
      %v1271 = vpop.permute.xlu0 %1270
      %1272 = vrot.lane.b32.xlu0 %v843, 96
      %v1273 = vpop.permute.xlu0 %1272
      %1274 = vrot.lane.b32.xlu0 %v844, 96
      %v1275 = vpop.permute.xlu0 %1274
      %1276 = vrot.lane.b32.xlu0 %v845, 96
      %v1277 = vpop.permute.xlu0 %1276
      %1278 = vrot.lane.b32.xlu0 %v846, 96
      %v1279 = vpop.permute.xlu0 %1278
      %1280 = vrot.lane.b32.xlu0 %v847, 96
      %v1281 = vpop.permute.xlu0 %1280
      %1282 = vrot.lane.b32.xlu0 %v848, 96
      %v1283 = vpop.permute.xlu0 %1282
      %1284 = vrot.lane.b32.xlu0 %v849, 96
      %v1285 = vpop.permute.xlu0 %1284
      %1286 = vrot.lane.b32.xlu0 %v850, 96
      %v1287 = vpop.permute.xlu0 %1286
      %1288 = vrot.lane.b32.xlu0 %v851, 96
      %v1289 = vpop.permute.xlu0 %1288
      %1290 = vrot.lane.b32.xlu0 %v852, 96
      %v1291 = vpop.permute.xlu0 %1290
      %1292 = vrot.lane.b32.xlu0 %v853, 96
      %v1293 = vpop.permute.xlu0 %1292
      %1294 = vrot.lane.b32.xlu0 %v854, 96
      %v1295 = vpop.permute.xlu0 %1294
      %1296 = vrot.lane.b32.xlu0 %v855, 96
      %v1297 = vpop.permute.xlu0 %1296
      %1298 = vrot.lane.b32.xlu0 %v856, 96
      %v1299 = vpop.permute.xlu0 %1298
      %1300 = vrot.lane.b32.xlu0 %v857, 96
      %v1301 = vpop.permute.xlu0 %1300
      %1302 = vrot.lane.b32.xlu0 %v858, 96
      %v1303 = vpop.permute.xlu0 %1302
      %1304 = vrot.lane.b32.xlu0 %v859, 96
      %v1305 = vpop.permute.xlu0 %1304
      %1306 = vrot.lane.b32.xlu0 %v860, 96
      %v1307 = vpop.permute.xlu0 %1306
      %1308 = vrot.lane.b32.xlu0 %v861, 96
      %v1309 = vpop.permute.xlu0 %1308
      %1310 = vrot.lane.b32.xlu0 %v862, 96
      %v1311 = vpop.permute.xlu0 %1310
      %1312 = vrot.lane.b32.xlu0 %v863, 96
      %v1313 = vpop.permute.xlu0 %1312
      %vm1346 = vcmask 1048320
      %1347 = vst.msk [vmem:[%s270] sm:$0xff] %vm1346, %v1251
      %1348 = vst.msk [vmem:[%s270 + $0x8] sm:$0xff] %vm1346, %v1253
      %1349 = vst.msk [vmem:[%s270 + $0x10] sm:$0xff] %vm1346, %v1255
      %1350 = vst.msk [vmem:[%s270 + $0x18] sm:$0xff] %vm1346, %v1257
      %1351 = vst.msk [vmem:[%s270 + $0x20] sm:$0xff] %vm1346, %v1259
      %1352 = vst.msk [vmem:[%s270 + $0x28] sm:$0xff] %vm1346, %v1261
      %1353 = vst.msk [vmem:[%s270 + $0x30] sm:$0xff] %vm1346, %v1263
      %1354 = vst.msk [vmem:[%s270 + $0x38] sm:$0xff] %vm1346, %v1265
      %1355 = vst.msk [vmem:[%s270 + $0x40] sm:$0xff] %vm1346, %v1267
      %1356 = vst.msk [vmem:[%s270 + $0x48] sm:$0xff] %vm1346, %v1269
      %1357 = vst.msk [vmem:[%s270 + $0x50] sm:$0xff] %vm1346, %v1271
      %1358 = vst.msk [vmem:[%s270 + $0x58] sm:$0xff] %vm1346, %v1273
      %1359 = vst.msk [vmem:[%s270 + $0x60] sm:$0xff] %vm1346, %v1275
      %1360 = vst.msk [vmem:[%s270 + $0x68] sm:$0xff] %vm1346, %v1277
      %1361 = vst.msk [vmem:[%s270 + $0x70] sm:$0xff] %vm1346, %v1279
      %1362 = vst.msk [vmem:[%s270 + $0x78] sm:$0xff] %vm1346, %v1281
      %1363 = vst.msk [vmem:[%s270 + $0x80] sm:$0xff] %vm1346, %v1283
      %1364 = vst.msk [vmem:[%s270 + $0x88] sm:$0xff] %vm1346, %v1285
      %1365 = vst.msk [vmem:[%s270 + $0x90] sm:$0xff] %vm1346, %v1287
      %1366 = vst.msk [vmem:[%s270 + $0x98] sm:$0xff] %vm1346, %v1289
      %1367 = vst.msk [vmem:[%s270 + $0xa0] sm:$0xff] %vm1346, %v1291
      %1368 = vst.msk [vmem:[%s270 + $0xa8] sm:$0xff] %vm1346, %v1293
      %1369 = vst.msk [vmem:[%s270 + $0xb0] sm:$0xff] %vm1346, %v1295
      %1370 = vst.msk [vmem:[%s270 + $0xb8] sm:$0xff] %vm1346, %v1297
      %1371 = vst.msk [vmem:[%s270 + $0xc0] sm:$0xff] %vm1346, %v1299
      %1372 = vst.msk [vmem:[%s270 + $0xc8] sm:$0xff] %vm1346, %v1301
      %1373 = vst.msk [vmem:[%s270 + $0xd0] sm:$0xff] %vm1346, %v1303
      %1374 = vst.msk [vmem:[%s270 + $0xd8] sm:$0xff] %vm1346, %v1305
      %1375 = vst.msk [vmem:[%s270 + $0xe0] sm:$0xff] %vm1346, %v1307
      %1376 = vst.msk [vmem:[%s270 + $0xe8] sm:$0xff] %vm1346, %v1309
      %1377 = vst.msk [vmem:[%s270 + $0xf0] sm:$0xff] %vm1346, %v1311
      %1378 = vst.msk [vmem:[%s270 + $0xf8] sm:$0xff] %vm1346, %v1313
      %s1379 = smul.u32 32, %s16
      %p1380 = scmp.lt.s32.totalorder %s1379, 63
      %s1381 = scalar_select %p1380, %s1379, 63
      %s1382 = smul.addr %s1381, 8
      %s1383 = scalar_lea.vmem %s5, %s1382
      // Predicated region
      $region41: #{vgcl_forward.5} parent=39 // pred_check
        %p1384 = pneg %p154
      $region42: #{vgcl_forward.5} parent=39 // pred_check_branch
        %1386 = sbr.rel (%p1384) target = $region44
      $region43: #{vgcl_forward.5} parent=39 // pred_region
        %s1387 = smul.u32 32, %s16
      $region44: #{vgcl_forward.5} parent=39 // pred_fallthru
        _
    $region40: #{vgcl_forward.5} parent=5 // pred_fallthru
      _
    %p1388 = scmp.le.s32.totalorder 2, %s11
    // Predicated region
    $region45: #{vgcl_forward.5} parent=5 // pred_check
      %p1389 = pneg %p1388
    $region46: #{vgcl_forward.5} parent=5 // pred_check_branch
      %1391 = sbr.rel (%p1389) target = $region48
    $region47: #{vgcl_forward.5} parent=5 // pred_region
      %s1392 = ssub.s32 %s11, 2
      // Predicated region
      $region49: #{vgcl_forward.5} parent=47 // pred_check
        %p1393 = pneg %p160
      $region50: #{vgcl_forward.5} parent=47 // pred_check_branch
        %1395 = sbr.rel (%p1393) target = $region52
      $region51: #{vgcl_forward.5} parent=47 // pred_region
        %s1396 = smul.u32 32, %s17
        %p1397 = scmp.lt.s32.totalorder %s1396, 63
        %s1398 = scalar_select %p1397, %s1396, 63
        %s1399 = smul.addr %s1398, 8
        %s1400 = scalar_lea.vmem %s5, %s1399
      $region52: #{vgcl_forward.5} parent=47 // pred_fallthru
        _
    $region48: #{vgcl_forward.5} parent=5 // pred_fallthru
      _
  $region6: #{vgcl_forward.5} parent=0 // loop_footer
    %s15 = sadd.s32 1, %s11
  $region7: #{vgcl_forward.5} parent=0 // loop_footer_branch
    %10 = sbr.rel target = $region3
  $region8: #{vgcl_forward.5} parent=0 // loop_exit
    _

// kernel: vgcl_forward.3
$region0: #{vgcl_forward.3}
  #allocation0 [shape = 'u32[]', space=smem, size = 0x4, offset = 0x4, fixed_abs, tag = 'smem constant byte address 0x4 - core index']
  #allocation1 [shape = 'u32[144,128]{1,0:T(1,128)}', space=vmem, size = 0x12000, scoped, tag = 'internal scratch']
  #allocation2 [shape = 'f32[256,32]{1,0:T(8,128)}', space=vmem, size = 0x20000, scoped, tag = 'scratch operand']
  %s0 = inlined_call_operand.vmem [shape: bf16[512,512], index: 0, kind: input, shape index: {}]
  %s1 = inlined_call_operand.vmem [shape: f32[512,32], index: 1, kind: input, shape index: {}]
  %s2 = inlined_call_operand.vmem [shape: f32[512,32], index: 2, kind: input, shape index: {}]
  %s3 = inlined_call_operand.vmem [shape: f32[512,32], index: 3, kind: output, shape index: {0}]
  %s4 = inlined_call_operand.vmem [shape: f32[512,32], index: 4, kind: output, shape index: {1}]
  %5 = xla_tuple %s3, %s4
  %s6 = sld [smem:[#allocation0]]
  $region99: #{vgcl_forward.3} parent=0
    _
  %s8 = ssub.s32 1, %s6
  %s9 = scalar_select 0, %s8, %s6
  $region1: #{vgcl_forward.3} parent=0
    #allocation3 [shape = 'u8[262144]{0}', space=vmem, size = 0x40000, scoped, tag = 'input window, operand 0']
    loop: start=0, step=1, limit=6
    $region2: #{vgcl_forward.3} parent=1 // loop_pre_header
      _
    $region3: #{vgcl_forward.3} parent=1 // loop_header
      %s11 = sphi 0, %s15
      %p12 = scmp.ge.s32.totalorder %s11, 6
      %s18 = sphi 0, %s30
      %s19 = sphi 0, %s26
      %s20 = sphi 0, %s18
      %s21 = sphi 0, %s19
      %s22 = sphi 0, %s20
      %s23 = sphi 0, %s21
      %s35 = sphi 0, %s37
      %s38 = sphi 0, %s35
      %s39 = sphi 0, %s38
      %s55 = sphi 0, %s39
      %s61 = sphi 0, %s63
      %s64 = sphi 0, %s61
      %s65 = sphi 0, %s64
      %s81 = sphi 0, %s65
      %s87 = sphi 0, %s89
      %s90 = sphi 0, %s87
      %s91 = sphi 0, %s90
      %s107 = sphi 0, %s91
      %s113 = sphi 0, %s115
      %s116 = sphi 0, %s113
      %s117 = sphi 0, %s116
      %s133 = sphi 0, %s117
      %s139 = sphi 0, %s141
      %s142 = sphi 0, %s139
      %s143 = sphi 0, %s142
      %s159 = sphi 0, %s143
    $region4: #{vgcl_forward.3} parent=1 // loop_header_branch
      %14 = sbr.rel (%p12) target = $region8
    $region5: #{vgcl_forward.3} parent=1 // loop_body
      %s16 = ssub.s32 %s11, 1
      %s17 = ssub.s32 %s11, 2
      %s24 = sadd.s32 1, %s19
      %p25 = scmp.ge.s32.totalorder %s24, 2
      %s26 = scalar_select %p25, 0, %s24
      %s27 = sadd.s32 1, %s18
      %s28 = scalar_select %p25, %s27, %s18
      %p29 = scmp.ge.s32.totalorder %s28, 2
      %s30 = scalar_select %p29, 0, %s28
      %s31 = ssub.s32 %s18, %s30
      %s32 = ssub.s32 %s19, %s26
      %s33 = sor.u32 %s31, %s32
      %p34 = scmp.eq.s32.totalorder %s33, 0
      %s36 = sadd.s32 %s35, 1
      %s37 = scalar_select %p34, %s35, %s36
      %p40 = pneg %p34
      %p41 = scmp.eq.s32.totalorder %s11, 3
      %p42 = por %p40, %p41
      %p43 = scmp.ne.s32.totalorder %s35, %s38
      %p44 = scmp.eq.s32.totalorder %s11, 0
      %p45 = por %p43, %p44
      %p46 = scmp.ne.s32.totalorder %s35, %s38
      %p47 = scmp.eq.s32.totalorder %s16, 3
      %p48 = por %p46, %p47
      %p49 = scmp.ne.s32.totalorder %s38, %s39
      %p50 = scmp.eq.s32.totalorder %s16, 0
      %p51 = por %p49, %p50
      %p52 = scmp.ne.s32.totalorder %s38, %s39
      %p53 = scmp.eq.s32.totalorder %s17, 3
      %p54 = por %p52, %p53
      %p56 = scmp.ne.s32.totalorder %s39, %s55
      %p57 = scmp.eq.s32.totalorder %s17, 0
      %p58 = por %p56, %p57
      %s59 = ssub.s32 %s19, %s26
      %p60 = scmp.eq.s32.totalorder %s59, 0
      %s62 = sadd.s32 %s61, 1
      %s63 = scalar_select %p60, %s61, %s62
      %p66 = pneg %p60
      %p67 = scmp.eq.s32.totalorder %s11, 3
      %p68 = por %p66, %p67
      %p69 = scmp.ne.s32.totalorder %s61, %s64
      %p70 = scmp.eq.s32.totalorder %s11, 0
      %p71 = por %p69, %p70
      %p72 = scmp.ne.s32.totalorder %s61, %s64
      %p73 = scmp.eq.s32.totalorder %s16, 3
      %p74 = por %p72, %p73
      %p75 = scmp.ne.s32.totalorder %s64, %s65
      %p76 = scmp.eq.s32.totalorder %s16, 0
      %p77 = por %p75, %p76
      %p78 = scmp.ne.s32.totalorder %s64, %s65
      %p79 = scmp.eq.s32.totalorder %s17, 3
      %p80 = por %p78, %p79
      %p82 = scmp.ne.s32.totalorder %s65, %s81
      %p83 = scmp.eq.s32.totalorder %s17, 0
      %p84 = por %p82, %p83
      %s85 = ssub.s32 %s18, %s30
      %p86 = scmp.eq.s32.totalorder %s85, 0
      %s88 = sadd.s32 %s87, 1
      %s89 = scalar_select %p86, %s87, %s88
      %p92 = pneg %p86
      %p93 = scmp.eq.s32.totalorder %s11, 3
      %p94 = por %p92, %p93
      %p95 = scmp.ne.s32.totalorder %s87, %s90
      %p96 = scmp.eq.s32.totalorder %s11, 0
      %p97 = por %p95, %p96
      %p98 = scmp.ne.s32.totalorder %s87, %s90
      %p99 = scmp.eq.s32.totalorder %s16, 3
      %p100 = por %p98, %p99
      %p101 = scmp.ne.s32.totalorder %s90, %s91
      %p102 = scmp.eq.s32.totalorder %s16, 0
      %p103 = por %p101, %p102
      %p104 = scmp.ne.s32.totalorder %s90, %s91
      %p105 = scmp.eq.s32.totalorder %s17, 3
      %p106 = por %p104, %p105
      %p108 = scmp.ne.s32.totalorder %s91, %s107
      %p109 = scmp.eq.s32.totalorder %s17, 0
      %p110 = por %p108, %p109
      %s111 = ssub.s32 %s18, %s30
      %p112 = scmp.eq.s32.totalorder %s111, 0
      %s114 = sadd.s32 %s113, 1
      %s115 = scalar_select %p112, %s113, %s114
      %p118 = pneg %p112
      %p119 = scmp.eq.s32.totalorder %s11, 3
      %p120 = por %p118, %p119
      %p121 = scmp.ne.s32.totalorder %s113, %s116
      %p122 = scmp.eq.s32.totalorder %s11, 0
      %p123 = por %p121, %p122
      %p124 = scmp.ne.s32.totalorder %s113, %s116
      %p125 = scmp.eq.s32.totalorder %s16, 3
      %p126 = por %p124, %p125
      %p127 = scmp.ne.s32.totalorder %s116, %s117
      %p128 = scmp.eq.s32.totalorder %s16, 0
      %p129 = por %p127, %p128
      %p130 = scmp.ne.s32.totalorder %s116, %s117
      %p131 = scmp.eq.s32.totalorder %s17, 3
      %p132 = por %p130, %p131
      %p134 = scmp.ne.s32.totalorder %s117, %s133
      %p135 = scmp.eq.s32.totalorder %s17, 0
      %p136 = por %p134, %p135
      %s137 = ssub.s32 %s18, %s30
      %p138 = scmp.eq.s32.totalorder %s137, 0
      %s140 = sadd.s32 %s139, 1
      %s141 = scalar_select %p138, %s139, %s140
      %p144 = pneg %p138
      %p145 = scmp.eq.s32.totalorder %s11, 3
      %p146 = por %p144, %p145
      %p147 = scmp.ne.s32.totalorder %s139, %s142
      %p148 = scmp.eq.s32.totalorder %s11, 0
      %p149 = por %p147, %p148
      %p150 = scmp.ne.s32.totalorder %s139, %s142
      %p151 = scmp.eq.s32.totalorder %s16, 3
      %p152 = por %p150, %p151
      %p153 = scmp.ne.s32.totalorder %s142, %s143
      %p154 = scmp.eq.s32.totalorder %s16, 0
      %p155 = por %p153, %p154
      %p156 = scmp.ne.s32.totalorder %s142, %s143
      %p157 = scmp.eq.s32.totalorder %s17, 3
      %p158 = por %p156, %p157
      %p160 = scmp.ne.s32.totalorder %s143, %s159
      %p161 = scmp.eq.s32.totalorder %s17, 0
      %p162 = por %p160, %p161
      %p163 = scmp.le.s32.totalorder 1, %s11
      %p164 = scmp.lt.s32.totalorder %s11, 5
      %p165 = pnand %p163, %p164
      %p166 = pneg %p165
      // Predicated region
      $region9: #{vgcl_forward.3} parent=5 // pred_check
        _
      $region10: #{vgcl_forward.3} parent=5 // pred_check_branch
        %168 = sbr.rel (%p165) target = $region12
      $region11: #{vgcl_forward.3} parent=5 // pred_region
        %s169 = ssub.s32 %s11, 1
      $region12: #{vgcl_forward.3} parent=5 // pred_fallthru
        _
      %p170 = scmp.lt.s32.totalorder %s11, 4
      // Predicated region
      $region13: #{vgcl_forward.3} parent=5 // pred_check
        %p171 = pneg %p170
      $region14: #{vgcl_forward.3} parent=5 // pred_check_branch
        %173 = sbr.rel (%p171) target = $region16
      $region15: #{vgcl_forward.3} parent=5 // pred_region
        // Predicated region
        $region17: #{vgcl_forward.3} parent=15 // pred_check
          %p174 = pneg %p45
        $region18: #{vgcl_forward.3} parent=15 // pred_check_branch
          %176 = sbr.rel (%p174) target = $region20
        $region19: #{vgcl_forward.3} parent=15 // pred_region
          %s177 = sand.u32 %s35, 1
          %s178 = sand.u32 %s35, 1
          %s179 = smul.addr %s178, 256
          %s180 = scalar_lea.vmem [#allocation3], %s179
          %s181 = smul.u32 32, %s18
          %s182 = smul.u32 2, %s19
          %s183 = smul.addr %s181, 4
          %s184 = sadd.s32 %s182, %s183
          %s185 = smul.addr %s184, 4
          %s186 = scalar_lea.vmem %s0, %s185
          // Predicated region
          $region21: #{vgcl_forward.3} parent=19 // pred_check
            _
          $region22: #{vgcl_forward.3} parent=19 // pred_check_branch
            %188 = sbr.rel (0) target = $region24
          $region23: #{vgcl_forward.3} parent=19 // pred_region
            // Predicated region
            $region25: #{vgcl_forward.3} parent=23 // pred_check
              _
            $region26: #{vgcl_forward.3} parent=23 // pred_check_branch
              %190 = sbr.rel (0) target = $region28
            $region27: #{vgcl_forward.3} parent=23 // pred_region
              // Predicated region
              $region40: #{vgcl_forward.3} parent=27 // pred_check
                _
              $region41: #{vgcl_forward.3} parent=27 // pred_check_branch
                %268 = sbr.rel (0) target = $region43
              $region42: #{vgcl_forward.3} parent=27 // pred_region
                loop: start=0, step=1, limit=1
                $region44: #{vgcl_forward.3} parent=42 // loop_pre_header
                  _
                $region45: #{vgcl_forward.3} parent=42 // loop_header
                  %s270 = sphi 0, %s274
                  %p271 = scmp.ge.s32.totalorder %s270, 1
                  %s275 = sphi %s186, %s186
                  %s276 = sphi %s180, %s180
                $region46: #{vgcl_forward.3} parent=42 // loop_header_branch
                  %273 = sbr.rel (%p271) target = $region50
                $region47: #{vgcl_forward.3} parent=42 // loop_body
                  %v277 = vld [vmem:[%s275] sm:$0xff]
                  %278 = vst [vmem:[%s276] sm:$0xff] %v277
                  %v279 = vld [vmem:[%s275 + $0x10] sm:$0xff]
                  %280 = vst [vmem:[%s276 + $0x8] sm:$0xff] %v279
                  %v281 = vld [vmem:[%s275 + $0x20] sm:$0xff]
                  %282 = vst [vmem:[%s276 + $0x10] sm:$0xff] %v281
                  %v283 = vld [vmem:[%s275 + $0x30] sm:$0xff]
                  %284 = vst [vmem:[%s276 + $0x18] sm:$0xff] %v283
                  %v285 = vld [vmem:[%s275 + $0x40] sm:$0xff]
                  %286 = vst [vmem:[%s276 + $0x20] sm:$0xff] %v285
                  %v287 = vld [vmem:[%s275 + $0x50] sm:$0xff]
                  %288 = vst [vmem:[%s276 + $0x28] sm:$0xff] %v287
                  %v289 = vld [vmem:[%s275 + $0x60] sm:$0xff]
                  %290 = vst [vmem:[%s276 + $0x30] sm:$0xff] %v289
                  %v291 = vld [vmem:[%s275 + $0x70] sm:$0xff]
                  %292 = vst [vmem:[%s276 + $0x38] sm:$0xff] %v291
                  %v293 = vld [vmem:[%s275 + $0x80] sm:$0xff]
                  %294 = vst [vmem:[%s276 + $0x40] sm:$0xff] %v293
                  %v295 = vld [vmem:[%s275 + $0x90] sm:$0xff]
                  %296 = vst [vmem:[%s276 + $0x48] sm:$0xff] %v295
                  %v297 = vld [vmem:[%s275 + $0xa0] sm:$0xff]
                  %298 = vst [vmem:[%s276 + $0x50] sm:$0xff] %v297
                  %v299 = vld [vmem:[%s275 + $0xb0] sm:$0xff]
                  %300 = vst [vmem:[%s276 + $0x58] sm:$0xff] %v299
                  %v301 = vld [vmem:[%s275 + $0xc0] sm:$0xff]
                  %302 = vst [vmem:[%s276 + $0x60] sm:$0xff] %v301
                  %v303 = vld [vmem:[%s275 + $0xd0] sm:$0xff]
                  %304 = vst [vmem:[%s276 + $0x68] sm:$0xff] %v303
                  %v305 = vld [vmem:[%s275 + $0xe0] sm:$0xff]
                  %306 = vst [vmem:[%s276 + $0x70] sm:$0xff] %v305
                  %v307 = vld [vmem:[%s275 + $0xf0] sm:$0xff]
                  %308 = vst [vmem:[%s276 + $0x78] sm:$0xff] %v307
                  %v309 = vld [vmem:[%s275 + $0x100] sm:$0xff]
                  %310 = vst [vmem:[%s276 + $0x80] sm:$0xff] %v309
                  %v311 = vld [vmem:[%s275 + $0x110] sm:$0xff]
                  %312 = vst [vmem:[%s276 + $0x88] sm:$0xff] %v311
                  %v313 = vld [vmem:[%s275 + $0x120] sm:$0xff]
                  %314 = vst [vmem:[%s276 + $0x90] sm:$0xff] %v313
                  %v315 = vld [vmem:[%s275 + $0x130] sm:$0xff]
                  %316 = vst [vmem:[%s276 + $0x98] sm:$0xff] %v315
                  %v317 = vld [vmem:[%s275 + $0x140] sm:$0xff]
                  %318 = vst [vmem:[%s276 + $0xa0] sm:$0xff] %v317
                  %v319 = vld [vmem:[%s275 + $0x150] sm:$0xff]
                  %320 = vst [vmem:[%s276 + $0xa8] sm:$0xff] %v319
                  %v321 = vld [vmem:[%s275 + $0x160] sm:$0xff]
                  %322 = vst [vmem:[%s276 + $0xb0] sm:$0xff] %v321
                  %v323 = vld [vmem:[%s275 + $0x170] sm:$0xff]
                  %324 = vst [vmem:[%s276 + $0xb8] sm:$0xff] %v323
                  %v325 = vld [vmem:[%s275 + $0x180] sm:$0xff]
                  %326 = vst [vmem:[%s276 + $0xc0] sm:$0xff] %v325
                  %v327 = vld [vmem:[%s275 + $0x190] sm:$0xff]
                  %328 = vst [vmem:[%s276 + $0xc8] sm:$0xff] %v327
                  %v329 = vld [vmem:[%s275 + $0x1a0] sm:$0xff]
                  %330 = vst [vmem:[%s276 + $0xd0] sm:$0xff] %v329
                  %v331 = vld [vmem:[%s275 + $0x1b0] sm:$0xff]
                  %332 = vst [vmem:[%s276 + $0xd8] sm:$0xff] %v331
                  %v333 = vld [vmem:[%s275 + $0x1c0] sm:$0xff]
                  %334 = vst [vmem:[%s276 + $0xe0] sm:$0xff] %v333
                  %v335 = vld [vmem:[%s275 + $0x1d0] sm:$0xff]
                  %336 = vst [vmem:[%s276 + $0xe8] sm:$0xff] %v335
                  %v337 = vld [vmem:[%s275 + $0x1e0] sm:$0xff]
                  %338 = vst [vmem:[%s276 + $0xf0] sm:$0xff] %v337
                  %v339 = vld [vmem:[%s275 + $0x1f0] sm:$0xff]
                  %340 = vst [vmem:[%s276 + $0xf8] sm:$0xff] %v339
                $region48: #{vgcl_forward.3} parent=42 // loop_footer
                  %s274 = sadd.s32 1, %s270
                $region49: #{vgcl_forward.3} parent=42 // loop_footer_branch
                  %269 = sbr.rel target = $region45
                $region50: #{vgcl_forward.3} parent=42 // loop_exit
                  _
              $region43: #{vgcl_forward.3} parent=27 // pred_fallthru
                _
              // Predicated region
              $region51: #{vgcl_forward.3} parent=27 // pred_check
                _
              $region52: #{vgcl_forward.3} parent=27 // pred_check_branch
                %342 = sbr.rel target = $region54
              $region53: #{vgcl_forward.3} parent=27 // pred_region
                _
              $region54: #{vgcl_forward.3} parent=27 // pred_fallthru
                _
            $region28: #{vgcl_forward.3} parent=23 // pred_fallthru
              _
            // Predicated region
            $region29: #{vgcl_forward.3} parent=23 // pred_check
              _
            $region30: #{vgcl_forward.3} parent=23 // pred_check_branch
              %192 = sbr.rel target = $region32
            $region31: #{vgcl_forward.3} parent=23 // pred_region
              %s194 = ssub.s32 256, 1
              loop: start=0, step=1, limit=1
              $region33: #{vgcl_forward.3} parent=31 // loop_pre_header
                _
              $region34: #{vgcl_forward.3} parent=31 // loop_header
                %s196 = sphi 0, %s200
                %p197 = scmp.ge.s32.totalorder %s196, 1
                %s201 = sphi %s186, %s186
                %s202 = sphi %s180, %s180
              $region35: #{vgcl_forward.3} parent=31 // loop_header_branch
                %199 = sbr.rel (%p197) target = $region39
              $region36: #{vgcl_forward.3} parent=31 // loop_body
                %v203 = vld [vmem:[%s201] sm:%s194]
                %204 = vst [vmem:[%s202] sm:%s194] %v203
                %v205 = vld [vmem:[%s201 + $0x10] sm:%s194]
                %206 = vst [vmem:[%s202 + $0x8] sm:%s194] %v205
                %v207 = vld [vmem:[%s201 + $0x20] sm:%s194]
                %208 = vst [vmem:[%s202 + $0x10] sm:%s194] %v207
                %v209 = vld [vmem:[%s201 + $0x30] sm:%s194]
                %210 = vst [vmem:[%s202 + $0x18] sm:%s194] %v209
                %v211 = vld [vmem:[%s201 + $0x40] sm:%s194]
                %212 = vst [vmem:[%s202 + $0x20] sm:%s194] %v211
                %v213 = vld [vmem:[%s201 + $0x50] sm:%s194]
                %214 = vst [vmem:[%s202 + $0x28] sm:%s194] %v213
                %v215 = vld [vmem:[%s201 + $0x60] sm:%s194]
                %216 = vst [vmem:[%s202 + $0x30] sm:%s194] %v215
                %v217 = vld [vmem:[%s201 + $0x70] sm:%s194]
                %218 = vst [vmem:[%s202 + $0x38] sm:%s194] %v217
                %v219 = vld [vmem:[%s201 + $0x80] sm:%s194]
                %220 = vst [vmem:[%s202 + $0x40] sm:%s194] %v219
                %v221 = vld [vmem:[%s201 + $0x90] sm:%s194]
                %222 = vst [vmem:[%s202 + $0x48] sm:%s194] %v221
                %v223 = vld [vmem:[%s201 + $0xa0] sm:%s194]
                %224 = vst [vmem:[%s202 + $0x50] sm:%s194] %v223
                %v225 = vld [vmem:[%s201 + $0xb0] sm:%s194]
                %226 = vst [vmem:[%s202 + $0x58] sm:%s194] %v225
                %v227 = vld [vmem:[%s201 + $0xc0] sm:%s194]
                %228 = vst [vmem:[%s202 + $0x60] sm:%s194] %v227
                %v229 = vld [vmem:[%s201 + $0xd0] sm:%s194]
                %230 = vst [vmem:[%s202 + $0x68] sm:%s194] %v229
                %v231 = vld [vmem:[%s201 + $0xe0] sm:%s194]
                %232 = vst [vmem:[%s202 + $0x70] sm:%s194] %v231
                %v233 = vld [vmem:[%s201 + $0xf0] sm:%s194]
                %234 = vst [vmem:[%s202 + $0x78] sm:%s194] %v233
                %v235 = vld [vmem:[%s201 + $0x100] sm:%s194]
                %236 = vst [vmem:[%s202 + $0x80] sm:%s194] %v235
                %v237 = vld [vmem:[%s201 + $0x110] sm:%s194]
                %238 = vst [vmem:[%s202 + $0x88] sm:%s194] %v237
                %v239 = vld [vmem:[%s201 + $0x120] sm:%s194]
                %240 = vst [vmem:[%s202 + $0x90] sm:%s194] %v239
                %v241 = vld [vmem:[%s201 + $0x130] sm:%s194]
                %242 = vst [vmem:[%s202 + $0x98] sm:%s194] %v241
                %v243 = vld [vmem:[%s201 + $0x140] sm:%s194]
                %244 = vst [vmem:[%s202 + $0xa0] sm:%s194] %v243
                %v245 = vld [vmem:[%s201 + $0x150] sm:%s194]
                %246 = vst [vmem:[%s202 + $0xa8] sm:%s194] %v245
                %v247 = vld [vmem:[%s201 + $0x160] sm:%s194]
                %248 = vst [vmem:[%s202 + $0xb0] sm:%s194] %v247
                %v249 = vld [vmem:[%s201 + $0x170] sm:%s194]
                %250 = vst [vmem:[%s202 + $0xb8] sm:%s194] %v249
                %v251 = vld [vmem:[%s201 + $0x180] sm:%s194]
                %252 = vst [vmem:[%s202 + $0xc0] sm:%s194] %v251
                %v253 = vld [vmem:[%s201 + $0x190] sm:%s194]
                %254 = vst [vmem:[%s202 + $0xc8] sm:%s194] %v253
                %v255 = vld [vmem:[%s201 + $0x1a0] sm:%s194]
                %256 = vst [vmem:[%s202 + $0xd0] sm:%s194] %v255
                %v257 = vld [vmem:[%s201 + $0x1b0] sm:%s194]
                %258 = vst [vmem:[%s202 + $0xd8] sm:%s194] %v257
                %v259 = vld [vmem:[%s201 + $0x1c0] sm:%s194]
                %260 = vst [vmem:[%s202 + $0xe0] sm:%s194] %v259
                %v261 = vld [vmem:[%s201 + $0x1d0] sm:%s194]
                %262 = vst [vmem:[%s202 + $0xe8] sm:%s194] %v261
                %v263 = vld [vmem:[%s201 + $0x1e0] sm:%s194]
                %264 = vst [vmem:[%s202 + $0xf0] sm:%s194] %v263
                %v265 = vld [vmem:[%s201 + $0x1f0] sm:%s194]
                %266 = vst [vmem:[%s202 + $0xf8] sm:%s194] %v265
              $region37: #{vgcl_forward.3} parent=31 // loop_footer
                %s200 = sadd.s32 1, %s196
              $region38: #{vgcl_forward.3} parent=31 // loop_footer_branch
                %195 = sbr.rel target = $region34
              $region39: #{vgcl_forward.3} parent=31 // loop_exit
                _
            $region32: #{vgcl_forward.3} parent=23 // pred_fallthru
              _
          $region24: #{vgcl_forward.3} parent=19 // pred_fallthru
            _
          %343 = vnop
        $region20: #{vgcl_forward.3} parent=15 // pred_fallthru
          _
        // Predicated region
        $region55: #{vgcl_forward.3} parent=15 // pred_check
          %p344 = pneg %p71
        $region56: #{vgcl_forward.3} parent=15 // pred_check_branch
          %346 = sbr.rel (%p344) target = $region58
        $region57: #{vgcl_forward.3} parent=15 // pred_region
          %s347 = smul.u32 32, %s19
          %p348 = scmp.lt.s32.totalorder %s347, 63
          %s349 = scalar_select %p348, %s347, 63
          %s350 = smul.addr %s349, 8
          %s351 = scalar_lea.vmem %s1, %s350
          %s352 = smul.u32 32, %s19
        $region58: #{vgcl_forward.3} parent=15 // pred_fallthru
          _
        // Predicated region
        $region59: #{vgcl_forward.3} parent=15 // pred_check
          %p353 = pneg %p97
        $region60: #{vgcl_forward.3} parent=15 // pred_check_branch
          %355 = sbr.rel (%p353) target = $region62
        $region61: #{vgcl_forward.3} parent=15 // pred_region
          %s356 = smul.u32 32, %s18
          %p357 = scmp.lt.s32.totalorder %s356, 63
          %s358 = scalar_select %p357, %s356, 63
          %s359 = smul.addr %s358, 8
          %s360 = scalar_lea.vmem %s2, %s359
          %s361 = smul.u32 32, %s18
        $region62: #{vgcl_forward.3} parent=15 // pred_fallthru
          _
      $region16: #{vgcl_forward.3} parent=5 // pred_fallthru
        _
      %p362 = scmp.le.s32.totalorder 1, %s11
      %p363 = scmp.lt.s32.totalorder %s11, 5
      %p364 = pnand %p362, %p363
      %p365 = pneg %p364
      // Predicated region
      $region63: #{vgcl_forward.3} parent=5 // pred_check
        _
      $region64: #{vgcl_forward.3} parent=5 // pred_check_branch
        %367 = sbr.rel (%p364) target = $region66
      $region65: #{vgcl_forward.3} parent=5 // pred_region
        %s368 = ssub.s32 %s11, 1
        %s369 = sand.u32 %s38, 1
        %s370 = sand.u32 %s38, 1
        %s371 = smul.addr %s370, 256
        %s372 = scalar_lea.vmem [#allocation3], %s371
        // Predicated region
        $region67: #{vgcl_forward.3} parent=65 // pred_check
          %p373 = pneg %p51
        $region68: #{vgcl_forward.3} parent=65 // pred_check_branch
          %375 = sbr.rel (%p373) target = $region70
        $region69: #{vgcl_forward.3} parent=65 // pred_region
          _
        $region70: #{vgcl_forward.3} parent=65 // pred_fallthru
          _
        %s376 = sand.u32 %s38, 1
        %s377 = sand.u32 %s38, 1
        %s378 = smul.addr %s377, 256
        %s379 = scalar_lea.vmem [#allocation3], %s378
        %p380 = pneg %p51
        %p381 = pneg %p48
        %s382 = smul.u32 32, %s21
        %p383 = scmp.lt.s32.totalorder %s382, 63
        %s384 = scalar_select %p383, %s382, 63
        %s385 = smul.addr %s384, 8
        %s386 = scalar_lea.vmem %s1, %s385
        %p387 = pneg %p77
        %p388 = pneg %p74
        %s389 = smul.u32 32, %s20
        %p390 = scmp.lt.s32.totalorder %s389, 63
        %s391 = scalar_select %p390, %s389, 63
        %s392 = smul.addr %s391, 8
        %s393 = scalar_lea.vmem %s2, %s392
        %p394 = pneg %p103
        %p395 = pneg %p100
        %p396 = pneg %p129
        %p397 = pneg %p126
        %s398 = smul.u32 32, %s20
        %p399 = scmp.lt.s32.totalorder %s398, 63
        %s400 = scalar_select %p399, %s398, 63
        %s401 = smul.addr %s400, 8
        %s402 = scalar_lea.vmem %s3, %s401
        %p403 = pneg %p155
        %p404 = pneg %p152
        %s405 = smul.u32 32, %s20
        %p406 = scmp.lt.s32.totalorder %s405, 63
        %s407 = scalar_select %p406, %s405, 63
        %s408 = smul.addr %s407, 8
        %s409 = scalar_lea.vmem %s4, %s408
        %s410 = smul.u32 32, %s20
        %s411 = smul.u32 2, %s21
        %s412 = smul.u32 32, %s21
        %p413 = scmp.lt.s32.totalorder %s412, 63
        %s414 = scalar_select %p413, %s412, 63
        %s415 = smul.addr %s414, 8
        %s416 = scalar_lea.vmem %s1, %s415
        %s417 = smul.u32 32, %s21
        %s418 = smul.u32 32, %s20
        %p419 = scmp.lt.s32.totalorder %s418, 63
        %s420 = scalar_select %p419, %s418, 63
        %s421 = smul.addr %s420, 8
        %s422 = scalar_lea.vmem %s2, %s421
        %s423 = smul.u32 32, %s20
        %s424 = smul.u32 32, %s20
        %p425 = scmp.lt.s32.totalorder %s424, 63
        %s426 = scalar_select %p425, %s424, 63
        %s427 = smul.addr %s426, 8
        %s428 = scalar_lea.vmem %s3, %s427
        %s429 = smul.u32 32, %s20
        %s430 = smul.u32 32, %s20
        %p431 = scmp.lt.s32.totalorder %s430, 63
        %s432 = scalar_select %p431, %s430, 63
        %s433 = smul.addr %s432, 8
        %s434 = scalar_lea.vmem %s4, %s433
        %s435 = smul.u32 32, %s20
        %p437 = scmp.eq.s32.totalorder %s21, 0
        // Predicated region
        $region71: #{vgcl_forward.3} parent=65 // pred_check
          %p438 = pneg %p437
        $region72: #{vgcl_forward.3} parent=65 // pred_check_branch
          %440 = sbr.rel (%p438) target = $region74
        $region73: #{vgcl_forward.3} parent=65 // pred_region
          %vm441 = vcmask 261120
          %442 = vst.msk [vmem:[#allocation2] sm:$0xff] %vm441, 0.0
          %443 = vst.msk [vmem:[#allocation2 + $0x8] sm:$0xff] %vm441, 0.0
          %444 = vst.msk [vmem:[#allocation2 + $0x10] sm:$0xff] %vm441, 0.0
          %445 = vst.msk [vmem:[#allocation2 + $0x18] sm:$0xff] %vm441, 0.0
          %446 = vst.msk [vmem:[#allocation2 + $0x20] sm:$0xff] %vm441, 0.0
          %447 = vst.msk [vmem:[#allocation2 + $0x28] sm:$0xff] %vm441, 0.0
          %448 = vst.msk [vmem:[#allocation2 + $0x30] sm:$0xff] %vm441, 0.0
          %449 = vst.msk [vmem:[#allocation2 + $0x38] sm:$0xff] %vm441, 0.0
          %450 = vst.msk [vmem:[#allocation2 + $0x40] sm:$0xff] %vm441, 0.0
          %451 = vst.msk [vmem:[#allocation2 + $0x48] sm:$0xff] %vm441, 0.0
          %452 = vst.msk [vmem:[#allocation2 + $0x50] sm:$0xff] %vm441, 0.0
          %453 = vst.msk [vmem:[#allocation2 + $0x58] sm:$0xff] %vm441, 0.0
          %454 = vst.msk [vmem:[#allocation2 + $0x60] sm:$0xff] %vm441, 0.0
          %455 = vst.msk [vmem:[#allocation2 + $0x68] sm:$0xff] %vm441, 0.0
          %456 = vst.msk [vmem:[#allocation2 + $0x70] sm:$0xff] %vm441, 0.0
          %457 = vst.msk [vmem:[#allocation2 + $0x78] sm:$0xff] %vm441, 0.0
          %458 = vst.msk [vmem:[#allocation2 + $0x80] sm:$0xff] %vm441, 0.0
          %459 = vst.msk [vmem:[#allocation2 + $0x88] sm:$0xff] %vm441, 0.0
          %460 = vst.msk [vmem:[#allocation2 + $0x90] sm:$0xff] %vm441, 0.0
          %461 = vst.msk [vmem:[#allocation2 + $0x98] sm:$0xff] %vm441, 0.0
          %462 = vst.msk [vmem:[#allocation2 + $0xa0] sm:$0xff] %vm441, 0.0
          %463 = vst.msk [vmem:[#allocation2 + $0xa8] sm:$0xff] %vm441, 0.0
          %464 = vst.msk [vmem:[#allocation2 + $0xb0] sm:$0xff] %vm441, 0.0
          %465 = vst.msk [vmem:[#allocation2 + $0xb8] sm:$0xff] %vm441, 0.0
          %466 = vst.msk [vmem:[#allocation2 + $0xc0] sm:$0xff] %vm441, 0.0
          %467 = vst.msk [vmem:[#allocation2 + $0xc8] sm:$0xff] %vm441, 0.0
          %468 = vst.msk [vmem:[#allocation2 + $0xd0] sm:$0xff] %vm441, 0.0
          %469 = vst.msk [vmem:[#allocation2 + $0xd8] sm:$0xff] %vm441, 0.0
          %470 = vst.msk [vmem:[#allocation2 + $0xe0] sm:$0xff] %vm441, 0.0
          %471 = vst.msk [vmem:[#allocation2 + $0xe8] sm:$0xff] %vm441, 0.0
          %472 = vst.msk [vmem:[#allocation2 + $0xf0] sm:$0xff] %vm441, 0.0
          %473 = vst.msk [vmem:[#allocation2 + $0xf8] sm:$0xff] %vm441, 0.0
        $region74: #{vgcl_forward.3} parent=65 // pred_fallthru
          _
        %v474 = vld [vmem:[#allocation2] sm:$0xff]
        %v475 = vld [vmem:[#allocation2 + $0x8] sm:$0xff]
        %v476 = vld [vmem:[#allocation2 + $0x10] sm:$0xff]
        %v477 = vld [vmem:[#allocation2 + $0x18] sm:$0xff]
        %v478 = vld [vmem:[#allocation2 + $0x20] sm:$0xff]
        %v479 = vld [vmem:[#allocation2 + $0x28] sm:$0xff]
        %v480 = vld [vmem:[#allocation2 + $0x30] sm:$0xff]
        %v481 = vld [vmem:[#allocation2 + $0x38] sm:$0xff]
        %v482 = vld [vmem:[#allocation2 + $0x40] sm:$0xff]
        %v483 = vld [vmem:[#allocation2 + $0x48] sm:$0xff]
        %v484 = vld [vmem:[#allocation2 + $0x50] sm:$0xff]
        %v485 = vld [vmem:[#allocation2 + $0x58] sm:$0xff]
        %v486 = vld [vmem:[#allocation2 + $0x60] sm:$0xff]
        %v487 = vld [vmem:[#allocation2 + $0x68] sm:$0xff]
        %v488 = vld [vmem:[#allocation2 + $0x70] sm:$0xff]
        %v489 = vld [vmem:[#allocation2 + $0x78] sm:$0xff]
        %v490 = vld [vmem:[#allocation2 + $0x80] sm:$0xff]
        %v491 = vld [vmem:[#allocation2 + $0x88] sm:$0xff]
        %v492 = vld [vmem:[#allocation2 + $0x90] sm:$0xff]
        %v493 = vld [vmem:[#allocation2 + $0x98] sm:$0xff]
        %v494 = vld [vmem:[#allocation2 + $0xa0] sm:$0xff]
        %v495 = vld [vmem:[#allocation2 + $0xa8] sm:$0xff]
        %v496 = vld [vmem:[#allocation2 + $0xb0] sm:$0xff]
        %v497 = vld [vmem:[#allocation2 + $0xb8] sm:$0xff]
        %v498 = vld [vmem:[#allocation2 + $0xc0] sm:$0xff]
        %v499 = vld [vmem:[#allocation2 + $0xc8] sm:$0xff]
        %v500 = vld [vmem:[#allocation2 + $0xd0] sm:$0xff]
        %v501 = vld [vmem:[#allocation2 + $0xd8] sm:$0xff]
        %v502 = vld [vmem:[#allocation2 + $0xe0] sm:$0xff]
        %v503 = vld [vmem:[#allocation2 + $0xe8] sm:$0xff]
        %v504 = vld [vmem:[#allocation2 + $0xf0] sm:$0xff]
        %v505 = vld [vmem:[#allocation2 + $0xf8] sm:$0xff]
        %v506 = vld [vmem:[%s372] sm:$0xff]
        %v507 = vld [vmem:[%s372 + $0x8] sm:$0xff]
        %v508 = vld [vmem:[%s372 + $0x10] sm:$0xff]
        %v509 = vld [vmem:[%s372 + $0x18] sm:$0xff]
        %v510 = vld [vmem:[%s372 + $0x20] sm:$0xff]
        %v511 = vld [vmem:[%s372 + $0x28] sm:$0xff]
        %v512 = vld [vmem:[%s372 + $0x30] sm:$0xff]
        %v513 = vld [vmem:[%s372 + $0x38] sm:$0xff]
        %v514 = vld [vmem:[%s372 + $0x40] sm:$0xff]
        %v515 = vld [vmem:[%s372 + $0x48] sm:$0xff]
        %v516 = vld [vmem:[%s372 + $0x50] sm:$0xff]
        %v517 = vld [vmem:[%s372 + $0x58] sm:$0xff]
        %v518 = vld [vmem:[%s372 + $0x60] sm:$0xff]
        %v519 = vld [vmem:[%s372 + $0x68] sm:$0xff]
        %v520 = vld [vmem:[%s372 + $0x70] sm:$0xff]
        %v521 = vld [vmem:[%s372 + $0x78] sm:$0xff]
        %v522 = vld [vmem:[%s372 + $0x80] sm:$0xff]
        %v523 = vld [vmem:[%s372 + $0x88] sm:$0xff]
        %v524 = vld [vmem:[%s372 + $0x90] sm:$0xff]
        %v525 = vld [vmem:[%s372 + $0x98] sm:$0xff]
        %v526 = vld [vmem:[%s372 + $0xa0] sm:$0xff]
        %v527 = vld [vmem:[%s372 + $0xa8] sm:$0xff]
        %v528 = vld [vmem:[%s372 + $0xb0] sm:$0xff]
        %v529 = vld [vmem:[%s372 + $0xb8] sm:$0xff]
        %v530 = vld [vmem:[%s372 + $0xc0] sm:$0xff]
        %v531 = vld [vmem:[%s372 + $0xc8] sm:$0xff]
        %v532 = vld [vmem:[%s372 + $0xd0] sm:$0xff]
        %v533 = vld [vmem:[%s372 + $0xd8] sm:$0xff]
        %v534 = vld [vmem:[%s372 + $0xe0] sm:$0xff]
        %v535 = vld [vmem:[%s372 + $0xe8] sm:$0xff]
        %v536 = vld [vmem:[%s372 + $0xf0] sm:$0xff]
        %v537 = vld [vmem:[%s372 + $0xf8] sm:$0xff]
        %v538 = vld [vmem:[%s416] sm:$0xff]
        %v539 = vld [vmem:[%s416 + $0x8] sm:$0xff]
        %v540 = vld [vmem:[%s416 + $0x10] sm:$0xff]
        %v541 = vld [vmem:[%s416 + $0x18] sm:$0xff]
        %v542 = vld [vmem:[%s416 + $0x20] sm:$0xff]
        %v543 = vld [vmem:[%s416 + $0x28] sm:$0xff]
        %v544 = vld [vmem:[%s416 + $0x30] sm:$0xff]
        %v545 = vld [vmem:[%s416 + $0x38] sm:$0xff]
        %v546 = vld [vmem:[%s416 + $0x40] sm:$0xff]
        %v547 = vld [vmem:[%s416 + $0x48] sm:$0xff]
        %v548 = vld [vmem:[%s416 + $0x50] sm:$0xff]
        %v549 = vld [vmem:[%s416 + $0x58] sm:$0xff]
        %v550 = vld [vmem:[%s416 + $0x60] sm:$0xff]
        %v551 = vld [vmem:[%s416 + $0x68] sm:$0xff]
        %v552 = vld [vmem:[%s416 + $0x70] sm:$0xff]
        %v553 = vld [vmem:[%s416 + $0x78] sm:$0xff]
        %v554 = vld [vmem:[%s416 + $0x80] sm:$0xff]
        %v555 = vld [vmem:[%s416 + $0x88] sm:$0xff]
        %v556 = vld [vmem:[%s416 + $0x90] sm:$0xff]
        %v557 = vld [vmem:[%s416 + $0x98] sm:$0xff]
        %v558 = vld [vmem:[%s416 + $0xa0] sm:$0xff]
        %v559 = vld [vmem:[%s416 + $0xa8] sm:$0xff]
        %v560 = vld [vmem:[%s416 + $0xb0] sm:$0xff]
        %v561 = vld [vmem:[%s416 + $0xb8] sm:$0xff]
        %v562 = vld [vmem:[%s416 + $0xc0] sm:$0xff]
        %v563 = vld [vmem:[%s416 + $0xc8] sm:$0xff]
        %v564 = vld [vmem:[%s416 + $0xd0] sm:$0xff]
        %v565 = vld [vmem:[%s416 + $0xd8] sm:$0xff]
        %v566 = vld [vmem:[%s416 + $0xe0] sm:$0xff]
        %v567 = vld [vmem:[%s416 + $0xe8] sm:$0xff]
        %v568 = vld [vmem:[%s416 + $0xf0] sm:$0xff]
        %v569 = vld [vmem:[%s416 + $0xf8] sm:$0xff]
        %v570 = vpack.c.bf16 %v539, %v538
        %v571 = vpack.c.bf16 %v541, %v540
        %v572 = vpack.c.bf16 %v543, %v542
        %v573 = vpack.c.bf16 %v545, %v544
        %v574 = vpack.c.bf16 %v547, %v546
        %v575 = vpack.c.bf16 %v549, %v548
        %v576 = vpack.c.bf16 %v551, %v550
        %v577 = vpack.c.bf16 %v553, %v552
        %v578 = vpack.c.bf16 %v555, %v554
        %v579 = vpack.c.bf16 %v557, %v556
        %v580 = vpack.c.bf16 %v559, %v558
        %v581 = vpack.c.bf16 %v561, %v560
        %v582 = vpack.c.bf16 %v563, %v562
        %v583 = vpack.c.bf16 %v565, %v564
        %v584 = vpack.c.bf16 %v567, %v566
        %v585 = vpack.c.bf16 %v569, %v568
        %v618 = vunpack.c.l.b16 %v506
        %v619 = vunpack.c.h.b16 %v506
        %v620 = vunpack.c.l.b16 %v507
        %v621 = vunpack.c.h.b16 %v507
        %v622 = vunpack.c.l.b16 %v508
        %v623 = vunpack.c.h.b16 %v508
        %v624 = vunpack.c.l.b16 %v509
        %v625 = vunpack.c.h.b16 %v509
        %v626 = vunpack.c.l.b16 %v510
        %v627 = vunpack.c.h.b16 %v510
        %v628 = vunpack.c.l.b16 %v511
        %v629 = vunpack.c.h.b16 %v511
        %v630 = vunpack.c.l.b16 %v512
        %v631 = vunpack.c.h.b16 %v512
        %v632 = vunpack.c.l.b16 %v513
        %v633 = vunpack.c.h.b16 %v513
        %v634 = vunpack.c.l.b16 %v514
        %v635 = vunpack.c.h.b16 %v514
        %v636 = vunpack.c.l.b16 %v515
        %v637 = vunpack.c.h.b16 %v515
        %v638 = vunpack.c.l.b16 %v516
        %v639 = vunpack.c.h.b16 %v516
        %v640 = vunpack.c.l.b16 %v517
        %v641 = vunpack.c.h.b16 %v517
        %v642 = vunpack.c.l.b16 %v518
        %v643 = vunpack.c.h.b16 %v518
        %v644 = vunpack.c.l.b16 %v519
        %v645 = vunpack.c.h.b16 %v519
        %v646 = vunpack.c.l.b16 %v520
        %v647 = vunpack.c.h.b16 %v520
        %v648 = vunpack.c.l.b16 %v521
        %v649 = vunpack.c.h.b16 %v521
        %v650 = vunpack.c.l.b16 %v522
        %v651 = vunpack.c.h.b16 %v522
        %v652 = vunpack.c.l.b16 %v523
        %v653 = vunpack.c.h.b16 %v523
        %v654 = vunpack.c.l.b16 %v524
        %v655 = vunpack.c.h.b16 %v524
        %v656 = vunpack.c.l.b16 %v525
        %v657 = vunpack.c.h.b16 %v525
        %v658 = vunpack.c.l.b16 %v526
        %v659 = vunpack.c.h.b16 %v526
        %v660 = vunpack.c.l.b16 %v527
        %v661 = vunpack.c.h.b16 %v527
        %v662 = vunpack.c.l.b16 %v528
        %v663 = vunpack.c.h.b16 %v528
        %v664 = vunpack.c.l.b16 %v529
        %v665 = vunpack.c.h.b16 %v529
        %v666 = vunpack.c.l.b16 %v530
        %v667 = vunpack.c.h.b16 %v530
        %v668 = vunpack.c.l.b16 %v531
        %v669 = vunpack.c.h.b16 %v531
        %v670 = vunpack.c.l.b16 %v532
        %v671 = vunpack.c.h.b16 %v532
        %v672 = vunpack.c.l.b16 %v533
        %v673 = vunpack.c.h.b16 %v533
        %v674 = vunpack.c.l.b16 %v534
        %v675 = vunpack.c.h.b16 %v534
        %v676 = vunpack.c.l.b16 %v535
        %v677 = vunpack.c.h.b16 %v535
        %v678 = vunpack.c.l.b16 %v536
        %v679 = vunpack.c.h.b16 %v536
        %v680 = vunpack.c.l.b16 %v537
        %v681 = vunpack.c.h.b16 %v537
        %v682 = vpack.c.b16 %v620, %v618
        %v683 = vpack.c.b16 %v621, %v619
        %v684 = vpack.c.b16 %v624, %v622
        %v685 = vpack.c.b16 %v625, %v623
        %v686 = vpack.c.b16 %v628, %v626
        %v687 = vpack.c.b16 %v629, %v627
        %v688 = vpack.c.b16 %v632, %v630
        %v689 = vpack.c.b16 %v633, %v631
        %v690 = vpack.c.b16 %v636, %v634
        %v691 = vpack.c.b16 %v637, %v635
        %v692 = vpack.c.b16 %v640, %v638
        %v693 = vpack.c.b16 %v641, %v639
        %v694 = vpack.c.b16 %v644, %v642
        %v695 = vpack.c.b16 %v645, %v643
        %v696 = vpack.c.b16 %v648, %v646
        %v697 = vpack.c.b16 %v649, %v647
        %v698 = vpack.c.b16 %v652, %v650
        %v699 = vpack.c.b16 %v653, %v651
        %v700 = vpack.c.b16 %v656, %v654
        %v701 = vpack.c.b16 %v657, %v655
        %v702 = vpack.c.b16 %v660, %v658
        %v703 = vpack.c.b16 %v661, %v659
        %v704 = vpack.c.b16 %v664, %v662
        %v705 = vpack.c.b16 %v665, %v663
        %v706 = vpack.c.b16 %v668, %v666
        %v707 = vpack.c.b16 %v669, %v667
        %v708 = vpack.c.b16 %v672, %v670
        %v709 = vpack.c.b16 %v673, %v671
        %v710 = vpack.c.b16 %v676, %v674
        %v711 = vpack.c.b16 %v677, %v675
        %v712 = vpack.c.b16 %v680, %v678
        %v713 = vpack.c.b16 %v681, %v679
        %746 = vmatprep.subr.bf16.mxu0 0
        %747 = vmatpush1.bf16.msra.mxu0 %v577
        %748 = vmatprep.subr.bf16.mxu0 0
        %749 = vmatpush1.bf16.msra.mxu0 %v576
        %750 = vmatprep.subr.bf16.mxu0 0
        %751 = vmatpush1.bf16.msra.mxu0 %v575
        %752 = vmatprep.subr.bf16.mxu0 0
        %753 = vmatpush1.bf16.msra.mxu0 %v574
        %754 = vmatprep.subr.bf16.mxu0 0
        %755 = vmatpush1.bf16.msra.mxu0 %v573
        %756 = vmatprep.subr.bf16.mxu0 0
        %757 = vmatpush1.bf16.msra.mxu0 %v572
        %758 = vmatprep.subr.bf16.mxu0 0
        %759 = vmatpush1.bf16.msra.mxu0 %v571
        %760 = vmatprep.subr.bf16.mxu0 0
        %761 = vmatpush1.bf16.msra.mxu0 %v570
        %762 = vmatprep.subr.bf16.mxu0 0
        %763 = vmatpush2.bf16.msra.mxu0 %v585
        %764 = vmatprep.subr.bf16.mxu0 0
        %765 = vmatpush2.bf16.msra.mxu0 %v584
        %766 = vmatprep.subr.bf16.mxu0 0
        %767 = vmatpush2.bf16.msra.mxu0 %v583
        %768 = vmatprep.subr.bf16.mxu0 0
        %769 = vmatpush2.bf16.msra.mxu0 %v582
        %770 = vmatprep.subr.bf16.mxu0 0
        %771 = vmatpush2.bf16.msra.mxu0 %v581
        %772 = vmatprep.subr.bf16.mxu0 0
        %773 = vmatpush2.bf16.msra.mxu0 %v580
        %774 = vmatprep.subr.bf16.mxu0 0
        %775 = vmatpush2.bf16.msra.mxu0 %v579
        %776 = vmatprep.subr.bf16.mxu0 0
        %777 = vmatpush2.bf16.msra.mxu0 %v578
        %778 = vmatprep.mubr.bf16.mxu0 %v683
        %779 = vmatmul.mubr.bf16.gmra.mxu0 %v682
        %v780 = vpop.f32.mrf.mxu0
        %v781 = vadd.f32 0.0, %v780
        %v782 = vpop.f32.mrf.mxu0
        %v783 = vpop.f32.mrf.mxu0
        %v784 = vadd.f32 0.0, %v783
        %v785 = vpop.f32.mrf.mxu0
        %786 = vmatprep.mubr.bf16.mxu0 %v685
        %787 = vmatmul.mubr.bf16.gmra.mxu0 %v684
        %v788 = vpop.f32.mrf.mxu0
        %v789 = vadd.f32 0.0, %v788
        %v790 = vpop.f32.mrf.mxu0
        %v791 = vpop.f32.mrf.mxu0
        %v792 = vadd.f32 0.0, %v791
        %v793 = vpop.f32.mrf.mxu0
        %794 = vmatprep.mubr.bf16.mxu0 %v687
        %795 = vmatmul.mubr.bf16.gmra.mxu0 %v686
        %v796 = vpop.f32.mrf.mxu0
        %v797 = vadd.f32 0.0, %v796
        %v798 = vpop.f32.mrf.mxu0
        %v799 = vpop.f32.mrf.mxu0
        %v800 = vadd.f32 0.0, %v799
        %v801 = vpop.f32.mrf.mxu0
        %802 = vmatprep.mubr.bf16.mxu0 %v689
        %803 = vmatmul.mubr.bf16.gmra.mxu0 %v688
        %v804 = vpop.f32.mrf.mxu0
        %v805 = vadd.f32 0.0, %v804
        %v806 = vpop.f32.mrf.mxu0
        %v807 = vpop.f32.mrf.mxu0
        %v808 = vadd.f32 0.0, %v807
        %v809 = vpop.f32.mrf.mxu0
        %810 = vmatprep.mubr.bf16.mxu0 %v691
        %811 = vmatmul.mubr.bf16.gmra.mxu0 %v690
        %v812 = vpop.f32.mrf.mxu0
        %v813 = vadd.f32 0.0, %v812
        %v814 = vpop.f32.mrf.mxu0
        %v815 = vpop.f32.mrf.mxu0
        %v816 = vadd.f32 0.0, %v815
        %v817 = vpop.f32.mrf.mxu0
        %818 = vmatprep.mubr.bf16.mxu0 %v693
        %819 = vmatmul.mubr.bf16.gmra.mxu0 %v692
        %v820 = vpop.f32.mrf.mxu0
        %v821 = vadd.f32 0.0, %v820
        %v822 = vpop.f32.mrf.mxu0
        %v823 = vpop.f32.mrf.mxu0
        %v824 = vadd.f32 0.0, %v823
        %v825 = vpop.f32.mrf.mxu0
        %826 = vmatprep.mubr.bf16.mxu0 %v695
        %827 = vmatmul.mubr.bf16.gmra.mxu0 %v694
        %v828 = vpop.f32.mrf.mxu0
        %v829 = vadd.f32 0.0, %v828
        %v830 = vpop.f32.mrf.mxu0
        %v831 = vpop.f32.mrf.mxu0
        %v832 = vadd.f32 0.0, %v831
        %v833 = vpop.f32.mrf.mxu0
        %834 = vmatprep.mubr.bf16.mxu0 %v697
        %835 = vmatmul.mubr.bf16.gmra.mxu0 %v696
        %v836 = vpop.f32.mrf.mxu0
        %v837 = vadd.f32 0.0, %v836
        %v838 = vpop.f32.mrf.mxu0
        %v839 = vpop.f32.mrf.mxu0
        %v840 = vadd.f32 0.0, %v839
        %v841 = vpop.f32.mrf.mxu0
        %842 = vmatprep.mubr.bf16.mxu0 %v699
        %843 = vmatmul.mubr.bf16.gmra.mxu0 %v698
        %v844 = vpop.f32.mrf.mxu0
        %v845 = vadd.f32 0.0, %v844
        %v846 = vpop.f32.mrf.mxu0
        %v847 = vpop.f32.mrf.mxu0
        %v848 = vadd.f32 0.0, %v847
        %v849 = vpop.f32.mrf.mxu0
        %850 = vmatprep.mubr.bf16.mxu0 %v701
        %851 = vmatmul.mubr.bf16.gmra.mxu0 %v700
        %v852 = vpop.f32.mrf.mxu0
        %v853 = vadd.f32 0.0, %v852
        %v854 = vpop.f32.mrf.mxu0
        %v855 = vpop.f32.mrf.mxu0
        %v856 = vadd.f32 0.0, %v855
        %v857 = vpop.f32.mrf.mxu0
        %858 = vmatprep.mubr.bf16.mxu0 %v703
        %859 = vmatmul.mubr.bf16.gmra.mxu0 %v702
        %v860 = vpop.f32.mrf.mxu0
        %v861 = vadd.f32 0.0, %v860
        %v862 = vpop.f32.mrf.mxu0
        %v863 = vpop.f32.mrf.mxu0
        %v864 = vadd.f32 0.0, %v863
        %v865 = vpop.f32.mrf.mxu0
        %866 = vmatprep.mubr.bf16.mxu0 %v705
        %867 = vmatmul.mubr.bf16.gmra.mxu0 %v704
        %v868 = vpop.f32.mrf.mxu0
        %v869 = vadd.f32 0.0, %v868
        %v870 = vpop.f32.mrf.mxu0
        %v871 = vpop.f32.mrf.mxu0
        %v872 = vadd.f32 0.0, %v871
        %v873 = vpop.f32.mrf.mxu0
        %874 = vmatprep.mubr.bf16.mxu0 %v707
        %875 = vmatmul.mubr.bf16.gmra.mxu0 %v706
        %v876 = vpop.f32.mrf.mxu0
        %v877 = vadd.f32 0.0, %v876
        %v878 = vpop.f32.mrf.mxu0
        %v879 = vpop.f32.mrf.mxu0
        %v880 = vadd.f32 0.0, %v879
        %v881 = vpop.f32.mrf.mxu0
        %882 = vmatprep.mubr.bf16.mxu0 %v709
        %883 = vmatmul.mubr.bf16.gmra.mxu0 %v708
        %v884 = vpop.f32.mrf.mxu0
        %v885 = vadd.f32 0.0, %v884
        %v886 = vpop.f32.mrf.mxu0
        %v887 = vpop.f32.mrf.mxu0
        %v888 = vadd.f32 0.0, %v887
        %v889 = vpop.f32.mrf.mxu0
        %890 = vmatprep.mubr.bf16.mxu0 %v711
        %891 = vmatmul.mubr.bf16.gmra.mxu0 %v710
        %v892 = vpop.f32.mrf.mxu0
        %v893 = vadd.f32 0.0, %v892
        %v894 = vpop.f32.mrf.mxu0
        %v895 = vpop.f32.mrf.mxu0
        %v896 = vadd.f32 0.0, %v895
        %v897 = vpop.f32.mrf.mxu0
        %898 = vmatprep.mubr.bf16.mxu0 %v713
        %899 = vmatmul.mubr.bf16.gmra.mxu0 %v712
        %v900 = vpop.f32.mrf.mxu0
        %v901 = vadd.f32 0.0, %v900
        %v902 = vpop.f32.mrf.mxu0
        %v903 = vpop.f32.mrf.mxu0
        %v904 = vadd.f32 0.0, %v903
        %v905 = vpop.f32.mrf.mxu0
        %906 = vdwg.mxu0
        %v907 = vadd.f32 %v474, %v781
        %v908 = vadd.f32 %v475, %v784
        %v909 = vadd.f32 %v476, %v789
        %v910 = vadd.f32 %v477, %v792
        %v911 = vadd.f32 %v478, %v797
        %v912 = vadd.f32 %v479, %v800
        %v913 = vadd.f32 %v480, %v805
        %v914 = vadd.f32 %v481, %v808
        %v915 = vadd.f32 %v482, %v813
        %v916 = vadd.f32 %v483, %v816
        %v917 = vadd.f32 %v484, %v821
        %v918 = vadd.f32 %v485, %v824
        %v919 = vadd.f32 %v486, %v829
        %v920 = vadd.f32 %v487, %v832
        %v921 = vadd.f32 %v488, %v837
        %v922 = vadd.f32 %v489, %v840
        %v923 = vadd.f32 %v490, %v845
        %v924 = vadd.f32 %v491, %v848
        %v925 = vadd.f32 %v492, %v853
        %v926 = vadd.f32 %v493, %v856
        %v927 = vadd.f32 %v494, %v861
        %v928 = vadd.f32 %v495, %v864
        %v929 = vadd.f32 %v496, %v869
        %v930 = vadd.f32 %v497, %v872
        %v931 = vadd.f32 %v498, %v877
        %v932 = vadd.f32 %v499, %v880
        %v933 = vadd.f32 %v500, %v885
        %v934 = vadd.f32 %v501, %v888
        %v935 = vadd.f32 %v502, %v893
        %v936 = vadd.f32 %v503, %v896
        %v937 = vadd.f32 %v504, %v901
        %v938 = vadd.f32 %v505, %v904
        %vm939 = vcmask 261120
        %940 = vst.msk [vmem:[#allocation2] sm:$0xff] %vm939, %v907
        %941 = vst.msk [vmem:[#allocation2 + $0x8] sm:$0xff] %vm939, %v908
        %942 = vst.msk [vmem:[#allocation2 + $0x10] sm:$0xff] %vm939, %v909
        %943 = vst.msk [vmem:[#allocation2 + $0x18] sm:$0xff] %vm939, %v910
        %944 = vst.msk [vmem:[#allocation2 + $0x20] sm:$0xff] %vm939, %v911
        %945 = vst.msk [vmem:[#allocation2 + $0x28] sm:$0xff] %vm939, %v912
        %946 = vst.msk [vmem:[#allocation2 + $0x30] sm:$0xff] %vm939, %v913
        %947 = vst.msk [vmem:[#allocation2 + $0x38] sm:$0xff] %vm939, %v914
        %948 = vst.msk [vmem:[#allocation2 + $0x40] sm:$0xff] %vm939, %v915
        %949 = vst.msk [vmem:[#allocation2 + $0x48] sm:$0xff] %vm939, %v916
        %950 = vst.msk [vmem:[#allocation2 + $0x50] sm:$0xff] %vm939, %v917
        %951 = vst.msk [vmem:[#allocation2 + $0x58] sm:$0xff] %vm939, %v918
        %952 = vst.msk [vmem:[#allocation2 + $0x60] sm:$0xff] %vm939, %v919
        %953 = vst.msk [vmem:[#allocation2 + $0x68] sm:$0xff] %vm939, %v920
        %954 = vst.msk [vmem:[#allocation2 + $0x70] sm:$0xff] %vm939, %v921
        %955 = vst.msk [vmem:[#allocation2 + $0x78] sm:$0xff] %vm939, %v922
        %956 = vst.msk [vmem:[#allocation2 + $0x80] sm:$0xff] %vm939, %v923
        %957 = vst.msk [vmem:[#allocation2 + $0x88] sm:$0xff] %vm939, %v924
        %958 = vst.msk [vmem:[#allocation2 + $0x90] sm:$0xff] %vm939, %v925
        %959 = vst.msk [vmem:[#allocation2 + $0x98] sm:$0xff] %vm939, %v926
        %960 = vst.msk [vmem:[#allocation2 + $0xa0] sm:$0xff] %vm939, %v927
        %961 = vst.msk [vmem:[#allocation2 + $0xa8] sm:$0xff] %vm939, %v928
        %962 = vst.msk [vmem:[#allocation2 + $0xb0] sm:$0xff] %vm939, %v929
        %963 = vst.msk [vmem:[#allocation2 + $0xb8] sm:$0xff] %vm939, %v930
        %964 = vst.msk [vmem:[#allocation2 + $0xc0] sm:$0xff] %vm939, %v931
        %965 = vst.msk [vmem:[#allocation2 + $0xc8] sm:$0xff] %vm939, %v932
        %966 = vst.msk [vmem:[#allocation2 + $0xd0] sm:$0xff] %vm939, %v933
        %967 = vst.msk [vmem:[#allocation2 + $0xd8] sm:$0xff] %vm939, %v934
        %968 = vst.msk [vmem:[#allocation2 + $0xe0] sm:$0xff] %vm939, %v935
        %969 = vst.msk [vmem:[#allocation2 + $0xe8] sm:$0xff] %vm939, %v936
        %970 = vst.msk [vmem:[#allocation2 + $0xf0] sm:$0xff] %vm939, %v937
        %971 = vst.msk [vmem:[#allocation2 + $0xf8] sm:$0xff] %vm939, %v938
        %p972 = scmp.eq.s32.totalorder %s21, 1
        // Predicated region
        $region75: #{vgcl_forward.3} parent=65 // pred_check
          %p973 = pneg %p972
        $region76: #{vgcl_forward.3} parent=65 // pred_check_branch
          %975 = sbr.rel (%p973) target = $region78
        $region77: #{vgcl_forward.3} parent=65 // pred_region
          %v976 = vld [vmem:[#allocation2] sm:$0xff]
          %v977 = vld [vmem:[#allocation2 + $0x8] sm:$0xff]
          %v978 = vld [vmem:[#allocation2 + $0x10] sm:$0xff]
          %v979 = vld [vmem:[#allocation2 + $0x18] sm:$0xff]
          %v980 = vld [vmem:[#allocation2 + $0x20] sm:$0xff]
          %v981 = vld [vmem:[#allocation2 + $0x28] sm:$0xff]
          %v982 = vld [vmem:[#allocation2 + $0x30] sm:$0xff]
          %v983 = vld [vmem:[#allocation2 + $0x38] sm:$0xff]
          %v984 = vld [vmem:[#allocation2 + $0x40] sm:$0xff]
          %v985 = vld [vmem:[#allocation2 + $0x48] sm:$0xff]
          %v986 = vld [vmem:[#allocation2 + $0x50] sm:$0xff]
          %v987 = vld [vmem:[#allocation2 + $0x58] sm:$0xff]
          %v988 = vld [vmem:[#allocation2 + $0x60] sm:$0xff]
          %v989 = vld [vmem:[#allocation2 + $0x68] sm:$0xff]
          %v990 = vld [vmem:[#allocation2 + $0x70] sm:$0xff]
          %v991 = vld [vmem:[#allocation2 + $0x78] sm:$0xff]
          %v992 = vld [vmem:[#allocation2 + $0x80] sm:$0xff]
          %v993 = vld [vmem:[#allocation2 + $0x88] sm:$0xff]
          %v994 = vld [vmem:[#allocation2 + $0x90] sm:$0xff]
          %v995 = vld [vmem:[#allocation2 + $0x98] sm:$0xff]
          %v996 = vld [vmem:[#allocation2 + $0xa0] sm:$0xff]
          %v997 = vld [vmem:[#allocation2 + $0xa8] sm:$0xff]
          %v998 = vld [vmem:[#allocation2 + $0xb0] sm:$0xff]
          %v999 = vld [vmem:[#allocation2 + $0xb8] sm:$0xff]
          %v1000 = vld [vmem:[#allocation2 + $0xc0] sm:$0xff]
          %v1001 = vld [vmem:[#allocation2 + $0xc8] sm:$0xff]
          %v1002 = vld [vmem:[#allocation2 + $0xd0] sm:$0xff]
          %v1003 = vld [vmem:[#allocation2 + $0xd8] sm:$0xff]
          %v1004 = vld [vmem:[#allocation2 + $0xe0] sm:$0xff]
          %v1005 = vld [vmem:[#allocation2 + $0xe8] sm:$0xff]
          %v1006 = vld [vmem:[#allocation2 + $0xf0] sm:$0xff]
          %v1007 = vld [vmem:[#allocation2 + $0xf8] sm:$0xff]
          %1008 = vst.msk [vmem:[%s428] sm:$0xff] %vm939, %v976
          %1009 = vst.msk [vmem:[%s428 + $0x8] sm:$0xff] %vm939, %v977
          %1010 = vst.msk [vmem:[%s428 + $0x10] sm:$0xff] %vm939, %v978
          %1011 = vst.msk [vmem:[%s428 + $0x18] sm:$0xff] %vm939, %v979
          %1012 = vst.msk [vmem:[%s428 + $0x20] sm:$0xff] %vm939, %v980
          %1013 = vst.msk [vmem:[%s428 + $0x28] sm:$0xff] %vm939, %v981
          %1014 = vst.msk [vmem:[%s428 + $0x30] sm:$0xff] %vm939, %v982
          %1015 = vst.msk [vmem:[%s428 + $0x38] sm:$0xff] %vm939, %v983
          %1016 = vst.msk [vmem:[%s428 + $0x40] sm:$0xff] %vm939, %v984
          %1017 = vst.msk [vmem:[%s428 + $0x48] sm:$0xff] %vm939, %v985
          %1018 = vst.msk [vmem:[%s428 + $0x50] sm:$0xff] %vm939, %v986
          %1019 = vst.msk [vmem:[%s428 + $0x58] sm:$0xff] %vm939, %v987
          %1020 = vst.msk [vmem:[%s428 + $0x60] sm:$0xff] %vm939, %v988
          %1021 = vst.msk [vmem:[%s428 + $0x68] sm:$0xff] %vm939, %v989
          %1022 = vst.msk [vmem:[%s428 + $0x70] sm:$0xff] %vm939, %v990
          %1023 = vst.msk [vmem:[%s428 + $0x78] sm:$0xff] %vm939, %v991
          %1024 = vst.msk [vmem:[%s428 + $0x80] sm:$0xff] %vm939, %v992
          %1025 = vst.msk [vmem:[%s428 + $0x88] sm:$0xff] %vm939, %v993
          %1026 = vst.msk [vmem:[%s428 + $0x90] sm:$0xff] %vm939, %v994
          %1027 = vst.msk [vmem:[%s428 + $0x98] sm:$0xff] %vm939, %v995
          %1028 = vst.msk [vmem:[%s428 + $0xa0] sm:$0xff] %vm939, %v996
          %1029 = vst.msk [vmem:[%s428 + $0xa8] sm:$0xff] %vm939, %v997
          %1030 = vst.msk [vmem:[%s428 + $0xb0] sm:$0xff] %vm939, %v998
          %1031 = vst.msk [vmem:[%s428 + $0xb8] sm:$0xff] %vm939, %v999
          %1032 = vst.msk [vmem:[%s428 + $0xc0] sm:$0xff] %vm939, %v1000
          %1033 = vst.msk [vmem:[%s428 + $0xc8] sm:$0xff] %vm939, %v1001
          %1034 = vst.msk [vmem:[%s428 + $0xd0] sm:$0xff] %vm939, %v1002
          %1035 = vst.msk [vmem:[%s428 + $0xd8] sm:$0xff] %vm939, %v1003
          %1036 = vst.msk [vmem:[%s428 + $0xe0] sm:$0xff] %vm939, %v1004
          %1037 = vst.msk [vmem:[%s428 + $0xe8] sm:$0xff] %vm939, %v1005
          %1038 = vst.msk [vmem:[%s428 + $0xf0] sm:$0xff] %vm939, %v1006
          %1039 = vst.msk [vmem:[%s428 + $0xf8] sm:$0xff] %vm939, %v1007
          %v1040 = vld [vmem:[%s422] sm:$0xff]
          %v1041 = vld [vmem:[%s422 + $0x8] sm:$0xff]
          %v1042 = vld [vmem:[%s422 + $0x10] sm:$0xff]
          %v1043 = vld [vmem:[%s422 + $0x18] sm:$0xff]
          %v1044 = vld [vmem:[%s422 + $0x20] sm:$0xff]
          %v1045 = vld [vmem:[%s422 + $0x28] sm:$0xff]
          %v1046 = vld [vmem:[%s422 + $0x30] sm:$0xff]
          %v1047 = vld [vmem:[%s422 + $0x38] sm:$0xff]
          %v1048 = vld [vmem:[%s422 + $0x40] sm:$0xff]
          %v1049 = vld [vmem:[%s422 + $0x48] sm:$0xff]
          %v1050 = vld [vmem:[%s422 + $0x50] sm:$0xff]
          %v1051 = vld [vmem:[%s422 + $0x58] sm:$0xff]
          %v1052 = vld [vmem:[%s422 + $0x60] sm:$0xff]
          %v1053 = vld [vmem:[%s422 + $0x68] sm:$0xff]
          %v1054 = vld [vmem:[%s422 + $0x70] sm:$0xff]
          %v1055 = vld [vmem:[%s422 + $0x78] sm:$0xff]
          %v1056 = vld [vmem:[%s422 + $0x80] sm:$0xff]
          %v1057 = vld [vmem:[%s422 + $0x88] sm:$0xff]
          %v1058 = vld [vmem:[%s422 + $0x90] sm:$0xff]
          %v1059 = vld [vmem:[%s422 + $0x98] sm:$0xff]
          %v1060 = vld [vmem:[%s422 + $0xa0] sm:$0xff]
          %v1061 = vld [vmem:[%s422 + $0xa8] sm:$0xff]
          %v1062 = vld [vmem:[%s422 + $0xb0] sm:$0xff]
          %v1063 = vld [vmem:[%s422 + $0xb8] sm:$0xff]
          %v1064 = vld [vmem:[%s422 + $0xc0] sm:$0xff]
          %v1065 = vld [vmem:[%s422 + $0xc8] sm:$0xff]
          %v1066 = vld [vmem:[%s422 + $0xd0] sm:$0xff]
          %v1067 = vld [vmem:[%s422 + $0xd8] sm:$0xff]
          %v1068 = vld [vmem:[%s422 + $0xe0] sm:$0xff]
          %v1069 = vld [vmem:[%s422 + $0xe8] sm:$0xff]
          %v1070 = vld [vmem:[%s422 + $0xf0] sm:$0xff]
          %v1071 = vld [vmem:[%s422 + $0xf8] sm:$0xff]
          %v1072 = vadd.f32 %v1040, %v976
          %v1073 = vadd.f32 %v1041, %v977
          %v1074 = vadd.f32 %v1042, %v978
          %v1075 = vadd.f32 %v1043, %v979
          %v1076 = vadd.f32 %v1044, %v980
          %v1077 = vadd.f32 %v1045, %v981
          %v1078 = vadd.f32 %v1046, %v982
          %v1079 = vadd.f32 %v1047, %v983
          %v1080 = vadd.f32 %v1048, %v984
          %v1081 = vadd.f32 %v1049, %v985
          %v1082 = vadd.f32 %v1050, %v986
          %v1083 = vadd.f32 %v1051, %v987
          %v1084 = vadd.f32 %v1052, %v988
          %v1085 = vadd.f32 %v1053, %v989
          %v1086 = vadd.f32 %v1054, %v990
          %v1087 = vadd.f32 %v1055, %v991
          %v1088 = vadd.f32 %v1056, %v992
          %v1089 = vadd.f32 %v1057, %v993
          %v1090 = vadd.f32 %v1058, %v994
          %v1091 = vadd.f32 %v1059, %v995
          %v1092 = vadd.f32 %v1060, %v996
          %v1093 = vadd.f32 %v1061, %v997
          %v1094 = vadd.f32 %v1062, %v998
          %v1095 = vadd.f32 %v1063, %v999
          %v1096 = vadd.f32 %v1064, %v1000
          %v1097 = vadd.f32 %v1065, %v1001
          %v1098 = vadd.f32 %v1066, %v1002
          %v1099 = vadd.f32 %v1067, %v1003
          %v1100 = vadd.f32 %v1068, %v1004
          %v1101 = vadd.f32 %v1069, %v1005
          %v1102 = vadd.f32 %v1070, %v1006
          %v1103 = vadd.f32 %v1071, %v1007
          %1104 = vst.msk [vmem:[%s434] sm:$0xff] %vm939, %v1072
          %1105 = vst.msk [vmem:[%s434 + $0x8] sm:$0xff] %vm939, %v1073
          %1106 = vst.msk [vmem:[%s434 + $0x10] sm:$0xff] %vm939, %v1074
          %1107 = vst.msk [vmem:[%s434 + $0x18] sm:$0xff] %vm939, %v1075
          %1108 = vst.msk [vmem:[%s434 + $0x20] sm:$0xff] %vm939, %v1076
          %1109 = vst.msk [vmem:[%s434 + $0x28] sm:$0xff] %vm939, %v1077
          %1110 = vst.msk [vmem:[%s434 + $0x30] sm:$0xff] %vm939, %v1078
          %1111 = vst.msk [vmem:[%s434 + $0x38] sm:$0xff] %vm939, %v1079
          %1112 = vst.msk [vmem:[%s434 + $0x40] sm:$0xff] %vm939, %v1080
          %1113 = vst.msk [vmem:[%s434 + $0x48] sm:$0xff] %vm939, %v1081
          %1114 = vst.msk [vmem:[%s434 + $0x50] sm:$0xff] %vm939, %v1082
          %1115 = vst.msk [vmem:[%s434 + $0x58] sm:$0xff] %vm939, %v1083
          %1116 = vst.msk [vmem:[%s434 + $0x60] sm:$0xff] %vm939, %v1084
          %1117 = vst.msk [vmem:[%s434 + $0x68] sm:$0xff] %vm939, %v1085
          %1118 = vst.msk [vmem:[%s434 + $0x70] sm:$0xff] %vm939, %v1086
          %1119 = vst.msk [vmem:[%s434 + $0x78] sm:$0xff] %vm939, %v1087
          %1120 = vst.msk [vmem:[%s434 + $0x80] sm:$0xff] %vm939, %v1088
          %1121 = vst.msk [vmem:[%s434 + $0x88] sm:$0xff] %vm939, %v1089
          %1122 = vst.msk [vmem:[%s434 + $0x90] sm:$0xff] %vm939, %v1090
          %1123 = vst.msk [vmem:[%s434 + $0x98] sm:$0xff] %vm939, %v1091
          %1124 = vst.msk [vmem:[%s434 + $0xa0] sm:$0xff] %vm939, %v1092
          %1125 = vst.msk [vmem:[%s434 + $0xa8] sm:$0xff] %vm939, %v1093
          %1126 = vst.msk [vmem:[%s434 + $0xb0] sm:$0xff] %vm939, %v1094
          %1127 = vst.msk [vmem:[%s434 + $0xb8] sm:$0xff] %vm939, %v1095
          %1128 = vst.msk [vmem:[%s434 + $0xc0] sm:$0xff] %vm939, %v1096
          %1129 = vst.msk [vmem:[%s434 + $0xc8] sm:$0xff] %vm939, %v1097
          %1130 = vst.msk [vmem:[%s434 + $0xd0] sm:$0xff] %vm939, %v1098
          %1131 = vst.msk [vmem:[%s434 + $0xd8] sm:$0xff] %vm939, %v1099
          %1132 = vst.msk [vmem:[%s434 + $0xe0] sm:$0xff] %vm939, %v1100
          %1133 = vst.msk [vmem:[%s434 + $0xe8] sm:$0xff] %vm939, %v1101
          %1134 = vst.msk [vmem:[%s434 + $0xf0] sm:$0xff] %vm939, %v1102
          %1135 = vst.msk [vmem:[%s434 + $0xf8] sm:$0xff] %vm939, %v1103
        $region78: #{vgcl_forward.3} parent=65 // pred_fallthru
          _
        %s1136 = smul.u32 32, %s20
        %p1137 = scmp.lt.s32.totalorder %s1136, 63
        %s1138 = scalar_select %p1137, %s1136, 63
        %s1139 = smul.addr %s1138, 8
        %s1140 = scalar_lea.vmem %s3, %s1139
        %s1141 = smul.u32 32, %s20
        %p1142 = scmp.lt.s32.totalorder %s1141, 63
        %s1143 = scalar_select %p1142, %s1141, 63
        %s1144 = smul.addr %s1143, 8
        %s1145 = scalar_lea.vmem %s4, %s1144
        // Predicated region
        $region79: #{vgcl_forward.3} parent=65 // pred_check
          %p1146 = pneg %p126
        $region80: #{vgcl_forward.3} parent=65 // pred_check_branch
          %1148 = sbr.rel (%p1146) target = $region82
        $region81: #{vgcl_forward.3} parent=65 // pred_region
          %s1149 = smul.u32 32, %s20
        $region82: #{vgcl_forward.3} parent=65 // pred_fallthru
          _
        // Predicated region
        $region83: #{vgcl_forward.3} parent=65 // pred_check
          %p1150 = pneg %p152
        $region84: #{vgcl_forward.3} parent=65 // pred_check_branch
          %1152 = sbr.rel (%p1150) target = $region86
        $region85: #{vgcl_forward.3} parent=65 // pred_region
          %s1153 = smul.u32 32, %s20
        $region86: #{vgcl_forward.3} parent=65 // pred_fallthru
          _
      $region66: #{vgcl_forward.3} parent=5 // pred_fallthru
        _
      %p1154 = scmp.le.s32.totalorder 2, %s11
      // Predicated region
      $region87: #{vgcl_forward.3} parent=5 // pred_check
        %p1155 = pneg %p1154
      $region88: #{vgcl_forward.3} parent=5 // pred_check_branch
        %1157 = sbr.rel (%p1155) target = $region90
      $region89: #{vgcl_forward.3} parent=5 // pred_region
        %s1158 = ssub.s32 %s11, 2
        // Predicated region
        $region91: #{vgcl_forward.3} parent=89 // pred_check
          %p1159 = pneg %p132
        $region92: #{vgcl_forward.3} parent=89 // pred_check_branch
          %1161 = sbr.rel (%p1159) target = $region94
        $region93: #{vgcl_forward.3} parent=89 // pred_region
          %s1162 = smul.u32 32, %s22
          %p1163 = scmp.lt.s32.totalorder %s1162, 63
          %s1164 = scalar_select %p1163, %s1162, 63
          %s1165 = smul.addr %s1164, 8
          %s1166 = scalar_lea.vmem %s3, %s1165
        $region94: #{vgcl_forward.3} parent=89 // pred_fallthru
          _
        // Predicated region
        $region95: #{vgcl_forward.3} parent=89 // pred_check
          %p1167 = pneg %p158
        $region96: #{vgcl_forward.3} parent=89 // pred_check_branch
          %1169 = sbr.rel (%p1167) target = $region98
        $region97: #{vgcl_forward.3} parent=89 // pred_region
          %s1170 = smul.u32 32, %s22
          %p1171 = scmp.lt.s32.totalorder %s1170, 63
          %s1172 = scalar_select %p1171, %s1170, 63
          %s1173 = smul.addr %s1172, 8
          %s1174 = scalar_lea.vmem %s4, %s1173
        $region98: #{vgcl_forward.3} parent=89 // pred_fallthru
          _
      $region90: #{vgcl_forward.3} parent=5 // pred_fallthru
        _
    $region6: #{vgcl_forward.3} parent=1 // loop_footer
      %s15 = sadd.s32 1, %s11
    $region7: #{vgcl_forward.3} parent=1 // loop_footer_branch
      %10 = sbr.rel target = $region3
    $region8: #{vgcl_forward.3} parent=1 // loop_exit
      _

</llo_original>
